<compile_context>
chip_gen: v7x
topology: tpu7x:2x2x1
jax: 0.10.0
libtpu: 0.0.40
codegen_flags: <defaults>
</compile_context>

<pallas_src>
import math
import functools

import jax
import jax.numpy as jnp
from jax import lax
from jax.experimental import pallas as pl
from jax.experimental.pallas import tpu as pltpu


def _mha_kernel(xq_ref, xk_ref, xv_ref,
                wq_ref, wk_ref, wv_ref, wo_ref,
                bq_ref, bk_ref, bv_ref, bo_ref,
                q_out, k_out, v_out, attn_out, out_ref,
                *, h, d_k, masked, attn_type, N):
    S = xq_ref.shape[1]
    bf16 = jnp.bfloat16
    inv_sqrt_dk = 1.0 / math.sqrt(d_k)

    # Full-width projections: (S, D) @ (D, D) in bf16, f32 accumulate, f32 bias.
    xq = xq_ref[0].astype(bf16)
    xk = xk_ref[0].astype(bf16)
    xv = xv_ref[0].astype(bf16)
    Q = jnp.dot(xq, wq_ref[...], preferred_element_type=jnp.float32) + bq_ref[...]
    K = jnp.dot(xk, wk_ref[...], preferred_element_type=jnp.float32) + bk_ref[...]
    V = jnp.dot(xv, wv_ref[...], preferred_element_type=jnp.float32) + bv_ref[...]

    # Additive mask built in-kernel from iota (no HBM mask input, no -inf math).
    if masked and attn_type != 'spatial':
        row = lax.broadcasted_iota(jnp.int32, (S, S), 0)
        col = lax.broadcasted_iota(jnp.int32, (S, S), 1)
        if attn_type == 'temporal':
            banned = col > row
        elif attn_type == 'space_time':
            banned = (col // N) > (row // N)           # block-causal over frames
        else:
            raise ValueError(f"unknown attn_type: {attn_type}")
        add_mask = jnp.where(banned, jnp.float32(-1e30), jnp.float32(0.0))
    else:
        add_mask = None

    # Per-head attention (static Python loop; d_k slices are lane-aligned).
    ctx_parts = []
    for i in range(h):
        lo, hi = i * d_k, (i + 1) * d_k
        Qh = Q[:, lo:hi]
        Kh = K[:, lo:hi]
        Vh = V[:, lo:hi]
        q_out[0, i] = Qh
        k_out[0, i] = Kh
        v_out[0, i] = Vh

        scores = lax.dot_general(Qh.astype(bf16), Kh.astype(bf16),
                                 (((1,), (1,)), ((), ())),
                                 preferred_element_type=jnp.float32) * inv_sqrt_dk
        if add_mask is not None:
            scores = scores + add_mask

        m = jnp.max(scores, axis=-1, keepdims=True)
        e = jnp.exp(scores - m)
        attn = e * pl.reciprocal(jnp.sum(e, axis=-1, keepdims=True), approx=True)
        attn_out[0, i] = attn

        ctx_parts.append(jnp.dot(attn.astype(bf16), Vh.astype(bf16),
                                 preferred_element_type=jnp.float32))

    # Fused output projection: one (S, D) @ (D, D) matmul + bias.
    ctx = jnp.concatenate(ctx_parts, axis=-1)                      # (S, D)
    out = jnp.dot(ctx.astype(bf16), wo_ref[...],
                  preferred_element_type=jnp.float32) + bo_ref[...]
    out_ref[0] = out


def multi_head_attention(query, key, value, params, *, h, masked,
                         num_frames, N, attn_type):
    B, S, D = query.shape
    d_k = D // h
    wq, bq, wk, bk, wv, bv, wo, bo = params

    # bf16 weights: halves the dominant HBM traffic, native MXU dtype.
    wq_bf = wq.astype(jnp.bfloat16)
    wk_bf = wk.astype(jnp.bfloat16)
    wv_bf = wv.astype(jnp.bfloat16)
    wo_bf = wo.astype(jnp.bfloat16)

    kernel = functools.partial(_mha_kernel, h=h, d_k=d_k,
                               masked=bool(masked), attn_type=attn_type, N=N)

    out_shapes = (
        jax.ShapeDtypeStruct((B, h, S, d_k), jnp.float32),   # queries
        jax.ShapeDtypeStruct((B, h, S, d_k), jnp.float32),   # keys
        jax.ShapeDtypeStruct((B, h, S, d_k), jnp.float32),   # values
        jax.ShapeDtypeStruct((B, h, S, S), jnp.float32),     # attention
        jax.ShapeDtypeStruct((B, S, D), jnp.float32),        # output
    )

    in_specs = [
        pl.BlockSpec((1, S, D), lambda b: (b, 0, 0)),        # query
        pl.BlockSpec((1, S, D), lambda b: (b, 0, 0)),        # key
        pl.BlockSpec((1, S, D), lambda b: (b, 0, 0)),        # value
        pl.BlockSpec((D, D), lambda b: (0, 0)),              # W_query.T (grid-invariant)
        pl.BlockSpec((D, D), lambda b: (0, 0)),              # W_key.T
        pl.BlockSpec((D, D), lambda b: (0, 0)),              # W_value.T
        pl.BlockSpec((D, D), lambda b: (0, 0)),              # W_head.T
        pl.BlockSpec((1, D), lambda b: (0, 0)),              # b_query
        pl.BlockSpec((1, D), lambda b: (0, 0)),              # b_key
        pl.BlockSpec((1, D), lambda b: (0, 0)),              # b_value
        pl.BlockSpec((1, D), lambda b: (0, 0)),              # b_head
    ]
    out_specs = [
        pl.BlockSpec((1, h, S, d_k), lambda b: (b, 0, 0, 0)),
        pl.BlockSpec((1, h, S, d_k), lambda b: (b, 0, 0, 0)),
        pl.BlockSpec((1, h, S, d_k), lambda b: (b, 0, 0, 0)),
        pl.BlockSpec((1, h, S, S), lambda b: (b, 0, 0, 0)),
        pl.BlockSpec((1, S, D), lambda b: (b, 0, 0)),
    ]

    fn = pl.pallas_call(
        kernel,
        out_shape=out_shapes,
        grid_spec=pltpu.PrefetchScalarGridSpec(
            num_scalar_prefetch=0,
            grid=(B,),
            in_specs=in_specs,
            out_specs=out_specs,
        ),
        # Batch axis parallel -> both TensorCores on v7x get one batch each;
        # each grid step is fully independent (no cross-step accumulator).
        compiler_params=pltpu.CompilerParams(
            dimension_semantics=("parallel",)),
    )
    return fn(query, key, value,
              wq_bf, wk_bf, wv_bf, wo_bf,
              bq.reshape(1, D), bk.reshape(1, D),
              bv.reshape(1, D), bo.reshape(1, D))


def reference(query, key, value, params, *, h, masked, attn_type, N):
    """Pure-JAX replica of the PyTorch forward with the same bf16 MXU operand
    casts as the kernel (f32 accumulation), for numerical verification."""
    wq, bq, wk, bk, wv, bv, wo, bo = params
    B, S, D = query.shape
    d_k = D // h
    bf16 = jnp.bfloat16

    def proj(x, w, b):
        y = jnp.dot(x.astype(bf16), w.astype(bf16),
                    preferred_element_type=jnp.float32) + b
        return y.reshape(B, S, h, d_k).transpose(0, 2, 1, 3)

    Q = proj(query, wq, bq)
    K = proj(key, wk, bk)
    V = proj(value, wv, bv)
    scores = jnp.einsum('bhqd,bhkd->bhqk', Q.astype(bf16), K.astype(bf16),
                        preferred_element_type=jnp.float32) / math.sqrt(d_k)
    if masked and attn_type != 'spatial':
        r = jnp.arange(S)[:, None]
        c = jnp.arange(S)[None, :]
        banned = (c > r) if attn_type == 'temporal' else ((c // N) > (r // N))
        scores = jnp.where(banned[None, None], -jnp.inf, scores)
    attn = jax.nn.softmax(scores, axis=-1)
    ctx = jnp.einsum('bhqk,bhkd->bhqd', attn.astype(bf16), V.astype(bf16),
                     preferred_element_type=jnp.float32)
    ctx = ctx.transpose(0, 2, 1, 3).reshape(B, S, D)
    out = jnp.dot(ctx.astype(bf16), wo.astype(bf16),
                  preferred_element_type=jnp.float32) + bo
    return Q, K, V, attn, out


if __name__ == "__main__":
    # Module hyperparameters (d_k = d_model // h = 128 keeps every head slice
    # lane-aligned).  num_frames * N == S (space_time convention).
    B, S = 2, 8
    h, d_model = 4, 512
    num_frames, N = 2, 4
    masked = True

    root = jax.random.PRNGKey(0)
    keys = jax.random.split(root, 11)
    scale = 1.0 / math.sqrt(d_model)

    # Deterministic synthetic parameters, stored as y = x @ W + b (W = torch W.T).
    wq = jax.random.normal(keys[0], (d_model, d_model), jnp.float32) * scale
    bq = jax.random.normal(keys[1], (d_model,), jnp.float32) * scale
    wk = jax.random.normal(keys[2], (d_model, d_model), jnp.float32) * scale
    bk = jax.random.normal(keys[3], (d_model,), jnp.float32) * scale
    wv = jax.random.normal(keys[4], (d_model, d_model), jnp.float32) * scale
    bv = jax.random.normal(keys[5], (d_model,), jnp.float32) * scale
    wo = jax.random.normal(keys[6], (d_model, d_model), jnp.float32) * scale
    bo = jax.random.normal(keys[7], (d_model,), jnp.float32) * scale
    params = (wq, bq, wk, bk, wv, bv, wo, bo)

    query = jax.random.normal(keys[8], (B, S, d_model), jnp.float32)
    key_in = jax.random.normal(keys[9], (B, S, d_model), jnp.float32)
    value = jax.random.normal(keys[10], (B, S, d_model), jnp.float32)

    names = ("queries", "keys", "values", "attention", "output")
    ok = True
    for attn_type in ("temporal", "space_time"):
        outs = multi_head_attention(query, key_in, value, params,
                                    h=h, masked=masked,
                                    num_frames=num_frames, N=N,
                                    attn_type=attn_type)
        outs = jax.block_until_ready(outs)
        refs = reference(query, key_in, value, params,
                         h=h, masked=masked, attn_type=attn_type, N=N)
        for name, a, b in zip(names, outs, refs):
            assert a.shape == b.shape, (attn_type, name, a.shape, b.shape)
            assert jnp.allclose(a, b, atol=2e-2, rtol=2e-2), \
                f"mismatch in {name} ({attn_type})"
            ok = ok and True

    if ok:
        print("KERNEL_OK")
</pallas_src>

<mosaic_0001>
module attributes {stable_mosaic.version = 11 : i64} {
  func.func @_mha_kernel(%arg0: i32, %arg1: memref<1x8x512xf32, #tpu.memory_space<vmem>>, %arg2: memref<1x8x512xf32, #tpu.memory_space<vmem>>, %arg3: memref<1x8x512xf32, #tpu.memory_space<vmem>>, %arg4: memref<512x512xbf16, #tpu.memory_space<vmem>>, %arg5: memref<512x512xbf16, #tpu.memory_space<vmem>>, %arg6: memref<512x512xbf16, #tpu.memory_space<vmem>>, %arg7: memref<512x512xbf16, #tpu.memory_space<vmem>>, %arg8: memref<1x512xf32, #tpu.memory_space<vmem>>, %arg9: memref<1x512xf32, #tpu.memory_space<vmem>>, %arg10: memref<1x512xf32, #tpu.memory_space<vmem>>, %arg11: memref<1x512xf32, #tpu.memory_space<vmem>>, %arg12: memref<1x4x8x128xf32, #tpu.memory_space<vmem>>, %arg13: memref<1x4x8x128xf32, #tpu.memory_space<vmem>>, %arg14: memref<1x4x8x128xf32, #tpu.memory_space<vmem>>, %arg15: memref<1x4x8x8xf32, #tpu.memory_space<vmem>>, %arg16: memref<1x8x512xf32, #tpu.memory_space<vmem>>) attributes {dimension_semantics = [#tpu.dimension_semantics<parallel>], iteration_bounds = array<i64: 2>, scalar_prefetch = 0 : i64, scratch_operands = 0 : i64, tpu.core_type = #tpu.core_type<tc>, window_params = [{transform_indices = @transform_0, window_bounds = array<i64: 1, 8, 512>}, {transform_indices = @transform_1, window_bounds = array<i64: 1, 8, 512>}, {transform_indices = @transform_2, window_bounds = array<i64: 1, 8, 512>}, {pipeline_mode = #tpu.pipeline_mode<synchronous>, transform_indices = @transform_3, window_bounds = array<i64: 512, 512>}, {pipeline_mode = #tpu.pipeline_mode<synchronous>, transform_indices = @transform_4, window_bounds = array<i64: 512, 512>}, {pipeline_mode = #tpu.pipeline_mode<synchronous>, transform_indices = @transform_5, window_bounds = array<i64: 512, 512>}, {pipeline_mode = #tpu.pipeline_mode<synchronous>, transform_indices = @transform_6, window_bounds = array<i64: 512, 512>}, {pipeline_mode = #tpu.pipeline_mode<synchronous>, transform_indices = @transform_7, window_bounds = array<i64: 1, 512>}, {pipeline_mode = #tpu.pipeline_mode<synchronous>, transform_indices = @transform_8, window_bounds = array<i64: 1, 512>}, {pipeline_mode = #tpu.pipeline_mode<synchronous>, transform_indices = @transform_9, window_bounds = array<i64: 1, 512>}, {pipeline_mode = #tpu.pipeline_mode<synchronous>, transform_indices = @transform_10, window_bounds = array<i64: 1, 512>}, {transform_indices = @transform_11, window_bounds = array<i64: 1, 4, 8, 128>}, {transform_indices = @transform_12, window_bounds = array<i64: 1, 4, 8, 128>}, {transform_indices = @transform_13, window_bounds = array<i64: 1, 4, 8, 128>}, {transform_indices = @transform_14, window_bounds = array<i64: 1, 4, 8, 8>}, {transform_indices = @transform_15, window_bounds = array<i64: 1, 8, 512>}]} {
    %c0 = arith.constant 0 : index
    %c0_0 = arith.constant 0 : index
    %c0_1 = arith.constant 0 : index
    %0 = vector.load %arg1[%c0, %c0_0, %c0_1] : memref<1x8x512xf32, #tpu.memory_space<vmem>>, vector<1x8x512xf32>
    %1 = vector.shape_cast %0 : vector<1x8x512xf32> to vector<8x512xf32>
    %2 = arith.truncf %1 : vector<8x512xf32> to vector<8x512xbf16>
    %c0_2 = arith.constant 0 : index
    %c0_3 = arith.constant 0 : index
    %c0_4 = arith.constant 0 : index
    %3 = vector.load %arg2[%c0_2, %c0_3, %c0_4] : memref<1x8x512xf32, #tpu.memory_space<vmem>>, vector<1x8x512xf32>
    %4 = vector.shape_cast %3 : vector<1x8x512xf32> to vector<8x512xf32>
    %5 = arith.truncf %4 : vector<8x512xf32> to vector<8x512xbf16>
    %c0_5 = arith.constant 0 : index
    %c0_6 = arith.constant 0 : index
    %c0_7 = arith.constant 0 : index
    %6 = vector.load %arg3[%c0_5, %c0_6, %c0_7] : memref<1x8x512xf32, #tpu.memory_space<vmem>>, vector<1x8x512xf32>
    %7 = vector.shape_cast %6 : vector<1x8x512xf32> to vector<8x512xf32>
    %8 = arith.truncf %7 : vector<8x512xf32> to vector<8x512xbf16>
    %c0_8 = arith.constant 0 : index
    %c0_9 = arith.constant 0 : index
    %9 = vector.load %arg4[%c0_8, %c0_9] : memref<512x512xbf16, #tpu.memory_space<vmem>>, vector<512x512xbf16>
    %cst = arith.constant dense<0.000000e+00> : vector<8x512xf32>
    %10 = tpu.matmul %2, %9, %cst {dimension_numbers = #tpu.dot_dimension_numbers<[1], [0], [0], [1], [0, 0, 1, 1], [], []>} : vector<8x512xbf16>, vector<512x512xbf16>, vector<8x512xf32> -> vector<8x512xf32>
    %c0_10 = arith.constant 0 : index
    %c0_11 = arith.constant 0 : index
    %11 = vector.load %arg8[%c0_10, %c0_11] : memref<1x512xf32, #tpu.memory_space<vmem>>, vector<1x512xf32>
    %12 = vector.broadcast %11 : vector<1x512xf32> to vector<8x512xf32>
    %13 = arith.addf %10, %12 : vector<8x512xf32>
    %c0_12 = arith.constant 0 : index
    %c0_13 = arith.constant 0 : index
    %14 = vector.load %arg5[%c0_12, %c0_13] : memref<512x512xbf16, #tpu.memory_space<vmem>>, vector<512x512xbf16>
    %cst_14 = arith.constant dense<0.000000e+00> : vector<8x512xf32>
    %15 = tpu.matmul %5, %14, %cst_14 {dimension_numbers = #tpu.dot_dimension_numbers<[1], [0], [0], [1], [0, 0, 1, 1], [], []>} : vector<8x512xbf16>, vector<512x512xbf16>, vector<8x512xf32> -> vector<8x512xf32>
    %c0_15 = arith.constant 0 : index
    %c0_16 = arith.constant 0 : index
    %16 = vector.load %arg9[%c0_15, %c0_16] : memref<1x512xf32, #tpu.memory_space<vmem>>, vector<1x512xf32>
    %17 = vector.broadcast %16 : vector<1x512xf32> to vector<8x512xf32>
    %18 = arith.addf %15, %17 : vector<8x512xf32>
    %c0_17 = arith.constant 0 : index
    %c0_18 = arith.constant 0 : index
    %19 = vector.load %arg6[%c0_17, %c0_18] : memref<512x512xbf16, #tpu.memory_space<vmem>>, vector<512x512xbf16>
    %cst_19 = arith.constant dense<0.000000e+00> : vector<8x512xf32>
    %20 = tpu.matmul %8, %19, %cst_19 {dimension_numbers = #tpu.dot_dimension_numbers<[1], [0], [0], [1], [0, 0, 1, 1], [], []>} : vector<8x512xbf16>, vector<512x512xbf16>, vector<8x512xf32> -> vector<8x512xf32>
    %c0_20 = arith.constant 0 : index
    %c0_21 = arith.constant 0 : index
    %21 = vector.load %arg10[%c0_20, %c0_21] : memref<1x512xf32, #tpu.memory_space<vmem>>, vector<1x512xf32>
    %22 = vector.broadcast %21 : vector<1x512xf32> to vector<8x512xf32>
    %23 = arith.addf %20, %22 : vector<8x512xf32>
    %24 = tpu.iota {dimensions = array<i32: 0>} : vector<8x8xi32>
    %25 = tpu.iota {dimensions = array<i32: 1>} : vector<8x8xi32>
    %26 = arith.cmpi sgt, %25, %24 : vector<8x8xi32>
    %cst_22 = arith.constant -1.000000e+30 : f32
    %cst_23 = arith.constant 0.000000e+00 : f32
    %27 = vector.broadcast %cst_22 : f32 to vector<8x8xf32>
    %28 = vector.broadcast %cst_23 : f32 to vector<8x8xf32>
    %29 = arith.select %26, %27, %28 : vector<8x8xi1>, vector<8x8xf32>
    %30 = vector.extract_strided_slice %13 {offsets = [0, 0], sizes = [8, 128], strides = [1, 1]} : vector<8x512xf32> to vector<8x128xf32>
    %31 = vector.extract_strided_slice %18 {offsets = [0, 0], sizes = [8, 128], strides = [1, 1]} : vector<8x512xf32> to vector<8x128xf32>
    %32 = vector.extract_strided_slice %23 {offsets = [0, 0], sizes = [8, 128], strides = [1, 1]} : vector<8x512xf32> to vector<8x128xf32>
    %c0_24 = arith.constant 0 : index
    %c0_25 = arith.constant 0 : index
    %c0_26 = arith.constant 0 : index
    %c0_27 = arith.constant 0 : index
    %33 = vector.load %arg12[%c0_24, %c0_25, %c0_26, %c0_27] : memref<1x4x8x128xf32, #tpu.memory_space<vmem>>, vector<1x1x8x128xf32>
    %34 = vector.shape_cast %33 : vector<1x1x8x128xf32> to vector<8x128xf32>
    %35 = vector.shape_cast %30 : vector<8x128xf32> to vector<1x1x8x128xf32>
    tpu.vector_store %arg12[%c0_24, %c0_25, %c0_26, %c0_27], %35 {strides = array<i32>} : memref<1x4x8x128xf32, #tpu.memory_space<vmem>>, vector<1x1x8x128xf32>,
    %c0_28 = arith.constant 0 : index
    %c0_29 = arith.constant 0 : index
    %c0_30 = arith.constant 0 : index
    %c0_31 = arith.constant 0 : index
    %36 = vector.load %arg13[%c0_28, %c0_29, %c0_30, %c0_31] : memref<1x4x8x128xf32, #tpu.memory_space<vmem>>, vector<1x1x8x128xf32>
    %37 = vector.shape_cast %36 : vector<1x1x8x128xf32> to vector<8x128xf32>
    %38 = vector.shape_cast %31 : vector<8x128xf32> to vector<1x1x8x128xf32>
    tpu.vector_store %arg13[%c0_28, %c0_29, %c0_30, %c0_31], %38 {strides = array<i32>} : memref<1x4x8x128xf32, #tpu.memory_space<vmem>>, vector<1x1x8x128xf32>,
    %c0_32 = arith.constant 0 : index
    %c0_33 = arith.constant 0 : index
    %c0_34 = arith.constant 0 : index
    %c0_35 = arith.constant 0 : index
    %39 = vector.load %arg14[%c0_32, %c0_33, %c0_34, %c0_35] : memref<1x4x8x128xf32, #tpu.memory_space<vmem>>, vector<1x1x8x128xf32>
    %40 = vector.shape_cast %39 : vector<1x1x8x128xf32> to vector<8x128xf32>
    %41 = vector.shape_cast %32 : vector<8x128xf32> to vector<1x1x8x128xf32>
    tpu.vector_store %arg14[%c0_32, %c0_33, %c0_34, %c0_35], %41 {strides = array<i32>} : memref<1x4x8x128xf32, #tpu.memory_space<vmem>>, vector<1x1x8x128xf32>,
    %42 = arith.truncf %30 : vector<8x128xf32> to vector<8x128xbf16>
    %43 = arith.truncf %31 : vector<8x128xf32> to vector<8x128xbf16>
    %cst_36 = arith.constant dense<0.000000e+00> : vector<8x8xf32>
    %44 = tpu.matmul %42, %43, %cst_36 {dimension_numbers = #tpu.dot_dimension_numbers<[1], [1], [0], [0], [0, 0, 1, 0], [], []>} : vector<8x128xbf16>, vector<8x128xbf16>, vector<8x8xf32> -> vector<8x8xf32>
    %cst_37 = arith.constant 0.0883883461 : f32
    %45 = vector.broadcast %cst_37 : f32 to vector<8x8xf32>
    %46 = arith.mulf %44, %45 : vector<8x8xf32>
    %47 = arith.addf %46, %29 : vector<8x8xf32>
    %cst_38 = arith.constant dense<0xFF800000> : vector<8xf32>
    %48 = vector.multi_reduction <maximumf>, %47, %cst_38 [1] : vector<8x8xf32> to vector<8xf32>
    %49 = vector.shape_cast %48 : vector<8xf32> to vector<8x1xf32>
    %50 = vector.broadcast %49 : vector<8x1xf32> to vector<8x8xf32>
    %51 = arith.subf %47, %50 : vector<8x8xf32>
    %52 = math.exp %51 : vector<8x8xf32>
    %cst_39 = arith.constant dense<0.000000e+00> : vector<8xf32>
    %53 = vector.multi_reduction <add>, %52, %cst_39 [1] : vector<8x8xf32> to vector<8xf32>
    %54 = vector.shape_cast %53 : vector<8xf32> to vector<8x1xf32>
    %55 = tpu.reciprocal %54 {approx = true} : vector<8x1xf32> -> vector<8x1xf32>
    %56 = vector.broadcast %55 : vector<8x1xf32> to vector<8x8xf32>
    %57 = arith.mulf %52, %56 : vector<8x8xf32>
    %c0_40 = arith.constant 0 : index
    %c0_41 = arith.constant 0 : index
    %c0_42 = arith.constant 0 : index
    %c0_43 = arith.constant 0 : index
    %58 = vector.load %arg15[%c0_40, %c0_41, %c0_42, %c0_43] : memref<1x4x8x8xf32, #tpu.memory_space<vmem>>, vector<1x1x8x8xf32>
    %59 = vector.shape_cast %58 : vector<1x1x8x8xf32> to vector<8x8xf32>
    %60 = vector.shape_cast %57 : vector<8x8xf32> to vector<1x1x8x8xf32>
    tpu.vector_store %arg15[%c0_40, %c0_41, %c0_42, %c0_43], %60 {strides = array<i32>} : memref<1x4x8x8xf32, #tpu.memory_space<vmem>>, vector<1x1x8x8xf32>,
    %61 = arith.truncf %57 : vector<8x8xf32> to vector<8x8xbf16>
    %62 = arith.truncf %32 : vector<8x128xf32> to vector<8x128xbf16>
    %cst_44 = arith.constant dense<0.000000e+00> : vector<8x128xf32>
    %63 = tpu.matmul %61, %62, %cst_44 {dimension_numbers = #tpu.dot_dimension_numbers<[1], [0], [0], [1], [0, 0, 1, 1], [], []>} : vector<8x8xbf16>, vector<8x128xbf16>, vector<8x128xf32> -> vector<8x128xf32>
    %64 = vector.extract_strided_slice %13 {offsets = [0, 128], sizes = [8, 128], strides = [1, 1]} : vector<8x512xf32> to vector<8x128xf32>
    %65 = vector.extract_strided_slice %18 {offsets = [0, 128], sizes = [8, 128], strides = [1, 1]} : vector<8x512xf32> to vector<8x128xf32>
    %66 = vector.extract_strided_slice %23 {offsets = [0, 128], sizes = [8, 128], strides = [1, 1]} : vector<8x512xf32> to vector<8x128xf32>
    %c0_45 = arith.constant 0 : index
    %c1 = arith.constant 1 : index
    %c0_46 = arith.constant 0 : index
    %c0_47 = arith.constant 0 : index
    %67 = vector.load %arg12[%c0_45, %c1, %c0_46, %c0_47] : memref<1x4x8x128xf32, #tpu.memory_space<vmem>>, vector<1x1x8x128xf32>
    %68 = vector.shape_cast %67 : vector<1x1x8x128xf32> to vector<8x128xf32>
    %69 = vector.shape_cast %64 : vector<8x128xf32> to vector<1x1x8x128xf32>
    tpu.vector_store %arg12[%c0_45, %c1, %c0_46, %c0_47], %69 {strides = array<i32>} : memref<1x4x8x128xf32, #tpu.memory_space<vmem>>, vector<1x1x8x128xf32>,
    %c0_48 = arith.constant 0 : index
    %c1_49 = arith.constant 1 : index
    %c0_50 = arith.constant 0 : index
    %c0_51 = arith.constant 0 : index
    %70 = vector.load %arg13[%c0_48, %c1_49, %c0_50, %c0_51] : memref<1x4x8x128xf32, #tpu.memory_space<vmem>>, vector<1x1x8x128xf32>
    %71 = vector.shape_cast %70 : vector<1x1x8x128xf32> to vector<8x128xf32>
    %72 = vector.shape_cast %65 : vector<8x128xf32> to vector<1x1x8x128xf32>
    tpu.vector_store %arg13[%c0_48, %c1_49, %c0_50, %c0_51], %72 {strides = array<i32>} : memref<1x4x8x128xf32, #tpu.memory_space<vmem>>, vector<1x1x8x128xf32>,
    %c0_52 = arith.constant 0 : index
    %c1_53 = arith.constant 1 : index
    %c0_54 = arith.constant 0 : index
    %c0_55 = arith.constant 0 : index
    %73 = vector.load %arg14[%c0_52, %c1_53, %c0_54, %c0_55] : memref<1x4x8x128xf32, #tpu.memory_space<vmem>>, vector<1x1x8x128xf32>
    %74 = vector.shape_cast %73 : vector<1x1x8x128xf32> to vector<8x128xf32>
    %75 = vector.shape_cast %66 : vector<8x128xf32> to vector<1x1x8x128xf32>
    tpu.vector_store %arg14[%c0_52, %c1_53, %c0_54, %c0_55], %75 {strides = array<i32>} : memref<1x4x8x128xf32, #tpu.memory_space<vmem>>, vector<1x1x8x128xf32>,
    %76 = arith.truncf %64 : vector<8x128xf32> to vector<8x128xbf16>
    %77 = arith.truncf %65 : vector<8x128xf32> to vector<8x128xbf16>
    %cst_56 = arith.constant dense<0.000000e+00> : vector<8x8xf32>
    %78 = tpu.matmul %76, %77, %cst_56 {dimension_numbers = #tpu.dot_dimension_numbers<[1], [1], [0], [0], [0, 0, 1, 0], [], []>} : vector<8x128xbf16>, vector<8x128xbf16>, vector<8x8xf32> -> vector<8x8xf32>
    %cst_57 = arith.constant 0.0883883461 : f32
    %79 = vector.broadcast %cst_57 : f32 to vector<8x8xf32>
    %80 = arith.mulf %78, %79 : vector<8x8xf32>
    %81 = arith.addf %80, %29 : vector<8x8xf32>
    %cst_58 = arith.constant dense<0xFF800000> : vector<8xf32>
    %82 = vector.multi_reduction <maximumf>, %81, %cst_58 [1] : vector<8x8xf32> to vector<8xf32>
    %83 = vector.shape_cast %82 : vector<8xf32> to vector<8x1xf32>
    %84 = vector.broadcast %83 : vector<8x1xf32> to vector<8x8xf32>
    %85 = arith.subf %81, %84 : vector<8x8xf32>
    %86 = math.exp %85 : vector<8x8xf32>
    %cst_59 = arith.constant dense<0.000000e+00> : vector<8xf32>
    %87 = vector.multi_reduction <add>, %86, %cst_59 [1] : vector<8x8xf32> to vector<8xf32>
    %88 = vector.shape_cast %87 : vector<8xf32> to vector<8x1xf32>
    %89 = tpu.reciprocal %88 {approx = true} : vector<8x1xf32> -> vector<8x1xf32>
    %90 = vector.broadcast %89 : vector<8x1xf32> to vector<8x8xf32>
    %91 = arith.mulf %86, %90 : vector<8x8xf32>
    %c0_60 = arith.constant 0 : index
    %c1_61 = arith.constant 1 : index
    %c0_62 = arith.constant 0 : index
    %c0_63 = arith.constant 0 : index
    %92 = vector.load %arg15[%c0_60, %c1_61, %c0_62, %c0_63] : memref<1x4x8x8xf32, #tpu.memory_space<vmem>>, vector<1x1x8x8xf32>
    %93 = vector.shape_cast %92 : vector<1x1x8x8xf32> to vector<8x8xf32>
    %94 = vector.shape_cast %91 : vector<8x8xf32> to vector<1x1x8x8xf32>
    tpu.vector_store %arg15[%c0_60, %c1_61, %c0_62, %c0_63], %94 {strides = array<i32>} : memref<1x4x8x8xf32, #tpu.memory_space<vmem>>, vector<1x1x8x8xf32>,
    %95 = arith.truncf %91 : vector<8x8xf32> to vector<8x8xbf16>
    %96 = arith.truncf %66 : vector<8x128xf32> to vector<8x128xbf16>
    %cst_64 = arith.constant dense<0.000000e+00> : vector<8x128xf32>
    %97 = tpu.matmul %95, %96, %cst_64 {dimension_numbers = #tpu.dot_dimension_numbers<[1], [0], [0], [1], [0, 0, 1, 1], [], []>} : vector<8x8xbf16>, vector<8x128xbf16>, vector<8x128xf32> -> vector<8x128xf32>
    %98 = vector.extract_strided_slice %13 {offsets = [0, 256], sizes = [8, 128], strides = [1, 1]} : vector<8x512xf32> to vector<8x128xf32>
    %99 = vector.extract_strided_slice %18 {offsets = [0, 256], sizes = [8, 128], strides = [1, 1]} : vector<8x512xf32> to vector<8x128xf32>
    %100 = vector.extract_strided_slice %23 {offsets = [0, 256], sizes = [8, 128], strides = [1, 1]} : vector<8x512xf32> to vector<8x128xf32>
    %c0_65 = arith.constant 0 : index
    %c2 = arith.constant 2 : index
    %c0_66 = arith.constant 0 : index
    %c0_67 = arith.constant 0 : index
    %101 = vector.load %arg12[%c0_65, %c2, %c0_66, %c0_67] : memref<1x4x8x128xf32, #tpu.memory_space<vmem>>, vector<1x1x8x128xf32>
    %102 = vector.shape_cast %101 : vector<1x1x8x128xf32> to vector<8x128xf32>
    %103 = vector.shape_cast %98 : vector<8x128xf32> to vector<1x1x8x128xf32>
    tpu.vector_store %arg12[%c0_65, %c2, %c0_66, %c0_67], %103 {strides = array<i32>} : memref<1x4x8x128xf32, #tpu.memory_space<vmem>>, vector<1x1x8x128xf32>,
    %c0_68 = arith.constant 0 : index
    %c2_69 = arith.constant 2 : index
    %c0_70 = arith.constant 0 : index
    %c0_71 = arith.constant 0 : index
    %104 = vector.load %arg13[%c0_68, %c2_69, %c0_70, %c0_71] : memref<1x4x8x128xf32, #tpu.memory_space<vmem>>, vector<1x1x8x128xf32>
    %105 = vector.shape_cast %104 : vector<1x1x8x128xf32> to vector<8x128xf32>
    %106 = vector.shape_cast %99 : vector<8x128xf32> to vector<1x1x8x128xf32>
    tpu.vector_store %arg13[%c0_68, %c2_69, %c0_70, %c0_71], %106 {strides = array<i32>} : memref<1x4x8x128xf32, #tpu.memory_space<vmem>>, vector<1x1x8x128xf32>,
    %c0_72 = arith.constant 0 : index
    %c2_73 = arith.constant 2 : index
    %c0_74 = arith.constant 0 : index
    %c0_75 = arith.constant 0 : index
    %107 = vector.load %arg14[%c0_72, %c2_73, %c0_74, %c0_75] : memref<1x4x8x128xf32, #tpu.memory_space<vmem>>, vector<1x1x8x128xf32>
    %108 = vector.shape_cast %107 : vector<1x1x8x128xf32> to vector<8x128xf32>
    %109 = vector.shape_cast %100 : vector<8x128xf32> to vector<1x1x8x128xf32>
    tpu.vector_store %arg14[%c0_72, %c2_73, %c0_74, %c0_75], %109 {strides = array<i32>} : memref<1x4x8x128xf32, #tpu.memory_space<vmem>>, vector<1x1x8x128xf32>,
    %110 = arith.truncf %98 : vector<8x128xf32> to vector<8x128xbf16>
    %111 = arith.truncf %99 : vector<8x128xf32> to vector<8x128xbf16>
    %cst_76 = arith.constant dense<0.000000e+00> : vector<8x8xf32>
    %112 = tpu.matmul %110, %111, %cst_76 {dimension_numbers = #tpu.dot_dimension_numbers<[1], [1], [0], [0], [0, 0, 1, 0], [], []>} : vector<8x128xbf16>, vector<8x128xbf16>, vector<8x8xf32> -> vector<8x8xf32>
    %cst_77 = arith.constant 0.0883883461 : f32
    %113 = vector.broadcast %cst_77 : f32 to vector<8x8xf32>
    %114 = arith.mulf %112, %113 : vector<8x8xf32>
    %115 = arith.addf %114, %29 : vector<8x8xf32>
    %cst_78 = arith.constant dense<0xFF800000> : vector<8xf32>
    %116 = vector.multi_reduction <maximumf>, %115, %cst_78 [1] : vector<8x8xf32> to vector<8xf32>
    %117 = vector.shape_cast %116 : vector<8xf32> to vector<8x1xf32>
    %118 = vector.broadcast %117 : vector<8x1xf32> to vector<8x8xf32>
    %119 = arith.subf %115, %118 : vector<8x8xf32>
    %120 = math.exp %119 : vector<8x8xf32>
    %cst_79 = arith.constant dense<0.000000e+00> : vector<8xf32>
    %121 = vector.multi_reduction <add>, %120, %cst_79 [1] : vector<8x8xf32> to vector<8xf32>
    %122 = vector.shape_cast %121 : vector<8xf32> to vector<8x1xf32>
    %123 = tpu.reciprocal %122 {approx = true} : vector<8x1xf32> -> vector<8x1xf32>
    %124 = vector.broadcast %123 : vector<8x1xf32> to vector<8x8xf32>
    %125 = arith.mulf %120, %124 : vector<8x8xf32>
    %c0_80 = arith.constant 0 : index
    %c2_81 = arith.constant 2 : index
    %c0_82 = arith.constant 0 : index
    %c0_83 = arith.constant 0 : index
    %126 = vector.load %arg15[%c0_80, %c2_81, %c0_82, %c0_83] : memref<1x4x8x8xf32, #tpu.memory_space<vmem>>, vector<1x1x8x8xf32>
    %127 = vector.shape_cast %126 : vector<1x1x8x8xf32> to vector<8x8xf32>
    %128 = vector.shape_cast %125 : vector<8x8xf32> to vector<1x1x8x8xf32>
    tpu.vector_store %arg15[%c0_80, %c2_81, %c0_82, %c0_83], %128 {strides = array<i32>} : memref<1x4x8x8xf32, #tpu.memory_space<vmem>>, vector<1x1x8x8xf32>,
    %129 = arith.truncf %125 : vector<8x8xf32> to vector<8x8xbf16>
    %130 = arith.truncf %100 : vector<8x128xf32> to vector<8x128xbf16>
    %cst_84 = arith.constant dense<0.000000e+00> : vector<8x128xf32>
    %131 = tpu.matmul %129, %130, %cst_84 {dimension_numbers = #tpu.dot_dimension_numbers<[1], [0], [0], [1], [0, 0, 1, 1], [], []>} : vector<8x8xbf16>, vector<8x128xbf16>, vector<8x128xf32> -> vector<8x128xf32>
    %132 = vector.extract_strided_slice %13 {offsets = [0, 384], sizes = [8, 128], strides = [1, 1]} : vector<8x512xf32> to vector<8x128xf32>
    %133 = vector.extract_strided_slice %18 {offsets = [0, 384], sizes = [8, 128], strides = [1, 1]} : vector<8x512xf32> to vector<8x128xf32>
    %134 = vector.extract_strided_slice %23 {offsets = [0, 384], sizes = [8, 128], strides = [1, 1]} : vector<8x512xf32> to vector<8x128xf32>
    %c0_85 = arith.constant 0 : index
    %c3 = arith.constant 3 : index
    %c0_86 = arith.constant 0 : index
    %c0_87 = arith.constant 0 : index
    %135 = vector.load %arg12[%c0_85, %c3, %c0_86, %c0_87] : memref<1x4x8x128xf32, #tpu.memory_space<vmem>>, vector<1x1x8x128xf32>
    %136 = vector.shape_cast %135 : vector<1x1x8x128xf32> to vector<8x128xf32>
    %137 = vector.shape_cast %132 : vector<8x128xf32> to vector<1x1x8x128xf32>
    tpu.vector_store %arg12[%c0_85, %c3, %c0_86, %c0_87], %137 {strides = array<i32>} : memref<1x4x8x128xf32, #tpu.memory_space<vmem>>, vector<1x1x8x128xf32>,
    %c0_88 = arith.constant 0 : index
    %c3_89 = arith.constant 3 : index
    %c0_90 = arith.constant 0 : index
    %c0_91 = arith.constant 0 : index
    %138 = vector.load %arg13[%c0_88, %c3_89, %c0_90, %c0_91] : memref<1x4x8x128xf32, #tpu.memory_space<vmem>>, vector<1x1x8x128xf32>
    %139 = vector.shape_cast %138 : vector<1x1x8x128xf32> to vector<8x128xf32>
    %140 = vector.shape_cast %133 : vector<8x128xf32> to vector<1x1x8x128xf32>
    tpu.vector_store %arg13[%c0_88, %c3_89, %c0_90, %c0_91], %140 {strides = array<i32>} : memref<1x4x8x128xf32, #tpu.memory_space<vmem>>, vector<1x1x8x128xf32>,
    %c0_92 = arith.constant 0 : index
    %c3_93 = arith.constant 3 : index
    %c0_94 = arith.constant 0 : index
    %c0_95 = arith.constant 0 : index
    %141 = vector.load %arg14[%c0_92, %c3_93, %c0_94, %c0_95] : memref<1x4x8x128xf32, #tpu.memory_space<vmem>>, vector<1x1x8x128xf32>
    %142 = vector.shape_cast %141 : vector<1x1x8x128xf32> to vector<8x128xf32>
    %143 = vector.shape_cast %134 : vector<8x128xf32> to vector<1x1x8x128xf32>
    tpu.vector_store %arg14[%c0_92, %c3_93, %c0_94, %c0_95], %143 {strides = array<i32>} : memref<1x4x8x128xf32, #tpu.memory_space<vmem>>, vector<1x1x8x128xf32>,
    %144 = arith.truncf %132 : vector<8x128xf32> to vector<8x128xbf16>
    %145 = arith.truncf %133 : vector<8x128xf32> to vector<8x128xbf16>
    %cst_96 = arith.constant dense<0.000000e+00> : vector<8x8xf32>
    %146 = tpu.matmul %144, %145, %cst_96 {dimension_numbers = #tpu.dot_dimension_numbers<[1], [1], [0], [0], [0, 0, 1, 0], [], []>} : vector<8x128xbf16>, vector<8x128xbf16>, vector<8x8xf32> -> vector<8x8xf32>
    %cst_97 = arith.constant 0.0883883461 : f32
    %147 = vector.broadcast %cst_97 : f32 to vector<8x8xf32>
    %148 = arith.mulf %146, %147 : vector<8x8xf32>
    %149 = arith.addf %148, %29 : vector<8x8xf32>
    %cst_98 = arith.constant dense<0xFF800000> : vector<8xf32>
    %150 = vector.multi_reduction <maximumf>, %149, %cst_98 [1] : vector<8x8xf32> to vector<8xf32>
    %151 = vector.shape_cast %150 : vector<8xf32> to vector<8x1xf32>
    %152 = vector.broadcast %151 : vector<8x1xf32> to vector<8x8xf32>
    %153 = arith.subf %149, %152 : vector<8x8xf32>
    %154 = math.exp %153 : vector<8x8xf32>
    %cst_99 = arith.constant dense<0.000000e+00> : vector<8xf32>
    %155 = vector.multi_reduction <add>, %154, %cst_99 [1] : vector<8x8xf32> to vector<8xf32>
    %156 = vector.shape_cast %155 : vector<8xf32> to vector<8x1xf32>
    %157 = tpu.reciprocal %156 {approx = true} : vector<8x1xf32> -> vector<8x1xf32>
    %158 = vector.broadcast %157 : vector<8x1xf32> to vector<8x8xf32>
    %159 = arith.mulf %154, %158 : vector<8x8xf32>
    %c0_100 = arith.constant 0 : index
    %c3_101 = arith.constant 3 : index
    %c0_102 = arith.constant 0 : index
    %c0_103 = arith.constant 0 : index
    %160 = vector.load %arg15[%c0_100, %c3_101, %c0_102, %c0_103] : memref<1x4x8x8xf32, #tpu.memory_space<vmem>>, vector<1x1x8x8xf32>
    %161 = vector.shape_cast %160 : vector<1x1x8x8xf32> to vector<8x8xf32>
    %162 = vector.shape_cast %159 : vector<8x8xf32> to vector<1x1x8x8xf32>
    tpu.vector_store %arg15[%c0_100, %c3_101, %c0_102, %c0_103], %162 {strides = array<i32>} : memref<1x4x8x8xf32, #tpu.memory_space<vmem>>, vector<1x1x8x8xf32>,
    %163 = arith.truncf %159 : vector<8x8xf32> to vector<8x8xbf16>
    %164 = arith.truncf %134 : vector<8x128xf32> to vector<8x128xbf16>
    %cst_104 = arith.constant dense<0.000000e+00> : vector<8x128xf32>
    %165 = tpu.matmul %163, %164, %cst_104 {dimension_numbers = #tpu.dot_dimension_numbers<[1], [0], [0], [1], [0, 0, 1, 1], [], []>} : vector<8x8xbf16>, vector<8x128xbf16>, vector<8x128xf32> -> vector<8x128xf32>
    %166 = tpu.concatenate %63, %97, %131, %165 in 1 : vector<8x128xf32>, vector<8x128xf32>, vector<8x128xf32>, vector<8x128xf32> -> vector<8x512xf32>
    %167 = arith.truncf %166 : vector<8x512xf32> to vector<8x512xbf16>
    %c0_105 = arith.constant 0 : index
    %c0_106 = arith.constant 0 : index
    %168 = vector.load %arg7[%c0_105, %c0_106] : memref<512x512xbf16, #tpu.memory_space<vmem>>, vector<512x512xbf16>
    %cst_107 = arith.constant dense<0.000000e+00> : vector<8x512xf32>
    %169 = tpu.matmul %167, %168, %cst_107 {dimension_numbers = #tpu.dot_dimension_numbers<[1], [0], [0], [1], [0, 0, 1, 1], [], []>} : vector<8x512xbf16>, vector<512x512xbf16>, vector<8x512xf32> -> vector<8x512xf32>
    %c0_108 = arith.constant 0 : index
    %c0_109 = arith.constant 0 : index
    %170 = vector.load %arg11[%c0_108, %c0_109] : memref<1x512xf32, #tpu.memory_space<vmem>>, vector<1x512xf32>
    %171 = vector.broadcast %170 : vector<1x512xf32> to vector<8x512xf32>
    %172 = arith.addf %169, %171 : vector<8x512xf32>
    %c0_110 = arith.constant 0 : index
    %c0_111 = arith.constant 0 : index
    %c0_112 = arith.constant 0 : index
    %173 = vector.load %arg16[%c0_110, %c0_111, %c0_112] : memref<1x8x512xf32, #tpu.memory_space<vmem>>, vector<1x8x512xf32>
    %174 = vector.shape_cast %173 : vector<1x8x512xf32> to vector<8x512xf32>
    %175 = vector.shape_cast %172 : vector<8x512xf32> to vector<1x8x512xf32>
    tpu.vector_store %arg16[%c0_110, %c0_111, %c0_112], %175 {strides = array<i32>} : memref<1x8x512xf32, #tpu.memory_space<vmem>>, vector<1x8x512xf32>,
    return
  }
  func.func @transform_0(%arg0: i32) -> (i32, i32, i32) {
    %c0_i32 = arith.constant 0 : i32
    %c0_i32_0 = arith.constant 0 : i32
    %c0_i32_1 = arith.constant 0 : i32
    return %arg0, %c0_i32, %c0_i32_0 : i32, i32, i32
  }
  func.func @transform_1(%arg0: i32) -> (i32, i32, i32) {
    %c0_i32 = arith.constant 0 : i32
    %c0_i32_0 = arith.constant 0 : i32
    %c0_i32_1 = arith.constant 0 : i32
    return %arg0, %c0_i32, %c0_i32_0 : i32, i32, i32
  }
  func.func @transform_2(%arg0: i32) -> (i32, i32, i32) {
    %c0_i32 = arith.constant 0 : i32
    %c0_i32_0 = arith.constant 0 : i32
    %c0_i32_1 = arith.constant 0 : i32
    return %arg0, %c0_i32, %c0_i32_0 : i32, i32, i32
  }
  func.func @transform_3(%arg0: i32) -> (i32, i32) {
    %c0_i32 = arith.constant 0 : i32
    %c0_i32_0 = arith.constant 0 : i32
    %c0_i32_1 = arith.constant 0 : i32
    return %c0_i32, %c0_i32_0 : i32, i32
  }
  func.func @transform_4(%arg0: i32) -> (i32, i32) {
    %c0_i32 = arith.constant 0 : i32
    %c0_i32_0 = arith.constant 0 : i32
    %c0_i32_1 = arith.constant 0 : i32
    return %c0_i32, %c0_i32_0 : i32, i32
  }
  func.func @transform_5(%arg0: i32) -> (i32, i32) {
    %c0_i32 = arith.constant 0 : i32
    %c0_i32_0 = arith.constant 0 : i32
    %c0_i32_1 = arith.constant 0 : i32
    return %c0_i32, %c0_i32_0 : i32, i32
  }
  func.func @transform_6(%arg0: i32) -> (i32, i32) {
    %c0_i32 = arith.constant 0 : i32
    %c0_i32_0 = arith.constant 0 : i32
    %c0_i32_1 = arith.constant 0 : i32
    return %c0_i32, %c0_i32_0 : i32, i32
  }
  func.func @transform_7(%arg0: i32) -> (i32, i32) {
    %c0_i32 = arith.constant 0 : i32
    %c0_i32_0 = arith.constant 0 : i32
    %c0_i32_1 = arith.constant 0 : i32
    return %c0_i32, %c0_i32_0 : i32, i32
  }
  func.func @transform_8(%arg0: i32) -> (i32, i32) {
    %c0_i32 = arith.constant 0 : i32
    %c0_i32_0 = arith.constant 0 : i32
    %c0_i32_1 = arith.constant 0 : i32
    return %c0_i32, %c0_i32_0 : i32, i32
  }
  func.func @transform_9(%arg0: i32) -> (i32, i32) {
    %c0_i32 = arith.constant 0 : i32
    %c0_i32_0 = arith.constant 0 : i32
    %c0_i32_1 = arith.constant 0 : i32
    return %c0_i32, %c0_i32_0 : i32, i32
  }
  func.func @transform_10(%arg0: i32) -> (i32, i32) {
    %c0_i32 = arith.constant 0 : i32
    %c0_i32_0 = arith.constant 0 : i32
    %c0_i32_1 = arith.constant 0 : i32
    return %c0_i32, %c0_i32_0 : i32, i32
  }
  func.func @transform_11(%arg0: i32) -> (i32, i32, i32, i32) {
    %c0_i32 = arith.constant 0 : i32
    %c0_i32_0 = arith.constant 0 : i32
    %c0_i32_1 = arith.constant 0 : i32
    %c0_i32_2 = arith.constant 0 : i32
    return %arg0, %c0_i32, %c0_i32_0, %c0_i32_1 : i32, i32, i32, i32
  }
  func.func @transform_12(%arg0: i32) -> (i32, i32, i32, i32) {
    %c0_i32 = arith.constant 0 : i32
    %c0_i32_0 = arith.constant 0 : i32
    %c0_i32_1 = arith.constant 0 : i32
    %c0_i32_2 = arith.constant 0 : i32
    return %arg0, %c0_i32, %c0_i32_0, %c0_i32_1 : i32, i32, i32, i32
  }
  func.func @transform_13(%arg0: i32) -> (i32, i32, i32, i32) {
    %c0_i32 = arith.constant 0 : i32
    %c0_i32_0 = arith.constant 0 : i32
    %c0_i32_1 = arith.constant 0 : i32
    %c0_i32_2 = arith.constant 0 : i32
    return %arg0, %c0_i32, %c0_i32_0, %c0_i32_1 : i32, i32, i32, i32
  }
  func.func @transform_14(%arg0: i32) -> (i32, i32, i32, i32) {
    %c0_i32 = arith.constant 0 : i32
    %c0_i32_0 = arith.constant 0 : i32
    %c0_i32_1 = arith.constant 0 : i32
    %c0_i32_2 = arith.constant 0 : i32
    return %arg0, %c0_i32, %c0_i32_0, %c0_i32_1 : i32, i32, i32, i32
  }
  func.func @transform_15(%arg0: i32) -> (i32, i32, i32) {
    %c0_i32 = arith.constant 0 : i32
    %c0_i32_0 = arith.constant 0 : i32
    %c0_i32_1 = arith.constant 0 : i32
    return %arg0, %c0_i32, %c0_i32_0 : i32, i32, i32
  }
}

</mosaic_0001>

<llo_original>
// kernel: tpu_custom_call.1
$region0: #{tpu_custom_call.1}
  #allocation0 [shape = 'u32[]', space=smem, size = 0x4, offset = 0x4, fixed_abs, tag = 'smem constant byte address 0x4 - core index']
  #allocation1 [shape = 'u32[144,128]{1,0:T(1,128)}', space=vmem, size = 0x12000, scoped, tag = 'internal scratch']
  %s0 = inlined_call_operand.hbm [shape: f32[2,8,512], index: 0, kind: input, shape index: {}]
  %s1 = inlined_call_operand.hbm [shape: f32[2,8,512], index: 1, kind: input, shape index: {}]
  %s2 = inlined_call_operand.hbm [shape: f32[2,8,512], index: 2, kind: input, shape index: {}]
  %s3 = inlined_call_operand.hbm [shape: bf16[512,512], index: 3, kind: input, shape index: {}]
  %s4 = inlined_call_operand.hbm [shape: bf16[512,512], index: 4, kind: input, shape index: {}]
  %s5 = inlined_call_operand.hbm [shape: bf16[512,512], index: 5, kind: input, shape index: {}]
  %s6 = inlined_call_operand.hbm [shape: bf16[512,512], index: 6, kind: input, shape index: {}]
  %s7 = inlined_call_operand.vmem [shape: f32[1,512], index: 7, kind: input, shape index: {}]
  %s8 = inlined_call_operand.vmem [shape: f32[1,512], index: 8, kind: input, shape index: {}]
  %s9 = inlined_call_operand.vmem [shape: f32[1,512], index: 9, kind: input, shape index: {}]
  %s10 = inlined_call_operand.vmem [shape: f32[1,512], index: 10, kind: input, shape index: {}]
  %s11 = inlined_call_operand.hbm [shape: f32[2,4,8,128], index: 11, kind: output, shape index: {0}]
  %s12 = inlined_call_operand.hbm [shape: f32[2,4,8,128], index: 12, kind: output, shape index: {1}]
  %s13 = inlined_call_operand.hbm [shape: f32[2,4,8,128], index: 13, kind: output, shape index: {2}]
  %s14 = inlined_call_operand.hbm [shape: f32[2,4,8,8], index: 14, kind: output, shape index: {3}]
  %s15 = inlined_call_operand.hbm [shape: f32[2,8,512], index: 15, kind: output, shape index: {4}]
  %16 = xla_tuple %s11, %s12, %s13, %s14, %s15
  %s17 = sld [smem:[#allocation0]]
  $region137: #{tpu_custom_call.1} parent=0
    _
  %s19 = ssub.s32 1, %s17
  %s20 = scalar_select 0, %s19, %s17
  $region1: #{tpu_custom_call.1} parent=0
    #allocation2 [shape = 'u8[32768]{0}', space=vmem, size = 0x8000, scoped, tag = 'input window, operand 0']
    #allocation3 [shape = 's32[2]{0}', space=sflag, size = 0x8, scoped, tag = 'scoped memory for tpu_custom_call.1']
    #allocation4 [shape = 's32[2]{0}', space=sflag, size = 0x8, scoped, tag = 'scoped memory for tpu_custom_call.1']
    #allocation5 [shape = 'u8[32768]{0}', space=vmem, size = 0x8000, scoped, tag = 'input window, operand 1']
    #allocation6 [shape = 's32[2]{0}', space=sflag, size = 0x8, scoped, tag = 'scoped memory for tpu_custom_call.1']
    #allocation7 [shape = 'u8[32768]{0}', space=vmem, size = 0x8000, scoped, tag = 'input window, operand 2']
    #allocation8 [shape = 'u8[524288]{0}', space=vmem, size = 0x80000, scoped, tag = 'input window, operand 3, single buffered']
    #allocation9 [shape = 's32[1]{0}', space=sflag, size = 0x4, scoped, tag = 'scoped memory for tpu_custom_call.1']
    #allocation10 [shape = 'u8[524288]{0}', space=vmem, size = 0x80000, scoped, tag = 'input window, operand 4, single buffered']
    #allocation11 [shape = 'u8[524288]{0}', space=vmem, size = 0x80000, scoped, tag = 'input window, operand 5, single buffered']
    #allocation12 [shape = 's32[1]{0}', space=sflag, size = 0x4, scoped, tag = 'scoped memory for tpu_custom_call.1']
    #allocation13 [shape = 'u8[524288]{0}', space=vmem, size = 0x80000, scoped, tag = 'input window, operand 6, single buffered']
    #allocation14 [shape = 'u8[32768]{0}', space=vmem, size = 0x8000, scoped, tag = 'output window, operand 0']
    #allocation15 [shape = 'u8[32768]{0}', space=vmem, size = 0x8000, scoped, tag = 'output window, operand 1']
    #allocation16 [shape = 's32[2]{0}', space=sflag, size = 0x8, scoped, tag = 'scoped memory for tpu_custom_call.1']
    #allocation17 [shape = 'u8[32768]{0}', space=vmem, size = 0x8000, scoped, tag = 'output window, operand 2']
    #allocation18 [shape = 'u8[32768]{0}', space=vmem, size = 0x8000, scoped, tag = 'output window, operand 3']
    #allocation19 [shape = 's32[2]{0}', space=sflag, size = 0x8, scoped, tag = 'scoped memory for tpu_custom_call.1']
    #allocation20 [shape = 'u8[32768]{0}', space=vmem, size = 0x8000, scoped, tag = 'output window, operand 4']
    %21 = vsyncpa [#allocation3], 0
    %s22 = scalar_lea.sflag [#allocation3], 1
    %23 = vsyncpa %s22, 0
    %24 = vsyncpa [#allocation6], 0
    %s25 = scalar_lea.sflag [#allocation6], 1
    %26 = vsyncpa %s25, 0
    %27 = vsyncpa [#allocation9], 0
    %28 = vsyncpa [#allocation12], 0
    %29 = vsyncpa [#allocation4], 0
    %s30 = scalar_lea.sflag [#allocation4], 1
    %31 = vsyncpa %s30, 0
    %32 = vsyncpa [#allocation16], 0
    %s33 = scalar_lea.sflag [#allocation16], 1
    %34 = vsyncpa %s33, 0
    %35 = vsyncpa [#allocation19], 0
    %s36 = scalar_lea.sflag [#allocation19], 1
    %37 = vsyncpa %s36, 0
    loop: start=0, step=1, limit=4
    $region2: #{tpu_custom_call.1} parent=1 // loop_pre_header
      _
    $region3: #{tpu_custom_call.1} parent=1 // loop_header
      %s39 = sphi 0, %s43
      %p40 = scmp.ge.s32.totalorder %s39, 4
      %s49 = sphi 0, %s51
      %s52 = sphi 0, %s49
      %s53 = sphi 0, %s52
      %s69 = sphi 0, %s53
      %s75 = sphi 0, %s77
      %s78 = sphi 0, %s75
      %s79 = sphi 0, %s78
      %s95 = sphi 0, %s79
      %s101 = sphi 0, %s103
      %s104 = sphi 0, %s101
      %s105 = sphi 0, %s104
      %s121 = sphi 0, %s105
      %s125 = sphi 0, %s125
      %s127 = sphi 0, %s125
      %s128 = sphi 0, %s127
      %s142 = sphi 0, %s128
      %s146 = sphi 0, %s146
      %s148 = sphi 0, %s146
      %s149 = sphi 0, %s148
      %s163 = sphi 0, %s149
      %s167 = sphi 0, %s167
      %s169 = sphi 0, %s167
      %s170 = sphi 0, %s169
      %s184 = sphi 0, %s170
      %s188 = sphi 0, %s188
      %s190 = sphi 0, %s188
      %s191 = sphi 0, %s190
      %s205 = sphi 0, %s191
      %s209 = sphi 0, %s209
      %s211 = sphi 0, %s209
      %s212 = sphi 0, %s211
      %s226 = sphi 0, %s212
      %s230 = sphi 0, %s230
      %s232 = sphi 0, %s230
      %s233 = sphi 0, %s232
      %s247 = sphi 0, %s233
      %s251 = sphi 0, %s251
      %s253 = sphi 0, %s251
      %s254 = sphi 0, %s253
      %s268 = sphi 0, %s254
      %s272 = sphi 0, %s272
      %s274 = sphi 0, %s272
      %s275 = sphi 0, %s274
      %s289 = sphi 0, %s275
      %s295 = sphi 0, %s297
      %s298 = sphi 0, %s295
      %s299 = sphi 0, %s298
      %s315 = sphi 0, %s299
      %s321 = sphi 0, %s323
      %s324 = sphi 0, %s321
      %s325 = sphi 0, %s324
      %s341 = sphi 0, %s325
      %s347 = sphi 0, %s349
      %s350 = sphi 0, %s347
      %s351 = sphi 0, %s350
      %s367 = sphi 0, %s351
      %s373 = sphi 0, %s375
      %s376 = sphi 0, %s373
      %s377 = sphi 0, %s376
      %s393 = sphi 0, %s377
      %s399 = sphi 0, %s401
      %s402 = sphi 0, %s399
      %s403 = sphi 0, %s402
      %s419 = sphi 0, %s403
    $region4: #{tpu_custom_call.1} parent=1 // loop_header_branch
      %42 = sbr.rel (%p40) target = $region8
    $region5: #{tpu_custom_call.1} parent=1 // loop_body
      %s44 = ssub.s32 %s39, 1
      %s45 = ssub.s32 %s39, 2
      %s46 = sadd.s32 %s39, 1
      %s47 = ssub.s32 %s39, %s46
      %p48 = scmp.eq.s32.totalorder %s47, 0
      %s50 = sadd.s32 %s49, 1
      %s51 = scalar_select %p48, %s49, %s50
      %p54 = pneg %p48
      %p55 = scmp.eq.s32.totalorder %s39, 1
      %p56 = por %p54, %p55
      %p57 = scmp.ne.s32.totalorder %s49, %s52
      %p58 = scmp.eq.s32.totalorder %s39, 0
      %p59 = por %p57, %p58
      %p60 = scmp.ne.s32.totalorder %s49, %s52
      %p61 = scmp.eq.s32.totalorder %s44, 1
      %p62 = por %p60, %p61
      %p63 = scmp.ne.s32.totalorder %s52, %s53
      %p64 = scmp.eq.s32.totalorder %s44, 0
      %p65 = por %p63, %p64
      %p66 = scmp.ne.s32.totalorder %s52, %s53
      %p67 = scmp.eq.s32.totalorder %s45, 1
      %p68 = por %p66, %p67
      %p70 = scmp.ne.s32.totalorder %s53, %s69
      %p71 = scmp.eq.s32.totalorder %s45, 0
      %p72 = por %p70, %p71
      %s73 = ssub.s32 %s39, %s46
      %p74 = scmp.eq.s32.totalorder %s73, 0
      %s76 = sadd.s32 %s75, 1
      %s77 = scalar_select %p74, %s75, %s76
      %p80 = pneg %p74
      %p81 = scmp.eq.s32.totalorder %s39, 1
      %p82 = por %p80, %p81
      %p83 = scmp.ne.s32.totalorder %s75, %s78
      %p84 = scmp.eq.s32.totalorder %s39, 0
      %p85 = por %p83, %p84
      %p86 = scmp.ne.s32.totalorder %s75, %s78
      %p87 = scmp.eq.s32.totalorder %s44, 1
      %p88 = por %p86, %p87
      %p89 = scmp.ne.s32.totalorder %s78, %s79
      %p90 = scmp.eq.s32.totalorder %s44, 0
      %p91 = por %p89, %p90
      %p92 = scmp.ne.s32.totalorder %s78, %s79
      %p93 = scmp.eq.s32.totalorder %s45, 1
      %p94 = por %p92, %p93
      %p96 = scmp.ne.s32.totalorder %s79, %s95
      %p97 = scmp.eq.s32.totalorder %s45, 0
      %p98 = por %p96, %p97
      %s99 = ssub.s32 %s39, %s46
      %p100 = scmp.eq.s32.totalorder %s99, 0
      %s102 = sadd.s32 %s101, 1
      %s103 = scalar_select %p100, %s101, %s102
      %p106 = pneg %p100
      %p107 = scmp.eq.s32.totalorder %s39, 1
      %p108 = por %p106, %p107
      %p109 = scmp.ne.s32.totalorder %s101, %s104
      %p110 = scmp.eq.s32.totalorder %s39, 0
      %p111 = por %p109, %p110
      %p112 = scmp.ne.s32.totalorder %s101, %s104
      %p113 = scmp.eq.s32.totalorder %s44, 1
      %p114 = por %p112, %p113
      %p115 = scmp.ne.s32.totalorder %s104, %s105
      %p116 = scmp.eq.s32.totalorder %s44, 0
      %p117 = por %p115, %p116
      %p118 = scmp.ne.s32.totalorder %s104, %s105
      %p119 = scmp.eq.s32.totalorder %s45, 1
      %p120 = por %p118, %p119
      %p122 = scmp.ne.s32.totalorder %s105, %s121
      %p123 = scmp.eq.s32.totalorder %s45, 0
      %p124 = por %p122, %p123
      %s126 = sadd.s32 %s125, 1
      %p129 = scmp.eq.s32.totalorder %s39, 1
      %p130 = scmp.ne.s32.totalorder %s125, %s127
      %p131 = scmp.eq.s32.totalorder %s39, 0
      %p132 = por %p130, %p131
      %p133 = scmp.ne.s32.totalorder %s125, %s127
      %p134 = scmp.eq.s32.totalorder %s44, 1
      %p135 = por %p133, %p134
      %p136 = scmp.ne.s32.totalorder %s127, %s128
      %p137 = scmp.eq.s32.totalorder %s44, 0
      %p138 = por %p136, %p137
      %p139 = scmp.ne.s32.totalorder %s127, %s128
      %p140 = scmp.eq.s32.totalorder %s45, 1
      %p141 = por %p139, %p140
      %p143 = scmp.ne.s32.totalorder %s128, %s142
      %p144 = scmp.eq.s32.totalorder %s45, 0
      %p145 = por %p143, %p144
      %s147 = sadd.s32 %s146, 1
      %p150 = scmp.eq.s32.totalorder %s39, 1
      %p151 = scmp.ne.s32.totalorder %s146, %s148
      %p152 = scmp.eq.s32.totalorder %s39, 0
      %p153 = por %p151, %p152
      %p154 = scmp.ne.s32.totalorder %s146, %s148
      %p155 = scmp.eq.s32.totalorder %s44, 1
      %p156 = por %p154, %p155
      %p157 = scmp.ne.s32.totalorder %s148, %s149
      %p158 = scmp.eq.s32.totalorder %s44, 0
      %p159 = por %p157, %p158
      %p160 = scmp.ne.s32.totalorder %s148, %s149
      %p161 = scmp.eq.s32.totalorder %s45, 1
      %p162 = por %p160, %p161
      %p164 = scmp.ne.s32.totalorder %s149, %s163
      %p165 = scmp.eq.s32.totalorder %s45, 0
      %p166 = por %p164, %p165
      %s168 = sadd.s32 %s167, 1
      %p171 = scmp.eq.s32.totalorder %s39, 1
      %p172 = scmp.ne.s32.totalorder %s167, %s169
      %p173 = scmp.eq.s32.totalorder %s39, 0
      %p174 = por %p172, %p173
      %p175 = scmp.ne.s32.totalorder %s167, %s169
      %p176 = scmp.eq.s32.totalorder %s44, 1
      %p177 = por %p175, %p176
      %p178 = scmp.ne.s32.totalorder %s169, %s170
      %p179 = scmp.eq.s32.totalorder %s44, 0
      %p180 = por %p178, %p179
      %p181 = scmp.ne.s32.totalorder %s169, %s170
      %p182 = scmp.eq.s32.totalorder %s45, 1
      %p183 = por %p181, %p182
      %p185 = scmp.ne.s32.totalorder %s170, %s184
      %p186 = scmp.eq.s32.totalorder %s45, 0
      %p187 = por %p185, %p186
      %s189 = sadd.s32 %s188, 1
      %p192 = scmp.eq.s32.totalorder %s39, 1
      %p193 = scmp.ne.s32.totalorder %s188, %s190
      %p194 = scmp.eq.s32.totalorder %s39, 0
      %p195 = por %p193, %p194
      %p196 = scmp.ne.s32.totalorder %s188, %s190
      %p197 = scmp.eq.s32.totalorder %s44, 1
      %p198 = por %p196, %p197
      %p199 = scmp.ne.s32.totalorder %s190, %s191
      %p200 = scmp.eq.s32.totalorder %s44, 0
      %p201 = por %p199, %p200
      %p202 = scmp.ne.s32.totalorder %s190, %s191
      %p203 = scmp.eq.s32.totalorder %s45, 1
      %p204 = por %p202, %p203
      %p206 = scmp.ne.s32.totalorder %s191, %s205
      %p207 = scmp.eq.s32.totalorder %s45, 0
      %p208 = por %p206, %p207
      %s210 = sadd.s32 %s209, 1
      %p213 = scmp.eq.s32.totalorder %s39, 1
      %p214 = scmp.ne.s32.totalorder %s209, %s211
      %p215 = scmp.eq.s32.totalorder %s39, 0
      %p216 = por %p214, %p215
      %p217 = scmp.ne.s32.totalorder %s209, %s211
      %p218 = scmp.eq.s32.totalorder %s44, 1
      %p219 = por %p217, %p218
      %p220 = scmp.ne.s32.totalorder %s211, %s212
      %p221 = scmp.eq.s32.totalorder %s44, 0
      %p222 = por %p220, %p221
      %p223 = scmp.ne.s32.totalorder %s211, %s212
      %p224 = scmp.eq.s32.totalorder %s45, 1
      %p225 = por %p223, %p224
      %p227 = scmp.ne.s32.totalorder %s212, %s226
      %p228 = scmp.eq.s32.totalorder %s45, 0
      %p229 = por %p227, %p228
      %s231 = sadd.s32 %s230, 1
      %p234 = scmp.eq.s32.totalorder %s39, 1
      %p235 = scmp.ne.s32.totalorder %s230, %s232
      %p236 = scmp.eq.s32.totalorder %s39, 0
      %p237 = por %p235, %p236
      %p238 = scmp.ne.s32.totalorder %s230, %s232
      %p239 = scmp.eq.s32.totalorder %s44, 1
      %p240 = por %p238, %p239
      %p241 = scmp.ne.s32.totalorder %s232, %s233
      %p242 = scmp.eq.s32.totalorder %s44, 0
      %p243 = por %p241, %p242
      %p244 = scmp.ne.s32.totalorder %s232, %s233
      %p245 = scmp.eq.s32.totalorder %s45, 1
      %p246 = por %p244, %p245
      %p248 = scmp.ne.s32.totalorder %s233, %s247
      %p249 = scmp.eq.s32.totalorder %s45, 0
      %p250 = por %p248, %p249
      %s252 = sadd.s32 %s251, 1
      %p255 = scmp.eq.s32.totalorder %s39, 1
      %p256 = scmp.ne.s32.totalorder %s251, %s253
      %p257 = scmp.eq.s32.totalorder %s39, 0
      %p258 = por %p256, %p257
      %p259 = scmp.ne.s32.totalorder %s251, %s253
      %p260 = scmp.eq.s32.totalorder %s44, 1
      %p261 = por %p259, %p260
      %p262 = scmp.ne.s32.totalorder %s253, %s254
      %p263 = scmp.eq.s32.totalorder %s44, 0
      %p264 = por %p262, %p263
      %p265 = scmp.ne.s32.totalorder %s253, %s254
      %p266 = scmp.eq.s32.totalorder %s45, 1
      %p267 = por %p265, %p266
      %p269 = scmp.ne.s32.totalorder %s254, %s268
      %p270 = scmp.eq.s32.totalorder %s45, 0
      %p271 = por %p269, %p270
      %s273 = sadd.s32 %s272, 1
      %p276 = scmp.eq.s32.totalorder %s39, 1
      %p277 = scmp.ne.s32.totalorder %s272, %s274
      %p278 = scmp.eq.s32.totalorder %s39, 0
      %p279 = por %p277, %p278
      %p280 = scmp.ne.s32.totalorder %s272, %s274
      %p281 = scmp.eq.s32.totalorder %s44, 1
      %p282 = por %p280, %p281
      %p283 = scmp.ne.s32.totalorder %s274, %s275
      %p284 = scmp.eq.s32.totalorder %s44, 0
      %p285 = por %p283, %p284
      %p286 = scmp.ne.s32.totalorder %s274, %s275
      %p287 = scmp.eq.s32.totalorder %s45, 1
      %p288 = por %p286, %p287
      %p290 = scmp.ne.s32.totalorder %s275, %s289
      %p291 = scmp.eq.s32.totalorder %s45, 0
      %p292 = por %p290, %p291
      %s293 = ssub.s32 %s39, %s46
      %p294 = scmp.eq.s32.totalorder %s293, 0
      %s296 = sadd.s32 %s295, 1
      %s297 = scalar_select %p294, %s295, %s296
      %p300 = pneg %p294
      %p301 = scmp.eq.s32.totalorder %s39, 1
      %p302 = por %p300, %p301
      %p303 = scmp.ne.s32.totalorder %s295, %s298
      %p304 = scmp.eq.s32.totalorder %s39, 0
      %p305 = por %p303, %p304
      %p306 = scmp.ne.s32.totalorder %s295, %s298
      %p307 = scmp.eq.s32.totalorder %s44, 1
      %p308 = por %p306, %p307
      %p309 = scmp.ne.s32.totalorder %s298, %s299
      %p310 = scmp.eq.s32.totalorder %s44, 0
      %p311 = por %p309, %p310
      %p312 = scmp.ne.s32.totalorder %s298, %s299
      %p313 = scmp.eq.s32.totalorder %s45, 1
      %p314 = por %p312, %p313
      %p316 = scmp.ne.s32.totalorder %s299, %s315
      %p317 = scmp.eq.s32.totalorder %s45, 0
      %p318 = por %p316, %p317
      %s319 = ssub.s32 %s39, %s46
      %p320 = scmp.eq.s32.totalorder %s319, 0
      %s322 = sadd.s32 %s321, 1
      %s323 = scalar_select %p320, %s321, %s322
      %p326 = pneg %p320
      %p327 = scmp.eq.s32.totalorder %s39, 1
      %p328 = por %p326, %p327
      %p329 = scmp.ne.s32.totalorder %s321, %s324
      %p330 = scmp.eq.s32.totalorder %s39, 0
      %p331 = por %p329, %p330
      %p332 = scmp.ne.s32.totalorder %s321, %s324
      %p333 = scmp.eq.s32.totalorder %s44, 1
      %p334 = por %p332, %p333
      %p335 = scmp.ne.s32.totalorder %s324, %s325
      %p336 = scmp.eq.s32.totalorder %s44, 0
      %p337 = por %p335, %p336
      %p338 = scmp.ne.s32.totalorder %s324, %s325
      %p339 = scmp.eq.s32.totalorder %s45, 1
      %p340 = por %p338, %p339
      %p342 = scmp.ne.s32.totalorder %s325, %s341
      %p343 = scmp.eq.s32.totalorder %s45, 0
      %p344 = por %p342, %p343
      %s345 = ssub.s32 %s39, %s46
      %p346 = scmp.eq.s32.totalorder %s345, 0
      %s348 = sadd.s32 %s347, 1
      %s349 = scalar_select %p346, %s347, %s348
      %p352 = pneg %p346
      %p353 = scmp.eq.s32.totalorder %s39, 1
      %p354 = por %p352, %p353
      %p355 = scmp.ne.s32.totalorder %s347, %s350
      %p356 = scmp.eq.s32.totalorder %s39, 0
      %p357 = por %p355, %p356
      %p358 = scmp.ne.s32.totalorder %s347, %s350
      %p359 = scmp.eq.s32.totalorder %s44, 1
      %p360 = por %p358, %p359
      %p361 = scmp.ne.s32.totalorder %s350, %s351
      %p362 = scmp.eq.s32.totalorder %s44, 0
      %p363 = por %p361, %p362
      %p364 = scmp.ne.s32.totalorder %s350, %s351
      %p365 = scmp.eq.s32.totalorder %s45, 1
      %p366 = por %p364, %p365
      %p368 = scmp.ne.s32.totalorder %s351, %s367
      %p369 = scmp.eq.s32.totalorder %s45, 0
      %p370 = por %p368, %p369
      %s371 = ssub.s32 %s39, %s46
      %p372 = scmp.eq.s32.totalorder %s371, 0
      %s374 = sadd.s32 %s373, 1
      %s375 = scalar_select %p372, %s373, %s374
      %p378 = pneg %p372
      %p379 = scmp.eq.s32.totalorder %s39, 1
      %p380 = por %p378, %p379
      %p381 = scmp.ne.s32.totalorder %s373, %s376
      %p382 = scmp.eq.s32.totalorder %s39, 0
      %p383 = por %p381, %p382
      %p384 = scmp.ne.s32.totalorder %s373, %s376
      %p385 = scmp.eq.s32.totalorder %s44, 1
      %p386 = por %p384, %p385
      %p387 = scmp.ne.s32.totalorder %s376, %s377
      %p388 = scmp.eq.s32.totalorder %s44, 0
      %p389 = por %p387, %p388
      %p390 = scmp.ne.s32.totalorder %s376, %s377
      %p391 = scmp.eq.s32.totalorder %s45, 1
      %p392 = por %p390, %p391
      %p394 = scmp.ne.s32.totalorder %s377, %s393
      %p395 = scmp.eq.s32.totalorder %s45, 0
      %p396 = por %p394, %p395
      %s397 = ssub.s32 %s39, %s46
      %p398 = scmp.eq.s32.totalorder %s397, 0
      %s400 = sadd.s32 %s399, 1
      %s401 = scalar_select %p398, %s399, %s400
      %p404 = pneg %p398
      %p405 = scmp.eq.s32.totalorder %s39, 1
      %p406 = por %p404, %p405
      %p407 = scmp.ne.s32.totalorder %s399, %s402
      %p408 = scmp.eq.s32.totalorder %s39, 0
      %p409 = por %p407, %p408
      %p410 = scmp.ne.s32.totalorder %s399, %s402
      %p411 = scmp.eq.s32.totalorder %s44, 1
      %p412 = por %p410, %p411
      %p413 = scmp.ne.s32.totalorder %s402, %s403
      %p414 = scmp.eq.s32.totalorder %s44, 0
      %p415 = por %p413, %p414
      %p416 = scmp.ne.s32.totalorder %s402, %s403
      %p417 = scmp.eq.s32.totalorder %s45, 1
      %p418 = por %p416, %p417
      %p420 = scmp.ne.s32.totalorder %s403, %s419
      %p421 = scmp.eq.s32.totalorder %s45, 0
      %p422 = por %p420, %p421
      %p423 = scmp.le.s32.totalorder 1, %s39
      %p424 = scmp.lt.s32.totalorder %s39, 3
      %p425 = pnand %p423, %p424
      %p426 = pneg %p425
      // Predicated region
      $region9: #{tpu_custom_call.1} parent=5 // pred_check
        _
      $region10: #{tpu_custom_call.1} parent=5 // pred_check_branch
        %428 = sbr.rel (%p425) target = $region12
      $region11: #{tpu_custom_call.1} parent=5 // pred_region
        %s429 = ssub.s32 %s39, 1
        // Predicated region
        $region13: #{tpu_custom_call.1} parent=11 // pred_check
          %p430 = pneg %p138
        $region14: #{tpu_custom_call.1} parent=11 // pred_check_branch
          %432 = sbr.rel (%p430) target = $region16
        $region15: #{tpu_custom_call.1} parent=11 // pred_region
          %s434 = ssub.s32 16384, 16384
          %435 = vsyncadd [#allocation9], %s434
          %s436 = sshll.u32 [#allocation8], 4
          %s437 = int_to_ptr.vmem [resolvable:$true] %s436
          %442 = dma.hbm_to_vmem [thread:$0]  %s3, 16384, %s437, [#allocation9], 256, 256, 16
        $region16: #{tpu_custom_call.1} parent=11 // pred_fallthru
          _
        // Predicated region
        $region17: #{tpu_custom_call.1} parent=11 // pred_check
          %p443 = pneg %p159
        $region18: #{tpu_custom_call.1} parent=11 // pred_check_branch
          %445 = sbr.rel (%p443) target = $region20
        $region19: #{tpu_custom_call.1} parent=11 // pred_region
          %s447 = ssub.s32 16384, 16384
          %448 = vsyncadd [#allocation9], %s447
          %s449 = sshll.u32 [#allocation10], 4
          %s450 = int_to_ptr.vmem [resolvable:$true] %s449
          %455 = dma.hbm_to_vmem [thread:$0]  %s4, 16384, %s450, [#allocation9], 256, 256, 16
        $region20: #{tpu_custom_call.1} parent=11 // pred_fallthru
          _
        // Predicated region
        $region21: #{tpu_custom_call.1} parent=11 // pred_check
          %p456 = pneg %p180
        $region22: #{tpu_custom_call.1} parent=11 // pred_check_branch
          %458 = sbr.rel (%p456) target = $region24
        $region23: #{tpu_custom_call.1} parent=11 // pred_region
          %s460 = ssub.s32 16384, 16384
          %461 = vsyncadd [#allocation12], %s460
          %s462 = sshll.u32 [#allocation11], 4
          %s463 = int_to_ptr.vmem [resolvable:$true] %s462
          %468 = dma.hbm_to_vmem [thread:$0]  %s5, 16384, %s463, [#allocation12], 256, 256, 16
        $region24: #{tpu_custom_call.1} parent=11 // pred_fallthru
          _
        // Predicated region
        $region25: #{tpu_custom_call.1} parent=11 // pred_check
          %p469 = pneg %p201
        $region26: #{tpu_custom_call.1} parent=11 // pred_check_branch
          %471 = sbr.rel (%p469) target = $region28
        $region27: #{tpu_custom_call.1} parent=11 // pred_region
          %s473 = ssub.s32 16384, 16384
          %474 = vsyncadd [#allocation12], %s473
          %s475 = sshll.u32 [#allocation13], 4
          %s476 = int_to_ptr.vmem [resolvable:$true] %s475
          %481 = dma.hbm_to_vmem [thread:$0]  %s6, 16384, %s476, [#allocation12], 256, 256, 16
        $region28: #{tpu_custom_call.1} parent=11 // pred_fallthru
          _
        // Predicated region
        $region29: #{tpu_custom_call.1} parent=11 // pred_check
          %p482 = pneg %p222
        $region30: #{tpu_custom_call.1} parent=11 // pred_check_branch
          %484 = sbr.rel (%p482) target = $region32
        $region31: #{tpu_custom_call.1} parent=11 // pred_region
          _
        $region32: #{tpu_custom_call.1} parent=11 // pred_fallthru
          _
        // Predicated region
        $region33: #{tpu_custom_call.1} parent=11 // pred_check
          %p485 = pneg %p243
        $region34: #{tpu_custom_call.1} parent=11 // pred_check_branch
          %487 = sbr.rel (%p485) target = $region36
        $region35: #{tpu_custom_call.1} parent=11 // pred_region
          _
        $region36: #{tpu_custom_call.1} parent=11 // pred_fallthru
          _
        // Predicated region
        $region37: #{tpu_custom_call.1} parent=11 // pred_check
          %p488 = pneg %p264
        $region38: #{tpu_custom_call.1} parent=11 // pred_check_branch
          %490 = sbr.rel (%p488) target = $region40
        $region39: #{tpu_custom_call.1} parent=11 // pred_region
          _
        $region40: #{tpu_custom_call.1} parent=11 // pred_fallthru
          _
        // Predicated region
        $region41: #{tpu_custom_call.1} parent=11 // pred_check
          %p491 = pneg %p285
        $region42: #{tpu_custom_call.1} parent=11 // pred_check_branch
          %493 = sbr.rel (%p491) target = $region44
        $region43: #{tpu_custom_call.1} parent=11 // pred_region
          _
        $region44: #{tpu_custom_call.1} parent=11 // pred_fallthru
          _
      $region12: #{tpu_custom_call.1} parent=5 // pred_fallthru
        _
      %p494 = scmp.lt.s32.totalorder %s39, 2
      // Predicated region
      $region45: #{tpu_custom_call.1} parent=5 // pred_check
        %p495 = pneg %p494
      $region46: #{tpu_custom_call.1} parent=5 // pred_check_branch
        %497 = sbr.rel (%p495) target = $region48
      $region47: #{tpu_custom_call.1} parent=5 // pred_region
        // Predicated region
        $region49: #{tpu_custom_call.1} parent=47 // pred_check
          %p498 = pneg %p59
        $region50: #{tpu_custom_call.1} parent=47 // pred_check_branch
          %500 = sbr.rel (%p498) target = $region52
        $region51: #{tpu_custom_call.1} parent=47 // pred_region
          %s501 = sand.u32 %s49, 1
          %s502 = scalar_lea.sflag [#allocation3], %s501
          %s503 = sand.u32 %s49, 1
          %s504 = smul.addr %s503, 32
          %s505 = scalar_lea.vmem [#allocation2], %s504
          %s507 = ssub.s32 512, 512
          %508 = vsyncadd %s502, %s507
          %s509 = smul.addr %s39, 4
          %s510 = smul.addr %s509, 128
          %s511 = scalar_lea.hbm %s0, %s510
          %s513 = sshll.u32 %s505, 4
          %s514 = int_to_ptr.vmem [resolvable:$true] %s513
          %516 = dma.hbm_to_vmem [thread:$0]  %s511, 512, %s514, %s502
        $region52: #{tpu_custom_call.1} parent=47 // pred_fallthru
          _
        // Predicated region
        $region53: #{tpu_custom_call.1} parent=47 // pred_check
          %p517 = pneg %p85
        $region54: #{tpu_custom_call.1} parent=47 // pred_check_branch
          %519 = sbr.rel (%p517) target = $region56
        $region55: #{tpu_custom_call.1} parent=47 // pred_region
          %s520 = sand.u32 %s39, 1
          %s521 = scalar_lea.sflag [#allocation6], %s520
          %s522 = sand.u32 %s75, 1
          %s523 = smul.addr %s522, 32
          %s524 = scalar_lea.vmem [#allocation5], %s523
          %s526 = ssub.s32 512, 512
          %527 = vsyncadd %s521, %s526
          %s528 = smul.addr %s39, 4
          %s529 = smul.addr %s528, 128
          %s530 = scalar_lea.hbm %s1, %s529
          %s532 = sshll.u32 %s524, 4
          %s533 = int_to_ptr.vmem [resolvable:$true] %s532
          %535 = dma.hbm_to_vmem [thread:$0]  %s530, 512, %s533, %s521
        $region56: #{tpu_custom_call.1} parent=47 // pred_fallthru
          _
        // Predicated region
        $region57: #{tpu_custom_call.1} parent=47 // pred_check
          %p536 = pneg %p111
        $region58: #{tpu_custom_call.1} parent=47 // pred_check_branch
          %538 = sbr.rel (%p536) target = $region60
        $region59: #{tpu_custom_call.1} parent=47 // pred_region
          %s539 = sand.u32 %s39, 1
          %s540 = scalar_lea.sflag [#allocation6], %s539
          %s541 = sand.u32 %s101, 1
          %s542 = smul.addr %s541, 32
          %s543 = scalar_lea.vmem [#allocation7], %s542
          %s545 = ssub.s32 512, 512
          %546 = vsyncadd %s540, %s545
          %s547 = smul.addr %s39, 4
          %s548 = smul.addr %s547, 128
          %s549 = scalar_lea.hbm %s2, %s548
          %s551 = sshll.u32 %s543, 4
          %s552 = int_to_ptr.vmem [resolvable:$true] %s551
          %554 = dma.hbm_to_vmem [thread:$0]  %s549, 512, %s552, %s540
        $region60: #{tpu_custom_call.1} parent=47 // pred_fallthru
          _
      $region48: #{tpu_custom_call.1} parent=5 // pred_fallthru
        _
      %p555 = scmp.le.s32.totalorder 1, %s39
      %p556 = scmp.lt.s32.totalorder %s39, 3
      %p557 = pnand %p555, %p556
      %p558 = pneg %p557
      // Predicated region
      $region61: #{tpu_custom_call.1} parent=5 // pred_check
        _
      $region62: #{tpu_custom_call.1} parent=5 // pred_check_branch
        %560 = sbr.rel (%p557) target = $region64
      $region63: #{tpu_custom_call.1} parent=5 // pred_region
        %s561 = ssub.s32 %s39, 1
        %s562 = sand.u32 %s52, 1
        %s563 = scalar_lea.sflag [#allocation3], %s562
        %s564 = sand.u32 %s52, 1
        %s565 = smul.addr %s564, 32
        %s566 = scalar_lea.vmem [#allocation2], %s565
        // Predicated region
        $region65: #{tpu_custom_call.1} parent=63 // pred_check
          %p567 = pneg %p65
        $region66: #{tpu_custom_call.1} parent=63 // pred_check_branch
          %569 = sbr.rel (%p567) target = $region68
        $region67: #{tpu_custom_call.1} parent=63 // pred_region
          %570 = dma.done %s563, 512
        $region68: #{tpu_custom_call.1} parent=63 // pred_fallthru
          _
        %s571 = sand.u32 %s44, 1
        %s572 = scalar_lea.sflag [#allocation6], %s571
        %s573 = sand.u32 %s78, 1
        %s574 = smul.addr %s573, 32
        %s575 = scalar_lea.vmem [#allocation5], %s574
        // Predicated region
        $region69: #{tpu_custom_call.1} parent=63 // pred_check
          %p576 = pneg %p91
        $region70: #{tpu_custom_call.1} parent=63 // pred_check_branch
          %578 = sbr.rel (%p576) target = $region72
        $region71: #{tpu_custom_call.1} parent=63 // pred_region
          %579 = dma.done %s572, 512
        $region72: #{tpu_custom_call.1} parent=63 // pred_fallthru
          _
        %s580 = sand.u32 %s44, 1
        %s581 = scalar_lea.sflag [#allocation6], %s580
        %s582 = sand.u32 %s104, 1
        %s583 = smul.addr %s582, 32
        %s584 = scalar_lea.vmem [#allocation7], %s583
        // Predicated region
        $region73: #{tpu_custom_call.1} parent=63 // pred_check
          %p585 = pneg %p117
        $region74: #{tpu_custom_call.1} parent=63 // pred_check_branch
          %587 = sbr.rel (%p585) target = $region76
        $region75: #{tpu_custom_call.1} parent=63 // pred_region
          %588 = dma.done %s581, 512
        $region76: #{tpu_custom_call.1} parent=63 // pred_fallthru
          _
        // Predicated region
        $region77: #{tpu_custom_call.1} parent=63 // pred_check
          %p589 = pneg %p138
        $region78: #{tpu_custom_call.1} parent=63 // pred_check_branch
          %591 = sbr.rel (%p589) target = $region80
        $region79: #{tpu_custom_call.1} parent=63 // pred_region
          %592 = dma.done [#allocation9], 16384
        $region80: #{tpu_custom_call.1} parent=63 // pred_fallthru
          _
        // Predicated region
        $region81: #{tpu_custom_call.1} parent=63 // pred_check
          %p593 = pneg %p159
        $region82: #{tpu_custom_call.1} parent=63 // pred_check_branch
          %595 = sbr.rel (%p593) target = $region84
        $region83: #{tpu_custom_call.1} parent=63 // pred_region
          %596 = dma.done [#allocation9], 16384
        $region84: #{tpu_custom_call.1} parent=63 // pred_fallthru
          _
        // Predicated region
        $region85: #{tpu_custom_call.1} parent=63 // pred_check
          %p597 = pneg %p180
        $region86: #{tpu_custom_call.1} parent=63 // pred_check_branch
          %599 = sbr.rel (%p597) target = $region88
        $region87: #{tpu_custom_call.1} parent=63 // pred_region
          %600 = dma.done [#allocation12], 16384
        $region88: #{tpu_custom_call.1} parent=63 // pred_fallthru
          _
        // Predicated region
        $region89: #{tpu_custom_call.1} parent=63 // pred_check
          %p601 = pneg %p201
        $region90: #{tpu_custom_call.1} parent=63 // pred_check_branch
          %603 = sbr.rel (%p601) target = $region92
        $region91: #{tpu_custom_call.1} parent=63 // pred_region
          %604 = dma.done [#allocation12], 16384
        $region92: #{tpu_custom_call.1} parent=63 // pred_fallthru
          _
        %s605 = sand.u32 %s52, 1
        %s606 = scalar_lea.sflag [#allocation3], %s605
        %s607 = sand.u32 %s52, 1
        %s608 = smul.addr %s607, 32
        %s609 = scalar_lea.vmem [#allocation2], %s608
        %p610 = pneg %p65
        %p611 = pneg %p62
        %s612 = sand.u32 %s44, 1
        %s613 = scalar_lea.sflag [#allocation6], %s612
        %s614 = sand.u32 %s78, 1
        %s615 = smul.addr %s614, 32
        %s616 = scalar_lea.vmem [#allocation5], %s615
        %p617 = pneg %p91
        %p618 = pneg %p88
        %s619 = sand.u32 %s44, 1
        %s620 = scalar_lea.sflag [#allocation6], %s619
        %s621 = sand.u32 %s104, 1
        %s622 = smul.addr %s621, 32
        %s623 = scalar_lea.vmem [#allocation7], %s622
        %p624 = pneg %p117
        %p625 = pneg %p114
        %p626 = pneg %p138
        %p627 = pneg %p135
        %p628 = pneg %p159
        %p629 = pneg %p156
        %p630 = pneg %p180
        %p631 = pneg %p177
        %p632 = pneg %p201
        %p633 = pneg %p198
        %p634 = pneg %p222
        %p635 = pneg %p219
        %p636 = pneg %p243
        %p637 = pneg %p240
        %p638 = pneg %p264
        %p639 = pneg %p261
        %p640 = pneg %p285
        %p641 = pneg %p282
        %p642 = pneg %p311
        %p643 = pneg %p308
        %s644 = sand.u32 %s298, 1
        %s645 = scalar_lea.sflag [#allocation4], %s644
        %s646 = sand.u32 %s298, 1
        %s647 = smul.addr %s646, 32
        %s648 = scalar_lea.vmem [#allocation14], %s647
        %p649 = pneg %p337
        %p650 = pneg %p334
        %s651 = sand.u32 %s44, 1
        %s652 = scalar_lea.sflag [#allocation16], %s651
        %s653 = sand.u32 %s324, 1
        %s654 = smul.addr %s653, 32
        %s655 = scalar_lea.vmem [#allocation15], %s654
        %p656 = pneg %p363
        %p657 = pneg %p360
        %s658 = sand.u32 %s44, 1
        %s659 = scalar_lea.sflag [#allocation16], %s658
        %s660 = sand.u32 %s350, 1
        %s661 = smul.addr %s660, 32
        %s662 = scalar_lea.vmem [#allocation17], %s661
        %p663 = pneg %p389
        %p664 = pneg %p386
        %s665 = sand.u32 %s44, 1
        %s666 = scalar_lea.sflag [#allocation19], %s665
        %s667 = sand.u32 %s376, 1
        %s668 = smul.addr %s667, 32
        %s669 = scalar_lea.vmem [#allocation18], %s668
        %p670 = pneg %p415
        %p671 = pneg %p412
        %s672 = sand.u32 %s44, 1
        %s673 = scalar_lea.sflag [#allocation19], %s672
        %s674 = sand.u32 %s402, 1
        %s675 = smul.addr %s674, 32
        %s676 = scalar_lea.vmem [#allocation20], %s675
        %v678 = vld [vmem:[%s566] sm:$0xff]
        %v679 = vld [vmem:[%s566 + $0x8] sm:$0xff]
        %v680 = vld [vmem:[%s566 + $0x10] sm:$0xff]
        %v681 = vld [vmem:[%s566 + $0x18] sm:$0xff]
        %v682 = vpack.c.bf16 %v678, %v678
        %v683 = vpack.c.bf16 %v679, %v679
        %v684 = vpack.c.bf16 %v680, %v680
        %v685 = vpack.c.bf16 %v681, %v681
        %v686 = vld [vmem:[%s575] sm:$0xff]
        %v687 = vld [vmem:[%s575 + $0x8] sm:$0xff]
        %v688 = vld [vmem:[%s575 + $0x10] sm:$0xff]
        %v689 = vld [vmem:[%s575 + $0x18] sm:$0xff]
        %v690 = vpack.c.bf16 %v686, %v686
        %v691 = vpack.c.bf16 %v687, %v687
        %v692 = vpack.c.bf16 %v688, %v688
        %v693 = vpack.c.bf16 %v689, %v689
        %v694 = vld [vmem:[%s584] sm:$0xff]
        %v695 = vld [vmem:[%s584 + $0x8] sm:$0xff]
        %v696 = vld [vmem:[%s584 + $0x10] sm:$0xff]
        %v697 = vld [vmem:[%s584 + $0x18] sm:$0xff]
        %v698 = vpack.c.bf16 %v694, %v694
        %v699 = vpack.c.bf16 %v695, %v695
        %v700 = vpack.c.bf16 %v696, %v696
        %v701 = vpack.c.bf16 %v697, %v697
        %v702 = vld [vmem:[#allocation8] sm:$0xff]
        %v703 = vld [vmem:[#allocation8 + $0x8] sm:$0xff]
        %v704 = vld [vmem:[#allocation8 + $0x10] sm:$0xff]
        %v705 = vld [vmem:[#allocation8 + $0x18] sm:$0xff]
        %v706 = vld [vmem:[#allocation8 + $0x20] sm:$0xff]
        %v707 = vld [vmem:[#allocation8 + $0x28] sm:$0xff]
        %v708 = vld [vmem:[#allocation8 + $0x30] sm:$0xff]
        %v709 = vld [vmem:[#allocation8 + $0x38] sm:$0xff]
        %v710 = vld [vmem:[#allocation8 + $0x40] sm:$0xff]
        %v711 = vld [vmem:[#allocation8 + $0x48] sm:$0xff]
        %v712 = vld [vmem:[#allocation8 + $0x50] sm:$0xff]
        %v713 = vld [vmem:[#allocation8 + $0x58] sm:$0xff]
        %v714 = vld [vmem:[#allocation8 + $0x60] sm:$0xff]
        %v715 = vld [vmem:[#allocation8 + $0x68] sm:$0xff]
        %v716 = vld [vmem:[#allocation8 + $0x70] sm:$0xff]
        %v717 = vld [vmem:[#allocation8 + $0x78] sm:$0xff]
        %v718 = vld [vmem:[#allocation8 + $0x80] sm:$0xff]
        %v719 = vld [vmem:[#allocation8 + $0x88] sm:$0xff]
        %v720 = vld [vmem:[#allocation8 + $0x90] sm:$0xff]
        %v721 = vld [vmem:[#allocation8 + $0x98] sm:$0xff]
        %v722 = vld [vmem:[#allocation8 + $0xa0] sm:$0xff]
        %v723 = vld [vmem:[#allocation8 + $0xa8] sm:$0xff]
        %v724 = vld [vmem:[#allocation8 + $0xb0] sm:$0xff]
        %v725 = vld [vmem:[#allocation8 + $0xb8] sm:$0xff]
        %v726 = vld [vmem:[#allocation8 + $0xc0] sm:$0xff]
        %v727 = vld [vmem:[#allocation8 + $0xc8] sm:$0xff]
        %v728 = vld [vmem:[#allocation8 + $0xd0] sm:$0xff]
        %v729 = vld [vmem:[#allocation8 + $0xd8] sm:$0xff]
        %v730 = vld [vmem:[#allocation8 + $0xe0] sm:$0xff]
        %v731 = vld [vmem:[#allocation8 + $0xe8] sm:$0xff]
        %v732 = vld [vmem:[#allocation8 + $0xf0] sm:$0xff]
        %v733 = vld [vmem:[#allocation8 + $0xf8] sm:$0xff]
        %v734 = vld [vmem:[#allocation8 + $0x100] sm:$0xff]
        %v735 = vld [vmem:[#allocation8 + $0x108] sm:$0xff]
        %v736 = vld [vmem:[#allocation8 + $0x110] sm:$0xff]
        %v737 = vld [vmem:[#allocation8 + $0x118] sm:$0xff]
        %v738 = vld [vmem:[#allocation8 + $0x120] sm:$0xff]
        %v739 = vld [vmem:[#allocation8 + $0x128] sm:$0xff]
        %v740 = vld [vmem:[#allocation8 + $0x130] sm:$0xff]
        %v741 = vld [vmem:[#allocation8 + $0x138] sm:$0xff]
        %v742 = vld [vmem:[#allocation8 + $0x140] sm:$0xff]
        %v743 = vld [vmem:[#allocation8 + $0x148] sm:$0xff]
        %v744 = vld [vmem:[#allocation8 + $0x150] sm:$0xff]
        %v745 = vld [vmem:[#allocation8 + $0x158] sm:$0xff]
        %v746 = vld [vmem:[#allocation8 + $0x160] sm:$0xff]
        %v747 = vld [vmem:[#allocation8 + $0x168] sm:$0xff]
        %v748 = vld [vmem:[#allocation8 + $0x170] sm:$0xff]
        %v749 = vld [vmem:[#allocation8 + $0x178] sm:$0xff]
        %v750 = vld [vmem:[#allocation8 + $0x180] sm:$0xff]
        %v751 = vld [vmem:[#allocation8 + $0x188] sm:$0xff]
        %v752 = vld [vmem:[#allocation8 + $0x190] sm:$0xff]
        %v753 = vld [vmem:[#allocation8 + $0x198] sm:$0xff]
        %v754 = vld [vmem:[#allocation8 + $0x1a0] sm:$0xff]
        %v755 = vld [vmem:[#allocation8 + $0x1a8] sm:$0xff]
        %v756 = vld [vmem:[#allocation8 + $0x1b0] sm:$0xff]
        %v757 = vld [vmem:[#allocation8 + $0x1b8] sm:$0xff]
        %v758 = vld [vmem:[#allocation8 + $0x1c0] sm:$0xff]
        %v759 = vld [vmem:[#allocation8 + $0x1c8] sm:$0xff]
        %v760 = vld [vmem:[#allocation8 + $0x1d0] sm:$0xff]
        %v761 = vld [vmem:[#allocation8 + $0x1d8] sm:$0xff]
        %v762 = vld [vmem:[#allocation8 + $0x1e0] sm:$0xff]
        %v763 = vld [vmem:[#allocation8 + $0x1e8] sm:$0xff]
        %v764 = vld [vmem:[#allocation8 + $0x1f0] sm:$0xff]
        %v765 = vld [vmem:[#allocation8 + $0x1f8] sm:$0xff]
        %v766 = vld [vmem:[#allocation8 + $0x200] sm:$0xff]
        %v767 = vld [vmem:[#allocation8 + $0x208] sm:$0xff]
        %v768 = vld [vmem:[#allocation8 + $0x210] sm:$0xff]
        %v769 = vld [vmem:[#allocation8 + $0x218] sm:$0xff]
        %v770 = vld [vmem:[#allocation8 + $0x220] sm:$0xff]
        %v771 = vld [vmem:[#allocation8 + $0x228] sm:$0xff]
        %v772 = vld [vmem:[#allocation8 + $0x230] sm:$0xff]
        %v773 = vld [vmem:[#allocation8 + $0x238] sm:$0xff]
        %v774 = vld [vmem:[#allocation8 + $0x240] sm:$0xff]
        %v775 = vld [vmem:[#allocation8 + $0x248] sm:$0xff]
        %v776 = vld [vmem:[#allocation8 + $0x250] sm:$0xff]
        %v777 = vld [vmem:[#allocation8 + $0x258] sm:$0xff]
        %v778 = vld [vmem:[#allocation8 + $0x260] sm:$0xff]
        %v779 = vld [vmem:[#allocation8 + $0x268] sm:$0xff]
        %v780 = vld [vmem:[#allocation8 + $0x270] sm:$0xff]
        %v781 = vld [vmem:[#allocation8 + $0x278] sm:$0xff]
        %v782 = vld [vmem:[#allocation8 + $0x280] sm:$0xff]
        %v783 = vld [vmem:[#allocation8 + $0x288] sm:$0xff]
        %v784 = vld [vmem:[#allocation8 + $0x290] sm:$0xff]
        %v785 = vld [vmem:[#allocation8 + $0x298] sm:$0xff]
        %v786 = vld [vmem:[#allocation8 + $0x2a0] sm:$0xff]
        %v787 = vld [vmem:[#allocation8 + $0x2a8] sm:$0xff]
        %v788 = vld [vmem:[#allocation8 + $0x2b0] sm:$0xff]
        %v789 = vld [vmem:[#allocation8 + $0x2b8] sm:$0xff]
        %v790 = vld [vmem:[#allocation8 + $0x2c0] sm:$0xff]
        %v791 = vld [vmem:[#allocation8 + $0x2c8] sm:$0xff]
        %v792 = vld [vmem:[#allocation8 + $0x2d0] sm:$0xff]
        %v793 = vld [vmem:[#allocation8 + $0x2d8] sm:$0xff]
        %v794 = vld [vmem:[#allocation8 + $0x2e0] sm:$0xff]
        %v795 = vld [vmem:[#allocation8 + $0x2e8] sm:$0xff]
        %v796 = vld [vmem:[#allocation8 + $0x2f0] sm:$0xff]
        %v797 = vld [vmem:[#allocation8 + $0x2f8] sm:$0xff]
        %v798 = vld [vmem:[#allocation8 + $0x300] sm:$0xff]
        %v799 = vld [vmem:[#allocation8 + $0x308] sm:$0xff]
        %v800 = vld [vmem:[#allocation8 + $0x310] sm:$0xff]
        %v801 = vld [vmem:[#allocation8 + $0x318] sm:$0xff]
        %v802 = vld [vmem:[#allocation8 + $0x320] sm:$0xff]
        %v803 = vld [vmem:[#allocation8 + $0x328] sm:$0xff]
        %v804 = vld [vmem:[#allocation8 + $0x330] sm:$0xff]
        %v805 = vld [vmem:[#allocation8 + $0x338] sm:$0xff]
        %v806 = vld [vmem:[#allocation8 + $0x340] sm:$0xff]
        %v807 = vld [vmem:[#allocation8 + $0x348] sm:$0xff]
        %v808 = vld [vmem:[#allocation8 + $0x350] sm:$0xff]
        %v809 = vld [vmem:[#allocation8 + $0x358] sm:$0xff]
        %v810 = vld [vmem:[#allocation8 + $0x360] sm:$0xff]
        %v811 = vld [vmem:[#allocation8 + $0x368] sm:$0xff]
        %v812 = vld [vmem:[#allocation8 + $0x370] sm:$0xff]
        %v813 = vld [vmem:[#allocation8 + $0x378] sm:$0xff]
        %v814 = vld [vmem:[#allocation8 + $0x380] sm:$0xff]
        %v815 = vld [vmem:[#allocation8 + $0x388] sm:$0xff]
        %v816 = vld [vmem:[#allocation8 + $0x390] sm:$0xff]
        %v817 = vld [vmem:[#allocation8 + $0x398] sm:$0xff]
        %v818 = vld [vmem:[#allocation8 + $0x3a0] sm:$0xff]
        %v819 = vld [vmem:[#allocation8 + $0x3a8] sm:$0xff]
        %v820 = vld [vmem:[#allocation8 + $0x3b0] sm:$0xff]
        %v821 = vld [vmem:[#allocation8 + $0x3b8] sm:$0xff]
        %v822 = vld [vmem:[#allocation8 + $0x3c0] sm:$0xff]
        %v823 = vld [vmem:[#allocation8 + $0x3c8] sm:$0xff]
        %v824 = vld [vmem:[#allocation8 + $0x3d0] sm:$0xff]
        %v825 = vld [vmem:[#allocation8 + $0x3d8] sm:$0xff]
        %v826 = vld [vmem:[#allocation8 + $0x3e0] sm:$0xff]
        %v827 = vld [vmem:[#allocation8 + $0x3e8] sm:$0xff]
        %v828 = vld [vmem:[#allocation8 + $0x3f0] sm:$0xff]
        %v829 = vld [vmem:[#allocation8 + $0x3f8] sm:$0xff]
        %v830 = vld [vmem:[%s7] sm:$0xf]
        %v832 = vlaneseq
        %v833 = vshrl.u32 %v832, 7
        %v834 = vsub.s32 0, %v833
        %v835 = vrot.slane %v830, %v834
        %v836 = vlaneseq
        %v837 = vshrl.u32 %v836, 7
        %v838 = vsub.s32 1, %v837
        %v839 = vrot.slane %v830, %v838
        %v840 = vlaneseq
        %v841 = vshrl.u32 %v840, 7
        %v842 = vsub.s32 2, %v841
        %v843 = vrot.slane %v830, %v842
        %v844 = vlaneseq
        %v845 = vshrl.u32 %v844, 7
        %v846 = vsub.s32 3, %v845
        %v847 = vrot.slane %v830, %v846
        %v980 = vunpack.c.l.b16 %v702
        %v981 = vunpack.c.h.b16 %v702
        %v982 = vunpack.c.l.b16 %v703
        %v983 = vunpack.c.h.b16 %v703
        %v984 = vunpack.c.l.b16 %v704
        %v985 = vunpack.c.h.b16 %v704
        %v986 = vunpack.c.l.b16 %v705
        %v987 = vunpack.c.h.b16 %v705
        %v988 = vunpack.c.l.b16 %v706
        %v989 = vunpack.c.h.b16 %v706
        %v990 = vunpack.c.l.b16 %v707
        %v991 = vunpack.c.h.b16 %v707
        %v992 = vunpack.c.l.b16 %v708
        %v993 = vunpack.c.h.b16 %v708
        %v994 = vunpack.c.l.b16 %v709
        %v995 = vunpack.c.h.b16 %v709
        %v996 = vunpack.c.l.b16 %v710
        %v997 = vunpack.c.h.b16 %v710
        %v998 = vunpack.c.l.b16 %v711
        %v999 = vunpack.c.h.b16 %v711
        %v1000 = vunpack.c.l.b16 %v712
        %v1001 = vunpack.c.h.b16 %v712
        %v1002 = vunpack.c.l.b16 %v713
        %v1003 = vunpack.c.h.b16 %v713
        %v1004 = vunpack.c.l.b16 %v714
        %v1005 = vunpack.c.h.b16 %v714
        %v1006 = vunpack.c.l.b16 %v715
        %v1007 = vunpack.c.h.b16 %v715
        %v1008 = vunpack.c.l.b16 %v716
        %v1009 = vunpack.c.h.b16 %v716
        %v1010 = vunpack.c.l.b16 %v717
        %v1011 = vunpack.c.h.b16 %v717
        %v1012 = vunpack.c.l.b16 %v718
        %v1013 = vunpack.c.h.b16 %v718
        %v1014 = vunpack.c.l.b16 %v719
        %v1015 = vunpack.c.h.b16 %v719
        %v1016 = vunpack.c.l.b16 %v720
        %v1017 = vunpack.c.h.b16 %v720
        %v1018 = vunpack.c.l.b16 %v721
        %v1019 = vunpack.c.h.b16 %v721
        %v1020 = vunpack.c.l.b16 %v722
        %v1021 = vunpack.c.h.b16 %v722
        %v1022 = vunpack.c.l.b16 %v723
        %v1023 = vunpack.c.h.b16 %v723
        %v1024 = vunpack.c.l.b16 %v724
        %v1025 = vunpack.c.h.b16 %v724
        %v1026 = vunpack.c.l.b16 %v725
        %v1027 = vunpack.c.h.b16 %v725
        %v1028 = vunpack.c.l.b16 %v726
        %v1029 = vunpack.c.h.b16 %v726
        %v1030 = vunpack.c.l.b16 %v727
        %v1031 = vunpack.c.h.b16 %v727
        %v1032 = vunpack.c.l.b16 %v728
        %v1033 = vunpack.c.h.b16 %v728
        %v1034 = vunpack.c.l.b16 %v729
        %v1035 = vunpack.c.h.b16 %v729
        %v1036 = vunpack.c.l.b16 %v730
        %v1037 = vunpack.c.h.b16 %v730
        %v1038 = vunpack.c.l.b16 %v731
        %v1039 = vunpack.c.h.b16 %v731
        %v1040 = vunpack.c.l.b16 %v732
        %v1041 = vunpack.c.h.b16 %v732
        %v1042 = vunpack.c.l.b16 %v733
        %v1043 = vunpack.c.h.b16 %v733
        %v1044 = vunpack.c.l.b16 %v734
        %v1045 = vunpack.c.h.b16 %v734
        %v1046 = vunpack.c.l.b16 %v735
        %v1047 = vunpack.c.h.b16 %v735
        %v1048 = vunpack.c.l.b16 %v736
        %v1049 = vunpack.c.h.b16 %v736
        %v1050 = vunpack.c.l.b16 %v737
        %v1051 = vunpack.c.h.b16 %v737
        %v1052 = vunpack.c.l.b16 %v738
        %v1053 = vunpack.c.h.b16 %v738
        %v1054 = vunpack.c.l.b16 %v739
        %v1055 = vunpack.c.h.b16 %v739
        %v1056 = vunpack.c.l.b16 %v740
        %v1057 = vunpack.c.h.b16 %v740
        %v1058 = vunpack.c.l.b16 %v741
        %v1059 = vunpack.c.h.b16 %v741
        %v1060 = vunpack.c.l.b16 %v742
        %v1061 = vunpack.c.h.b16 %v742
        %v1062 = vunpack.c.l.b16 %v743
        %v1063 = vunpack.c.h.b16 %v743
        %v1064 = vunpack.c.l.b16 %v744
        %v1065 = vunpack.c.h.b16 %v744
        %v1066 = vunpack.c.l.b16 %v745
        %v1067 = vunpack.c.h.b16 %v745
        %v1068 = vunpack.c.l.b16 %v746
        %v1069 = vunpack.c.h.b16 %v746
        %v1070 = vunpack.c.l.b16 %v747
        %v1071 = vunpack.c.h.b16 %v747
        %v1072 = vunpack.c.l.b16 %v748
        %v1073 = vunpack.c.h.b16 %v748
        %v1074 = vunpack.c.l.b16 %v749
        %v1075 = vunpack.c.h.b16 %v749
        %v1076 = vunpack.c.l.b16 %v750
        %v1077 = vunpack.c.h.b16 %v750
        %v1078 = vunpack.c.l.b16 %v751
        %v1079 = vunpack.c.h.b16 %v751
        %v1080 = vunpack.c.l.b16 %v752
        %v1081 = vunpack.c.h.b16 %v752
        %v1082 = vunpack.c.l.b16 %v753
        %v1083 = vunpack.c.h.b16 %v753
        %v1084 = vunpack.c.l.b16 %v754
        %v1085 = vunpack.c.h.b16 %v754
        %v1086 = vunpack.c.l.b16 %v755
        %v1087 = vunpack.c.h.b16 %v755
        %v1088 = vunpack.c.l.b16 %v756
        %v1089 = vunpack.c.h.b16 %v756
        %v1090 = vunpack.c.l.b16 %v757
        %v1091 = vunpack.c.h.b16 %v757
        %v1092 = vunpack.c.l.b16 %v758
        %v1093 = vunpack.c.h.b16 %v758
        %v1094 = vunpack.c.l.b16 %v759
        %v1095 = vunpack.c.h.b16 %v759
        %v1096 = vunpack.c.l.b16 %v760
        %v1097 = vunpack.c.h.b16 %v760
        %v1098 = vunpack.c.l.b16 %v761
        %v1099 = vunpack.c.h.b16 %v761
        %v1100 = vunpack.c.l.b16 %v762
        %v1101 = vunpack.c.h.b16 %v762
        %v1102 = vunpack.c.l.b16 %v763
        %v1103 = vunpack.c.h.b16 %v763
        %v1104 = vunpack.c.l.b16 %v764
        %v1105 = vunpack.c.h.b16 %v764
        %v1106 = vunpack.c.l.b16 %v765
        %v1107 = vunpack.c.h.b16 %v765
        %v1108 = vunpack.c.l.b16 %v766
        %v1109 = vunpack.c.h.b16 %v766
        %v1110 = vunpack.c.l.b16 %v767
        %v1111 = vunpack.c.h.b16 %v767
        %v1112 = vunpack.c.l.b16 %v768
        %v1113 = vunpack.c.h.b16 %v768
        %v1114 = vunpack.c.l.b16 %v769
        %v1115 = vunpack.c.h.b16 %v769
        %v1116 = vunpack.c.l.b16 %v770
        %v1117 = vunpack.c.h.b16 %v770
        %v1118 = vunpack.c.l.b16 %v771
        %v1119 = vunpack.c.h.b16 %v771
        %v1120 = vunpack.c.l.b16 %v772
        %v1121 = vunpack.c.h.b16 %v772
        %v1122 = vunpack.c.l.b16 %v773
        %v1123 = vunpack.c.h.b16 %v773
        %v1124 = vunpack.c.l.b16 %v774
        %v1125 = vunpack.c.h.b16 %v774
        %v1126 = vunpack.c.l.b16 %v775
        %v1127 = vunpack.c.h.b16 %v775
        %v1128 = vunpack.c.l.b16 %v776
        %v1129 = vunpack.c.h.b16 %v776
        %v1130 = vunpack.c.l.b16 %v777
        %v1131 = vunpack.c.h.b16 %v777
        %v1132 = vunpack.c.l.b16 %v778
        %v1133 = vunpack.c.h.b16 %v778
        %v1134 = vunpack.c.l.b16 %v779
        %v1135 = vunpack.c.h.b16 %v779
        %v1136 = vunpack.c.l.b16 %v780
        %v1137 = vunpack.c.h.b16 %v780
        %v1138 = vunpack.c.l.b16 %v781
        %v1139 = vunpack.c.h.b16 %v781
        %v1140 = vunpack.c.l.b16 %v782
        %v1141 = vunpack.c.h.b16 %v782
        %v1142 = vunpack.c.l.b16 %v783
        %v1143 = vunpack.c.h.b16 %v783
        %v1144 = vunpack.c.l.b16 %v784
        %v1145 = vunpack.c.h.b16 %v784
        %v1146 = vunpack.c.l.b16 %v785
        %v1147 = vunpack.c.h.b16 %v785
        %v1148 = vunpack.c.l.b16 %v786
        %v1149 = vunpack.c.h.b16 %v786
        %v1150 = vunpack.c.l.b16 %v787
        %v1151 = vunpack.c.h.b16 %v787
        %v1152 = vunpack.c.l.b16 %v788
        %v1153 = vunpack.c.h.b16 %v788
        %v1154 = vunpack.c.l.b16 %v789
        %v1155 = vunpack.c.h.b16 %v789
        %v1156 = vunpack.c.l.b16 %v790
        %v1157 = vunpack.c.h.b16 %v790
        %v1158 = vunpack.c.l.b16 %v791
        %v1159 = vunpack.c.h.b16 %v791
        %v1160 = vunpack.c.l.b16 %v792
        %v1161 = vunpack.c.h.b16 %v792
        %v1162 = vunpack.c.l.b16 %v793
        %v1163 = vunpack.c.h.b16 %v793
        %v1164 = vunpack.c.l.b16 %v794
        %v1165 = vunpack.c.h.b16 %v794
        %v1166 = vunpack.c.l.b16 %v795
        %v1167 = vunpack.c.h.b16 %v795
        %v1168 = vunpack.c.l.b16 %v796
        %v1169 = vunpack.c.h.b16 %v796
        %v1170 = vunpack.c.l.b16 %v797
        %v1171 = vunpack.c.h.b16 %v797
        %v1172 = vunpack.c.l.b16 %v798
        %v1173 = vunpack.c.h.b16 %v798
        %v1174 = vunpack.c.l.b16 %v799
        %v1175 = vunpack.c.h.b16 %v799
        %v1176 = vunpack.c.l.b16 %v800
        %v1177 = vunpack.c.h.b16 %v800
        %v1178 = vunpack.c.l.b16 %v801
        %v1179 = vunpack.c.h.b16 %v801
        %v1180 = vunpack.c.l.b16 %v802
        %v1181 = vunpack.c.h.b16 %v802
        %v1182 = vunpack.c.l.b16 %v803
        %v1183 = vunpack.c.h.b16 %v803
        %v1184 = vunpack.c.l.b16 %v804
        %v1185 = vunpack.c.h.b16 %v804
        %v1186 = vunpack.c.l.b16 %v805
        %v1187 = vunpack.c.h.b16 %v805
        %v1188 = vunpack.c.l.b16 %v806
        %v1189 = vunpack.c.h.b16 %v806
        %v1190 = vunpack.c.l.b16 %v807
        %v1191 = vunpack.c.h.b16 %v807
        %v1192 = vunpack.c.l.b16 %v808
        %v1193 = vunpack.c.h.b16 %v808
        %v1194 = vunpack.c.l.b16 %v809
        %v1195 = vunpack.c.h.b16 %v809
        %v1196 = vunpack.c.l.b16 %v810
        %v1197 = vunpack.c.h.b16 %v810
        %v1198 = vunpack.c.l.b16 %v811
        %v1199 = vunpack.c.h.b16 %v811
        %v1200 = vunpack.c.l.b16 %v812
        %v1201 = vunpack.c.h.b16 %v812
        %v1202 = vunpack.c.l.b16 %v813
        %v1203 = vunpack.c.h.b16 %v813
        %v1204 = vunpack.c.l.b16 %v814
        %v1205 = vunpack.c.h.b16 %v814
        %v1206 = vunpack.c.l.b16 %v815
        %v1207 = vunpack.c.h.b16 %v815
        %v1208 = vunpack.c.l.b16 %v816
        %v1209 = vunpack.c.h.b16 %v816
        %v1210 = vunpack.c.l.b16 %v817
        %v1211 = vunpack.c.h.b16 %v817
        %v1212 = vunpack.c.l.b16 %v818
        %v1213 = vunpack.c.h.b16 %v818
        %v1214 = vunpack.c.l.b16 %v819
        %v1215 = vunpack.c.h.b16 %v819
        %v1216 = vunpack.c.l.b16 %v820
        %v1217 = vunpack.c.h.b16 %v820
        %v1218 = vunpack.c.l.b16 %v821
        %v1219 = vunpack.c.h.b16 %v821
        %v1220 = vunpack.c.l.b16 %v822
        %v1221 = vunpack.c.h.b16 %v822
        %v1222 = vunpack.c.l.b16 %v823
        %v1223 = vunpack.c.h.b16 %v823
        %v1224 = vunpack.c.l.b16 %v824
        %v1225 = vunpack.c.h.b16 %v824
        %v1226 = vunpack.c.l.b16 %v825
        %v1227 = vunpack.c.h.b16 %v825
        %v1228 = vunpack.c.l.b16 %v826
        %v1229 = vunpack.c.h.b16 %v826
        %v1230 = vunpack.c.l.b16 %v827
        %v1231 = vunpack.c.h.b16 %v827
        %v1232 = vunpack.c.l.b16 %v828
        %v1233 = vunpack.c.h.b16 %v828
        %v1234 = vunpack.c.l.b16 %v829
        %v1235 = vunpack.c.h.b16 %v829
        %v1236 = vpack.c.b16 %v984, %v980
        %v1237 = vpack.c.b16 %v985, %v981
        %v1238 = vpack.c.b16 %v986, %v982
        %v1239 = vpack.c.b16 %v987, %v983
        %v1240 = vpack.c.b16 %v992, %v988
        %v1241 = vpack.c.b16 %v993, %v989
        %v1242 = vpack.c.b16 %v994, %v990
        %v1243 = vpack.c.b16 %v995, %v991
        %v1244 = vpack.c.b16 %v1000, %v996
        %v1245 = vpack.c.b16 %v1001, %v997
        %v1246 = vpack.c.b16 %v1002, %v998
        %v1247 = vpack.c.b16 %v1003, %v999
        %v1248 = vpack.c.b16 %v1008, %v1004
        %v1249 = vpack.c.b16 %v1009, %v1005
        %v1250 = vpack.c.b16 %v1010, %v1006
        %v1251 = vpack.c.b16 %v1011, %v1007
        %v1252 = vpack.c.b16 %v1016, %v1012
        %v1253 = vpack.c.b16 %v1017, %v1013
        %v1254 = vpack.c.b16 %v1018, %v1014
        %v1255 = vpack.c.b16 %v1019, %v1015
        %v1256 = vpack.c.b16 %v1024, %v1020
        %v1257 = vpack.c.b16 %v1025, %v1021
        %v1258 = vpack.c.b16 %v1026, %v1022
        %v1259 = vpack.c.b16 %v1027, %v1023
        %v1260 = vpack.c.b16 %v1032, %v1028
        %v1261 = vpack.c.b16 %v1033, %v1029
        %v1262 = vpack.c.b16 %v1034, %v1030
        %v1263 = vpack.c.b16 %v1035, %v1031
        %v1264 = vpack.c.b16 %v1040, %v1036
        %v1265 = vpack.c.b16 %v1041, %v1037
        %v1266 = vpack.c.b16 %v1042, %v1038
        %v1267 = vpack.c.b16 %v1043, %v1039
        %v1268 = vpack.c.b16 %v1048, %v1044
        %v1269 = vpack.c.b16 %v1049, %v1045
        %v1270 = vpack.c.b16 %v1050, %v1046
        %v1271 = vpack.c.b16 %v1051, %v1047
        %v1272 = vpack.c.b16 %v1056, %v1052
        %v1273 = vpack.c.b16 %v1057, %v1053
        %v1274 = vpack.c.b16 %v1058, %v1054
        %v1275 = vpack.c.b16 %v1059, %v1055
        %v1276 = vpack.c.b16 %v1064, %v1060
        %v1277 = vpack.c.b16 %v1065, %v1061
        %v1278 = vpack.c.b16 %v1066, %v1062
        %v1279 = vpack.c.b16 %v1067, %v1063
        %v1280 = vpack.c.b16 %v1072, %v1068
        %v1281 = vpack.c.b16 %v1073, %v1069
        %v1282 = vpack.c.b16 %v1074, %v1070
        %v1283 = vpack.c.b16 %v1075, %v1071
        %v1284 = vpack.c.b16 %v1080, %v1076
        %v1285 = vpack.c.b16 %v1081, %v1077
        %v1286 = vpack.c.b16 %v1082, %v1078
        %v1287 = vpack.c.b16 %v1083, %v1079
        %v1288 = vpack.c.b16 %v1088, %v1084
        %v1289 = vpack.c.b16 %v1089, %v1085
        %v1290 = vpack.c.b16 %v1090, %v1086
        %v1291 = vpack.c.b16 %v1091, %v1087
        %v1292 = vpack.c.b16 %v1096, %v1092
        %v1293 = vpack.c.b16 %v1097, %v1093
        %v1294 = vpack.c.b16 %v1098, %v1094
        %v1295 = vpack.c.b16 %v1099, %v1095
        %v1296 = vpack.c.b16 %v1104, %v1100
        %v1297 = vpack.c.b16 %v1105, %v1101
        %v1298 = vpack.c.b16 %v1106, %v1102
        %v1299 = vpack.c.b16 %v1107, %v1103
        %v1300 = vpack.c.b16 %v1112, %v1108
        %v1301 = vpack.c.b16 %v1113, %v1109
        %v1302 = vpack.c.b16 %v1114, %v1110
        %v1303 = vpack.c.b16 %v1115, %v1111
        %v1304 = vpack.c.b16 %v1120, %v1116
        %v1305 = vpack.c.b16 %v1121, %v1117
        %v1306 = vpack.c.b16 %v1122, %v1118
        %v1307 = vpack.c.b16 %v1123, %v1119
        %v1308 = vpack.c.b16 %v1128, %v1124
        %v1309 = vpack.c.b16 %v1129, %v1125
        %v1310 = vpack.c.b16 %v1130, %v1126
        %v1311 = vpack.c.b16 %v1131, %v1127
        %v1312 = vpack.c.b16 %v1136, %v1132
        %v1313 = vpack.c.b16 %v1137, %v1133
        %v1314 = vpack.c.b16 %v1138, %v1134
        %v1315 = vpack.c.b16 %v1139, %v1135
        %v1316 = vpack.c.b16 %v1144, %v1140
        %v1317 = vpack.c.b16 %v1145, %v1141
        %v1318 = vpack.c.b16 %v1146, %v1142
        %v1319 = vpack.c.b16 %v1147, %v1143
        %v1320 = vpack.c.b16 %v1152, %v1148
        %v1321 = vpack.c.b16 %v1153, %v1149
        %v1322 = vpack.c.b16 %v1154, %v1150
        %v1323 = vpack.c.b16 %v1155, %v1151
        %v1324 = vpack.c.b16 %v1160, %v1156
        %v1325 = vpack.c.b16 %v1161, %v1157
        %v1326 = vpack.c.b16 %v1162, %v1158
        %v1327 = vpack.c.b16 %v1163, %v1159
        %v1328 = vpack.c.b16 %v1168, %v1164
        %v1329 = vpack.c.b16 %v1169, %v1165
        %v1330 = vpack.c.b16 %v1170, %v1166
        %v1331 = vpack.c.b16 %v1171, %v1167
        %v1332 = vpack.c.b16 %v1176, %v1172
        %v1333 = vpack.c.b16 %v1177, %v1173
        %v1334 = vpack.c.b16 %v1178, %v1174
        %v1335 = vpack.c.b16 %v1179, %v1175
        %v1336 = vpack.c.b16 %v1184, %v1180
        %v1337 = vpack.c.b16 %v1185, %v1181
        %v1338 = vpack.c.b16 %v1186, %v1182
        %v1339 = vpack.c.b16 %v1187, %v1183
        %v1340 = vpack.c.b16 %v1192, %v1188
        %v1341 = vpack.c.b16 %v1193, %v1189
        %v1342 = vpack.c.b16 %v1194, %v1190
        %v1343 = vpack.c.b16 %v1195, %v1191
        %v1344 = vpack.c.b16 %v1200, %v1196
        %v1345 = vpack.c.b16 %v1201, %v1197
        %v1346 = vpack.c.b16 %v1202, %v1198
        %v1347 = vpack.c.b16 %v1203, %v1199
        %v1348 = vpack.c.b16 %v1208, %v1204
        %v1349 = vpack.c.b16 %v1209, %v1205
        %v1350 = vpack.c.b16 %v1210, %v1206
        %v1351 = vpack.c.b16 %v1211, %v1207
        %v1352 = vpack.c.b16 %v1216, %v1212
        %v1353 = vpack.c.b16 %v1217, %v1213
        %v1354 = vpack.c.b16 %v1218, %v1214
        %v1355 = vpack.c.b16 %v1219, %v1215
        %v1356 = vpack.c.b16 %v1224, %v1220
        %v1357 = vpack.c.b16 %v1225, %v1221
        %v1358 = vpack.c.b16 %v1226, %v1222
        %v1359 = vpack.c.b16 %v1227, %v1223
        %v1360 = vpack.c.b16 %v1232, %v1228
        %v1361 = vpack.c.b16 %v1233, %v1229
        %v1362 = vpack.c.b16 %v1234, %v1230
        %v1363 = vpack.c.b16 %v1235, %v1231
        %1492 = vmatprep.subr.bf16.mxu0 %v1237
        %1493 = vmatpush1.bf16.msra.mxu0 %v1236
        %1494 = vmatprep.subr.bf16.mxu0 %v1241
        %1495 = vmatpush1.bf16.msra.mxu0 %v1240
        %1496 = vmatprep.subr.bf16.mxu0 %v1245
        %1497 = vmatpush1.bf16.msra.mxu0 %v1244
        %1498 = vmatprep.subr.bf16.mxu0 %v1249
        %1499 = vmatpush1.bf16.msra.mxu0 %v1248
        %1500 = vmatprep.subr.bf16.mxu0 %v1253
        %1501 = vmatpush1.bf16.msra.mxu0 %v1252
        %1502 = vmatprep.subr.bf16.mxu0 %v1257
        %1503 = vmatpush1.bf16.msra.mxu0 %v1256
        %1504 = vmatprep.subr.bf16.mxu0 %v1261
        %1505 = vmatpush1.bf16.msra.mxu0 %v1260
        %1506 = vmatprep.subr.bf16.mxu0 %v1265
        %1507 = vmatpush1.bf16.msra.mxu0 %v1264
        %1508 = vmatprep.subr.bf16.mxu0 %v1269
        %1509 = vmatpush1.bf16.msra.mxu0 %v1268
        %1510 = vmatprep.subr.bf16.mxu0 %v1273
        %1511 = vmatpush1.bf16.msra.mxu0 %v1272
        %1512 = vmatprep.subr.bf16.mxu0 %v1277
        %1513 = vmatpush1.bf16.msra.mxu0 %v1276
        %1514 = vmatprep.subr.bf16.mxu0 %v1281
        %1515 = vmatpush1.bf16.msra.mxu0 %v1280
        %1516 = vmatprep.subr.bf16.mxu0 %v1285
        %1517 = vmatpush1.bf16.msra.mxu0 %v1284
        %1518 = vmatprep.subr.bf16.mxu0 %v1289
        %1519 = vmatpush1.bf16.msra.mxu0 %v1288
        %1520 = vmatprep.subr.bf16.mxu0 %v1293
        %1521 = vmatpush1.bf16.msra.mxu0 %v1292
        %1522 = vmatprep.subr.bf16.mxu0 %v1297
        %1523 = vmatpush1.bf16.msra.mxu0 %v1296
        %1524 = vmatprep.mubr.bf16.mxu0 %v683
        %1525 = vmatmul.mubr.bf16.gmra.mrb[0].mxu0 %v682
        %v1526 = vpop.f32.mrb[0].mxu0
        %v1527 = vadd.f32 %v835, %v1526
        %v1528 = vpop.f32.mrb[0].mxu0
        %v1529 = vadd.f32 %v839, %v1528
        %v1530 = vpop.f32.mrb[0].mxu0
        %v1531 = vpop.f32.mrb[0].mxu0
        %1532 = vdwg.mxu0
        %1533 = vmatprep.subr.bf16.mxu0 %v1301
        %1534 = vmatpush1.bf16.msra.mxu0 %v1300
        %1535 = vmatprep.subr.bf16.mxu0 %v1305
        %1536 = vmatpush1.bf16.msra.mxu0 %v1304
        %1537 = vmatprep.subr.bf16.mxu0 %v1309
        %1538 = vmatpush1.bf16.msra.mxu0 %v1308
        %1539 = vmatprep.subr.bf16.mxu0 %v1313
        %1540 = vmatpush1.bf16.msra.mxu0 %v1312
        %1541 = vmatprep.subr.bf16.mxu0 %v1317
        %1542 = vmatpush1.bf16.msra.mxu0 %v1316
        %1543 = vmatprep.subr.bf16.mxu0 %v1321
        %1544 = vmatpush1.bf16.msra.mxu0 %v1320
        %1545 = vmatprep.subr.bf16.mxu0 %v1325
        %1546 = vmatpush1.bf16.msra.mxu0 %v1324
        %1547 = vmatprep.subr.bf16.mxu0 %v1329
        %1548 = vmatpush1.bf16.msra.mxu0 %v1328
        %1549 = vmatprep.subr.bf16.mxu0 %v1333
        %1550 = vmatpush1.bf16.msra.mxu0 %v1332
        %1551 = vmatprep.subr.bf16.mxu0 %v1337
        %1552 = vmatpush1.bf16.msra.mxu0 %v1336
        %1553 = vmatprep.subr.bf16.mxu0 %v1341
        %1554 = vmatpush1.bf16.msra.mxu0 %v1340
        %1555 = vmatprep.subr.bf16.mxu0 %v1345
        %1556 = vmatpush1.bf16.msra.mxu0 %v1344
        %1557 = vmatprep.subr.bf16.mxu0 %v1349
        %1558 = vmatpush1.bf16.msra.mxu0 %v1348
        %1559 = vmatprep.subr.bf16.mxu0 %v1353
        %1560 = vmatpush1.bf16.msra.mxu0 %v1352
        %1561 = vmatprep.subr.bf16.mxu0 %v1357
        %1562 = vmatpush1.bf16.msra.mxu0 %v1356
        %1563 = vmatprep.subr.bf16.mxu0 %v1361
        %1564 = vmatpush1.bf16.msra.mxu0 %v1360
        %1565 = vmatprep.mubr.bf16.mxu0 %v685
        %1566 = vmatmul.mubr.bf16.gmra.mrb[0].mxu0 %v684
        %v1567 = vpop.f32.mrb[0].mxu0
        %v1568 = vadd.f32 %v1527, %v1567
        %v1569 = vpop.f32.mrb[0].mxu0
        %v1570 = vadd.f32 %v1529, %v1569
        %v1571 = vpop.f32.mrb[0].mxu0
        %v1572 = vpop.f32.mrb[0].mxu0
        %1573 = vdwg.mxu0
        %1574 = vmatprep.subr.bf16.mxu0 %v1239
        %1575 = vmatpush1.bf16.msra.mxu0 %v1238
        %1576 = vmatprep.subr.bf16.mxu0 %v1243
        %1577 = vmatpush1.bf16.msra.mxu0 %v1242
        %1578 = vmatprep.subr.bf16.mxu0 %v1247
        %1579 = vmatpush1.bf16.msra.mxu0 %v1246
        %1580 = vmatprep.subr.bf16.mxu0 %v1251
        %1581 = vmatpush1.bf16.msra.mxu0 %v1250
        %1582 = vmatprep.subr.bf16.mxu0 %v1255
        %1583 = vmatpush1.bf16.msra.mxu0 %v1254
        %1584 = vmatprep.subr.bf16.mxu0 %v1259
        %1585 = vmatpush1.bf16.msra.mxu0 %v1258
        %1586 = vmatprep.subr.bf16.mxu0 %v1263
        %1587 = vmatpush1.bf16.msra.mxu0 %v1262
        %1588 = vmatprep.subr.bf16.mxu0 %v1267
        %1589 = vmatpush1.bf16.msra.mxu0 %v1266
        %1590 = vmatprep.subr.bf16.mxu0 %v1271
        %1591 = vmatpush1.bf16.msra.mxu0 %v1270
        %1592 = vmatprep.subr.bf16.mxu0 %v1275
        %1593 = vmatpush1.bf16.msra.mxu0 %v1274
        %1594 = vmatprep.subr.bf16.mxu0 %v1279
        %1595 = vmatpush1.bf16.msra.mxu0 %v1278
        %1596 = vmatprep.subr.bf16.mxu0 %v1283
        %1597 = vmatpush1.bf16.msra.mxu0 %v1282
        %1598 = vmatprep.subr.bf16.mxu0 %v1287
        %1599 = vmatpush1.bf16.msra.mxu0 %v1286
        %1600 = vmatprep.subr.bf16.mxu0 %v1291
        %1601 = vmatpush1.bf16.msra.mxu0 %v1290
        %1602 = vmatprep.subr.bf16.mxu0 %v1295
        %1603 = vmatpush1.bf16.msra.mxu0 %v1294
        %1604 = vmatprep.subr.bf16.mxu0 %v1299
        %1605 = vmatpush1.bf16.msra.mxu0 %v1298
        %1606 = vmatprep.mubr.bf16.mxu0 %v683
        %1607 = vmatmul.mubr.bf16.gmra.mrb[0].mxu0 %v682
        %v1608 = vpop.f32.mrb[0].mxu0
        %v1609 = vadd.f32 %v843, %v1608
        %v1610 = vpop.f32.mrb[0].mxu0
        %v1611 = vadd.f32 %v847, %v1610
        %v1612 = vpop.f32.mrb[0].mxu0
        %v1613 = vpop.f32.mrb[0].mxu0
        %1614 = vdwg.mxu0
        %1615 = vmatprep.subr.bf16.mxu0 %v1303
        %1616 = vmatpush1.bf16.msra.mxu0 %v1302
        %1617 = vmatprep.subr.bf16.mxu0 %v1307
        %1618 = vmatpush1.bf16.msra.mxu0 %v1306
        %1619 = vmatprep.subr.bf16.mxu0 %v1311
        %1620 = vmatpush1.bf16.msra.mxu0 %v1310
        %1621 = vmatprep.subr.bf16.mxu0 %v1315
        %1622 = vmatpush1.bf16.msra.mxu0 %v1314
        %1623 = vmatprep.subr.bf16.mxu0 %v1319
        %1624 = vmatpush1.bf16.msra.mxu0 %v1318
        %1625 = vmatprep.subr.bf16.mxu0 %v1323
        %1626 = vmatpush1.bf16.msra.mxu0 %v1322
        %1627 = vmatprep.subr.bf16.mxu0 %v1327
        %1628 = vmatpush1.bf16.msra.mxu0 %v1326
        %1629 = vmatprep.subr.bf16.mxu0 %v1331
        %1630 = vmatpush1.bf16.msra.mxu0 %v1330
        %1631 = vmatprep.subr.bf16.mxu0 %v1335
        %1632 = vmatpush1.bf16.msra.mxu0 %v1334
        %1633 = vmatprep.subr.bf16.mxu0 %v1339
        %1634 = vmatpush1.bf16.msra.mxu0 %v1338
        %1635 = vmatprep.subr.bf16.mxu0 %v1343
        %1636 = vmatpush1.bf16.msra.mxu0 %v1342
        %1637 = vmatprep.subr.bf16.mxu0 %v1347
        %1638 = vmatpush1.bf16.msra.mxu0 %v1346
        %1639 = vmatprep.subr.bf16.mxu0 %v1351
        %1640 = vmatpush1.bf16.msra.mxu0 %v1350
        %1641 = vmatprep.subr.bf16.mxu0 %v1355
        %1642 = vmatpush1.bf16.msra.mxu0 %v1354
        %1643 = vmatprep.subr.bf16.mxu0 %v1359
        %1644 = vmatpush1.bf16.msra.mxu0 %v1358
        %1645 = vmatprep.subr.bf16.mxu0 %v1363
        %1646 = vmatpush1.bf16.msra.mxu0 %v1362
        %1647 = vmatprep.mubr.bf16.mxu0 %v685
        %1648 = vmatmul.mubr.bf16.gmra.mrb[0].mxu0 %v684
        %v1649 = vpop.f32.mrb[0].mxu0
        %v1650 = vadd.f32 %v1609, %v1649
        %v1651 = vpop.f32.mrb[0].mxu0
        %v1652 = vadd.f32 %v1611, %v1651
        %v1653 = vpop.f32.mrb[0].mxu0
        %v1654 = vpop.f32.mrb[0].mxu0
        %1655 = vdwg.mxu0
        %v1656 = vld [vmem:[#allocation10] sm:$0xff]
        %v1657 = vld [vmem:[#allocation10 + $0x8] sm:$0xff]
        %v1658 = vld [vmem:[#allocation10 + $0x10] sm:$0xff]
        %v1659 = vld [vmem:[#allocation10 + $0x18] sm:$0xff]
        %v1660 = vld [vmem:[#allocation10 + $0x20] sm:$0xff]
        %v1661 = vld [vmem:[#allocation10 + $0x28] sm:$0xff]
        %v1662 = vld [vmem:[#allocation10 + $0x30] sm:$0xff]
        %v1663 = vld [vmem:[#allocation10 + $0x38] sm:$0xff]
        %v1664 = vld [vmem:[#allocation10 + $0x40] sm:$0xff]
        %v1665 = vld [vmem:[#allocation10 + $0x48] sm:$0xff]
        %v1666 = vld [vmem:[#allocation10 + $0x50] sm:$0xff]
        %v1667 = vld [vmem:[#allocation10 + $0x58] sm:$0xff]
        %v1668 = vld [vmem:[#allocation10 + $0x60] sm:$0xff]
        %v1669 = vld [vmem:[#allocation10 + $0x68] sm:$0xff]
        %v1670 = vld [vmem:[#allocation10 + $0x70] sm:$0xff]
        %v1671 = vld [vmem:[#allocation10 + $0x78] sm:$0xff]
        %v1672 = vld [vmem:[#allocation10 + $0x80] sm:$0xff]
        %v1673 = vld [vmem:[#allocation10 + $0x88] sm:$0xff]
        %v1674 = vld [vmem:[#allocation10 + $0x90] sm:$0xff]
        %v1675 = vld [vmem:[#allocation10 + $0x98] sm:$0xff]
        %v1676 = vld [vmem:[#allocation10 + $0xa0] sm:$0xff]
        %v1677 = vld [vmem:[#allocation10 + $0xa8] sm:$0xff]
        %v1678 = vld [vmem:[#allocation10 + $0xb0] sm:$0xff]
        %v1679 = vld [vmem:[#allocation10 + $0xb8] sm:$0xff]
        %v1680 = vld [vmem:[#allocation10 + $0xc0] sm:$0xff]
        %v1681 = vld [vmem:[#allocation10 + $0xc8] sm:$0xff]
        %v1682 = vld [vmem:[#allocation10 + $0xd0] sm:$0xff]
        %v1683 = vld [vmem:[#allocation10 + $0xd8] sm:$0xff]
        %v1684 = vld [vmem:[#allocation10 + $0xe0] sm:$0xff]
        %v1685 = vld [vmem:[#allocation10 + $0xe8] sm:$0xff]
        %v1686 = vld [vmem:[#allocation10 + $0xf0] sm:$0xff]
        %v1687 = vld [vmem:[#allocation10 + $0xf8] sm:$0xff]
        %v1688 = vld [vmem:[#allocation10 + $0x100] sm:$0xff]
        %v1689 = vld [vmem:[#allocation10 + $0x108] sm:$0xff]
        %v1690 = vld [vmem:[#allocation10 + $0x110] sm:$0xff]
        %v1691 = vld [vmem:[#allocation10 + $0x118] sm:$0xff]
        %v1692 = vld [vmem:[#allocation10 + $0x120] sm:$0xff]
        %v1693 = vld [vmem:[#allocation10 + $0x128] sm:$0xff]
        %v1694 = vld [vmem:[#allocation10 + $0x130] sm:$0xff]
        %v1695 = vld [vmem:[#allocation10 + $0x138] sm:$0xff]
        %v1696 = vld [vmem:[#allocation10 + $0x140] sm:$0xff]
        %v1697 = vld [vmem:[#allocation10 + $0x148] sm:$0xff]
        %v1698 = vld [vmem:[#allocation10 + $0x150] sm:$0xff]
        %v1699 = vld [vmem:[#allocation10 + $0x158] sm:$0xff]
        %v1700 = vld [vmem:[#allocation10 + $0x160] sm:$0xff]
        %v1701 = vld [vmem:[#allocation10 + $0x168] sm:$0xff]
        %v1702 = vld [vmem:[#allocation10 + $0x170] sm:$0xff]
        %v1703 = vld [vmem:[#allocation10 + $0x178] sm:$0xff]
        %v1704 = vld [vmem:[#allocation10 + $0x180] sm:$0xff]
        %v1705 = vld [vmem:[#allocation10 + $0x188] sm:$0xff]
        %v1706 = vld [vmem:[#allocation10 + $0x190] sm:$0xff]
        %v1707 = vld [vmem:[#allocation10 + $0x198] sm:$0xff]
        %v1708 = vld [vmem:[#allocation10 + $0x1a0] sm:$0xff]
        %v1709 = vld [vmem:[#allocation10 + $0x1a8] sm:$0xff]
        %v1710 = vld [vmem:[#allocation10 + $0x1b0] sm:$0xff]
        %v1711 = vld [vmem:[#allocation10 + $0x1b8] sm:$0xff]
        %v1712 = vld [vmem:[#allocation10 + $0x1c0] sm:$0xff]
        %v1713 = vld [vmem:[#allocation10 + $0x1c8] sm:$0xff]
        %v1714 = vld [vmem:[#allocation10 + $0x1d0] sm:$0xff]
        %v1715 = vld [vmem:[#allocation10 + $0x1d8] sm:$0xff]
        %v1716 = vld [vmem:[#allocation10 + $0x1e0] sm:$0xff]
        %v1717 = vld [vmem:[#allocation10 + $0x1e8] sm:$0xff]
        %v1718 = vld [vmem:[#allocation10 + $0x1f0] sm:$0xff]
        %v1719 = vld [vmem:[#allocation10 + $0x1f8] sm:$0xff]
        %v1720 = vld [vmem:[#allocation10 + $0x200] sm:$0xff]
        %v1721 = vld [vmem:[#allocation10 + $0x208] sm:$0xff]
        %v1722 = vld [vmem:[#allocation10 + $0x210] sm:$0xff]
        %v1723 = vld [vmem:[#allocation10 + $0x218] sm:$0xff]
        %v1724 = vld [vmem:[#allocation10 + $0x220] sm:$0xff]
        %v1725 = vld [vmem:[#allocation10 + $0x228] sm:$0xff]
        %v1726 = vld [vmem:[#allocation10 + $0x230] sm:$0xff]
        %v1727 = vld [vmem:[#allocation10 + $0x238] sm:$0xff]
        %v1728 = vld [vmem:[#allocation10 + $0x240] sm:$0xff]
        %v1729 = vld [vmem:[#allocation10 + $0x248] sm:$0xff]
        %v1730 = vld [vmem:[#allocation10 + $0x250] sm:$0xff]
        %v1731 = vld [vmem:[#allocation10 + $0x258] sm:$0xff]
        %v1732 = vld [vmem:[#allocation10 + $0x260] sm:$0xff]
        %v1733 = vld [vmem:[#allocation10 + $0x268] sm:$0xff]
        %v1734 = vld [vmem:[#allocation10 + $0x270] sm:$0xff]
        %v1735 = vld [vmem:[#allocation10 + $0x278] sm:$0xff]
        %v1736 = vld [vmem:[#allocation10 + $0x280] sm:$0xff]
        %v1737 = vld [vmem:[#allocation10 + $0x288] sm:$0xff]
        %v1738 = vld [vmem:[#allocation10 + $0x290] sm:$0xff]
        %v1739 = vld [vmem:[#allocation10 + $0x298] sm:$0xff]
        %v1740 = vld [vmem:[#allocation10 + $0x2a0] sm:$0xff]
        %v1741 = vld [vmem:[#allocation10 + $0x2a8] sm:$0xff]
        %v1742 = vld [vmem:[#allocation10 + $0x2b0] sm:$0xff]
        %v1743 = vld [vmem:[#allocation10 + $0x2b8] sm:$0xff]
        %v1744 = vld [vmem:[#allocation10 + $0x2c0] sm:$0xff]
        %v1745 = vld [vmem:[#allocation10 + $0x2c8] sm:$0xff]
        %v1746 = vld [vmem:[#allocation10 + $0x2d0] sm:$0xff]
        %v1747 = vld [vmem:[#allocation10 + $0x2d8] sm:$0xff]
        %v1748 = vld [vmem:[#allocation10 + $0x2e0] sm:$0xff]
        %v1749 = vld [vmem:[#allocation10 + $0x2e8] sm:$0xff]
        %v1750 = vld [vmem:[#allocation10 + $0x2f0] sm:$0xff]
        %v1751 = vld [vmem:[#allocation10 + $0x2f8] sm:$0xff]
        %v1752 = vld [vmem:[#allocation10 + $0x300] sm:$0xff]
        %v1753 = vld [vmem:[#allocation10 + $0x308] sm:$0xff]
        %v1754 = vld [vmem:[#allocation10 + $0x310] sm:$0xff]
        %v1755 = vld [vmem:[#allocation10 + $0x318] sm:$0xff]
        %v1756 = vld [vmem:[#allocation10 + $0x320] sm:$0xff]
        %v1757 = vld [vmem:[#allocation10 + $0x328] sm:$0xff]
        %v1758 = vld [vmem:[#allocation10 + $0x330] sm:$0xff]
        %v1759 = vld [vmem:[#allocation10 + $0x338] sm:$0xff]
        %v1760 = vld [vmem:[#allocation10 + $0x340] sm:$0xff]
        %v1761 = vld [vmem:[#allocation10 + $0x348] sm:$0xff]
        %v1762 = vld [vmem:[#allocation10 + $0x350] sm:$0xff]
        %v1763 = vld [vmem:[#allocation10 + $0x358] sm:$0xff]
        %v1764 = vld [vmem:[#allocation10 + $0x360] sm:$0xff]
        %v1765 = vld [vmem:[#allocation10 + $0x368] sm:$0xff]
        %v1766 = vld [vmem:[#allocation10 + $0x370] sm:$0xff]
        %v1767 = vld [vmem:[#allocation10 + $0x378] sm:$0xff]
        %v1768 = vld [vmem:[#allocation10 + $0x380] sm:$0xff]
        %v1769 = vld [vmem:[#allocation10 + $0x388] sm:$0xff]
        %v1770 = vld [vmem:[#allocation10 + $0x390] sm:$0xff]
        %v1771 = vld [vmem:[#allocation10 + $0x398] sm:$0xff]
        %v1772 = vld [vmem:[#allocation10 + $0x3a0] sm:$0xff]
        %v1773 = vld [vmem:[#allocation10 + $0x3a8] sm:$0xff]
        %v1774 = vld [vmem:[#allocation10 + $0x3b0] sm:$0xff]
        %v1775 = vld [vmem:[#allocation10 + $0x3b8] sm:$0xff]
        %v1776 = vld [vmem:[#allocation10 + $0x3c0] sm:$0xff]
        %v1777 = vld [vmem:[#allocation10 + $0x3c8] sm:$0xff]
        %v1778 = vld [vmem:[#allocation10 + $0x3d0] sm:$0xff]
        %v1779 = vld [vmem:[#allocation10 + $0x3d8] sm:$0xff]
        %v1780 = vld [vmem:[#allocation10 + $0x3e0] sm:$0xff]
        %v1781 = vld [vmem:[#allocation10 + $0x3e8] sm:$0xff]
        %v1782 = vld [vmem:[#allocation10 + $0x3f0] sm:$0xff]
        %v1783 = vld [vmem:[#allocation10 + $0x3f8] sm:$0xff]
        %v1784 = vld [vmem:[%s8] sm:$0xf]
        %v1786 = vlaneseq
        %v1787 = vshrl.u32 %v1786, 7
        %v1788 = vsub.s32 0, %v1787
        %v1789 = vrot.slane %v1784, %v1788
        %v1790 = vlaneseq
        %v1791 = vshrl.u32 %v1790, 7
        %v1792 = vsub.s32 1, %v1791
        %v1793 = vrot.slane %v1784, %v1792
        %v1794 = vlaneseq
        %v1795 = vshrl.u32 %v1794, 7
        %v1796 = vsub.s32 2, %v1795
        %v1797 = vrot.slane %v1784, %v1796
        %v1798 = vlaneseq
        %v1799 = vshrl.u32 %v1798, 7
        %v1800 = vsub.s32 3, %v1799
        %v1801 = vrot.slane %v1784, %v1800
        %v1934 = vunpack.c.l.b16 %v1656
        %v1935 = vunpack.c.h.b16 %v1656
        %v1936 = vunpack.c.l.b16 %v1657
        %v1937 = vunpack.c.h.b16 %v1657
        %v1938 = vunpack.c.l.b16 %v1658
        %v1939 = vunpack.c.h.b16 %v1658
        %v1940 = vunpack.c.l.b16 %v1659
        %v1941 = vunpack.c.h.b16 %v1659
        %v1942 = vunpack.c.l.b16 %v1660
        %v1943 = vunpack.c.h.b16 %v1660
        %v1944 = vunpack.c.l.b16 %v1661
        %v1945 = vunpack.c.h.b16 %v1661
        %v1946 = vunpack.c.l.b16 %v1662
        %v1947 = vunpack.c.h.b16 %v1662
        %v1948 = vunpack.c.l.b16 %v1663
        %v1949 = vunpack.c.h.b16 %v1663
        %v1950 = vunpack.c.l.b16 %v1664
        %v1951 = vunpack.c.h.b16 %v1664
        %v1952 = vunpack.c.l.b16 %v1665
        %v1953 = vunpack.c.h.b16 %v1665
        %v1954 = vunpack.c.l.b16 %v1666
        %v1955 = vunpack.c.h.b16 %v1666
        %v1956 = vunpack.c.l.b16 %v1667
        %v1957 = vunpack.c.h.b16 %v1667
        %v1958 = vunpack.c.l.b16 %v1668
        %v1959 = vunpack.c.h.b16 %v1668
        %v1960 = vunpack.c.l.b16 %v1669
        %v1961 = vunpack.c.h.b16 %v1669
        %v1962 = vunpack.c.l.b16 %v1670
        %v1963 = vunpack.c.h.b16 %v1670
        %v1964 = vunpack.c.l.b16 %v1671
        %v1965 = vunpack.c.h.b16 %v1671
        %v1966 = vunpack.c.l.b16 %v1672
        %v1967 = vunpack.c.h.b16 %v1672
        %v1968 = vunpack.c.l.b16 %v1673
        %v1969 = vunpack.c.h.b16 %v1673
        %v1970 = vunpack.c.l.b16 %v1674
        %v1971 = vunpack.c.h.b16 %v1674
        %v1972 = vunpack.c.l.b16 %v1675
        %v1973 = vunpack.c.h.b16 %v1675
        %v1974 = vunpack.c.l.b16 %v1676
        %v1975 = vunpack.c.h.b16 %v1676
        %v1976 = vunpack.c.l.b16 %v1677
        %v1977 = vunpack.c.h.b16 %v1677
        %v1978 = vunpack.c.l.b16 %v1678
        %v1979 = vunpack.c.h.b16 %v1678
        %v1980 = vunpack.c.l.b16 %v1679
        %v1981 = vunpack.c.h.b16 %v1679
        %v1982 = vunpack.c.l.b16 %v1680
        %v1983 = vunpack.c.h.b16 %v1680
        %v1984 = vunpack.c.l.b16 %v1681
        %v1985 = vunpack.c.h.b16 %v1681
        %v1986 = vunpack.c.l.b16 %v1682
        %v1987 = vunpack.c.h.b16 %v1682
        %v1988 = vunpack.c.l.b16 %v1683
        %v1989 = vunpack.c.h.b16 %v1683
        %v1990 = vunpack.c.l.b16 %v1684
        %v1991 = vunpack.c.h.b16 %v1684
        %v1992 = vunpack.c.l.b16 %v1685
        %v1993 = vunpack.c.h.b16 %v1685
        %v1994 = vunpack.c.l.b16 %v1686
        %v1995 = vunpack.c.h.b16 %v1686
        %v1996 = vunpack.c.l.b16 %v1687
        %v1997 = vunpack.c.h.b16 %v1687
        %v1998 = vunpack.c.l.b16 %v1688
        %v1999 = vunpack.c.h.b16 %v1688
        %v2000 = vunpack.c.l.b16 %v1689
        %v2001 = vunpack.c.h.b16 %v1689
        %v2002 = vunpack.c.l.b16 %v1690
        %v2003 = vunpack.c.h.b16 %v1690
        %v2004 = vunpack.c.l.b16 %v1691
        %v2005 = vunpack.c.h.b16 %v1691
        %v2006 = vunpack.c.l.b16 %v1692
        %v2007 = vunpack.c.h.b16 %v1692
        %v2008 = vunpack.c.l.b16 %v1693
        %v2009 = vunpack.c.h.b16 %v1693
        %v2010 = vunpack.c.l.b16 %v1694
        %v2011 = vunpack.c.h.b16 %v1694
        %v2012 = vunpack.c.l.b16 %v1695
        %v2013 = vunpack.c.h.b16 %v1695
        %v2014 = vunpack.c.l.b16 %v1696
        %v2015 = vunpack.c.h.b16 %v1696
        %v2016 = vunpack.c.l.b16 %v1697
        %v2017 = vunpack.c.h.b16 %v1697
        %v2018 = vunpack.c.l.b16 %v1698
        %v2019 = vunpack.c.h.b16 %v1698
        %v2020 = vunpack.c.l.b16 %v1699
        %v2021 = vunpack.c.h.b16 %v1699
        %v2022 = vunpack.c.l.b16 %v1700
        %v2023 = vunpack.c.h.b16 %v1700
        %v2024 = vunpack.c.l.b16 %v1701
        %v2025 = vunpack.c.h.b16 %v1701
        %v2026 = vunpack.c.l.b16 %v1702
        %v2027 = vunpack.c.h.b16 %v1702
        %v2028 = vunpack.c.l.b16 %v1703
        %v2029 = vunpack.c.h.b16 %v1703
        %v2030 = vunpack.c.l.b16 %v1704
        %v2031 = vunpack.c.h.b16 %v1704
        %v2032 = vunpack.c.l.b16 %v1705
        %v2033 = vunpack.c.h.b16 %v1705
        %v2034 = vunpack.c.l.b16 %v1706
        %v2035 = vunpack.c.h.b16 %v1706
        %v2036 = vunpack.c.l.b16 %v1707
        %v2037 = vunpack.c.h.b16 %v1707
        %v2038 = vunpack.c.l.b16 %v1708
        %v2039 = vunpack.c.h.b16 %v1708
        %v2040 = vunpack.c.l.b16 %v1709
        %v2041 = vunpack.c.h.b16 %v1709
        %v2042 = vunpack.c.l.b16 %v1710
        %v2043 = vunpack.c.h.b16 %v1710
        %v2044 = vunpack.c.l.b16 %v1711
        %v2045 = vunpack.c.h.b16 %v1711
        %v2046 = vunpack.c.l.b16 %v1712
        %v2047 = vunpack.c.h.b16 %v1712
        %v2048 = vunpack.c.l.b16 %v1713
        %v2049 = vunpack.c.h.b16 %v1713
        %v2050 = vunpack.c.l.b16 %v1714
        %v2051 = vunpack.c.h.b16 %v1714
        %v2052 = vunpack.c.l.b16 %v1715
        %v2053 = vunpack.c.h.b16 %v1715
        %v2054 = vunpack.c.l.b16 %v1716
        %v2055 = vunpack.c.h.b16 %v1716
        %v2056 = vunpack.c.l.b16 %v1717
        %v2057 = vunpack.c.h.b16 %v1717
        %v2058 = vunpack.c.l.b16 %v1718
        %v2059 = vunpack.c.h.b16 %v1718
        %v2060 = vunpack.c.l.b16 %v1719
        %v2061 = vunpack.c.h.b16 %v1719
        %v2062 = vunpack.c.l.b16 %v1720
        %v2063 = vunpack.c.h.b16 %v1720
        %v2064 = vunpack.c.l.b16 %v1721
        %v2065 = vunpack.c.h.b16 %v1721
        %v2066 = vunpack.c.l.b16 %v1722
        %v2067 = vunpack.c.h.b16 %v1722
        %v2068 = vunpack.c.l.b16 %v1723
        %v2069 = vunpack.c.h.b16 %v1723
        %v2070 = vunpack.c.l.b16 %v1724
        %v2071 = vunpack.c.h.b16 %v1724
        %v2072 = vunpack.c.l.b16 %v1725
        %v2073 = vunpack.c.h.b16 %v1725
        %v2074 = vunpack.c.l.b16 %v1726
        %v2075 = vunpack.c.h.b16 %v1726
        %v2076 = vunpack.c.l.b16 %v1727
        %v2077 = vunpack.c.h.b16 %v1727
        %v2078 = vunpack.c.l.b16 %v1728
        %v2079 = vunpack.c.h.b16 %v1728
        %v2080 = vunpack.c.l.b16 %v1729
        %v2081 = vunpack.c.h.b16 %v1729
        %v2082 = vunpack.c.l.b16 %v1730
        %v2083 = vunpack.c.h.b16 %v1730
        %v2084 = vunpack.c.l.b16 %v1731
        %v2085 = vunpack.c.h.b16 %v1731
        %v2086 = vunpack.c.l.b16 %v1732
        %v2087 = vunpack.c.h.b16 %v1732
        %v2088 = vunpack.c.l.b16 %v1733
        %v2089 = vunpack.c.h.b16 %v1733
        %v2090 = vunpack.c.l.b16 %v1734
        %v2091 = vunpack.c.h.b16 %v1734
        %v2092 = vunpack.c.l.b16 %v1735
        %v2093 = vunpack.c.h.b16 %v1735
        %v2094 = vunpack.c.l.b16 %v1736
        %v2095 = vunpack.c.h.b16 %v1736
        %v2096 = vunpack.c.l.b16 %v1737
        %v2097 = vunpack.c.h.b16 %v1737
        %v2098 = vunpack.c.l.b16 %v1738
        %v2099 = vunpack.c.h.b16 %v1738
        %v2100 = vunpack.c.l.b16 %v1739
        %v2101 = vunpack.c.h.b16 %v1739
        %v2102 = vunpack.c.l.b16 %v1740
        %v2103 = vunpack.c.h.b16 %v1740
        %v2104 = vunpack.c.l.b16 %v1741
        %v2105 = vunpack.c.h.b16 %v1741
        %v2106 = vunpack.c.l.b16 %v1742
        %v2107 = vunpack.c.h.b16 %v1742
        %v2108 = vunpack.c.l.b16 %v1743
        %v2109 = vunpack.c.h.b16 %v1743
        %v2110 = vunpack.c.l.b16 %v1744
        %v2111 = vunpack.c.h.b16 %v1744
        %v2112 = vunpack.c.l.b16 %v1745
        %v2113 = vunpack.c.h.b16 %v1745
        %v2114 = vunpack.c.l.b16 %v1746
        %v2115 = vunpack.c.h.b16 %v1746
        %v2116 = vunpack.c.l.b16 %v1747
        %v2117 = vunpack.c.h.b16 %v1747
        %v2118 = vunpack.c.l.b16 %v1748
        %v2119 = vunpack.c.h.b16 %v1748
        %v2120 = vunpack.c.l.b16 %v1749
        %v2121 = vunpack.c.h.b16 %v1749
        %v2122 = vunpack.c.l.b16 %v1750
        %v2123 = vunpack.c.h.b16 %v1750
        %v2124 = vunpack.c.l.b16 %v1751
        %v2125 = vunpack.c.h.b16 %v1751
        %v2126 = vunpack.c.l.b16 %v1752
        %v2127 = vunpack.c.h.b16 %v1752
        %v2128 = vunpack.c.l.b16 %v1753
        %v2129 = vunpack.c.h.b16 %v1753
        %v2130 = vunpack.c.l.b16 %v1754
        %v2131 = vunpack.c.h.b16 %v1754
        %v2132 = vunpack.c.l.b16 %v1755
        %v2133 = vunpack.c.h.b16 %v1755
        %v2134 = vunpack.c.l.b16 %v1756
        %v2135 = vunpack.c.h.b16 %v1756
        %v2136 = vunpack.c.l.b16 %v1757
        %v2137 = vunpack.c.h.b16 %v1757
        %v2138 = vunpack.c.l.b16 %v1758
        %v2139 = vunpack.c.h.b16 %v1758
        %v2140 = vunpack.c.l.b16 %v1759
        %v2141 = vunpack.c.h.b16 %v1759
        %v2142 = vunpack.c.l.b16 %v1760
        %v2143 = vunpack.c.h.b16 %v1760
        %v2144 = vunpack.c.l.b16 %v1761
        %v2145 = vunpack.c.h.b16 %v1761
        %v2146 = vunpack.c.l.b16 %v1762
        %v2147 = vunpack.c.h.b16 %v1762
        %v2148 = vunpack.c.l.b16 %v1763
        %v2149 = vunpack.c.h.b16 %v1763
        %v2150 = vunpack.c.l.b16 %v1764
        %v2151 = vunpack.c.h.b16 %v1764
        %v2152 = vunpack.c.l.b16 %v1765
        %v2153 = vunpack.c.h.b16 %v1765
        %v2154 = vunpack.c.l.b16 %v1766
        %v2155 = vunpack.c.h.b16 %v1766
        %v2156 = vunpack.c.l.b16 %v1767
        %v2157 = vunpack.c.h.b16 %v1767
        %v2158 = vunpack.c.l.b16 %v1768
        %v2159 = vunpack.c.h.b16 %v1768
        %v2160 = vunpack.c.l.b16 %v1769
        %v2161 = vunpack.c.h.b16 %v1769
        %v2162 = vunpack.c.l.b16 %v1770
        %v2163 = vunpack.c.h.b16 %v1770
        %v2164 = vunpack.c.l.b16 %v1771
        %v2165 = vunpack.c.h.b16 %v1771
        %v2166 = vunpack.c.l.b16 %v1772
        %v2167 = vunpack.c.h.b16 %v1772
        %v2168 = vunpack.c.l.b16 %v1773
        %v2169 = vunpack.c.h.b16 %v1773
        %v2170 = vunpack.c.l.b16 %v1774
        %v2171 = vunpack.c.h.b16 %v1774
        %v2172 = vunpack.c.l.b16 %v1775
        %v2173 = vunpack.c.h.b16 %v1775
        %v2174 = vunpack.c.l.b16 %v1776
        %v2175 = vunpack.c.h.b16 %v1776
        %v2176 = vunpack.c.l.b16 %v1777
        %v2177 = vunpack.c.h.b16 %v1777
        %v2178 = vunpack.c.l.b16 %v1778
        %v2179 = vunpack.c.h.b16 %v1778
        %v2180 = vunpack.c.l.b16 %v1779
        %v2181 = vunpack.c.h.b16 %v1779
        %v2182 = vunpack.c.l.b16 %v1780
        %v2183 = vunpack.c.h.b16 %v1780
        %v2184 = vunpack.c.l.b16 %v1781
        %v2185 = vunpack.c.h.b16 %v1781
        %v2186 = vunpack.c.l.b16 %v1782
        %v2187 = vunpack.c.h.b16 %v1782
        %v2188 = vunpack.c.l.b16 %v1783
        %v2189 = vunpack.c.h.b16 %v1783
        %v2190 = vpack.c.b16 %v1938, %v1934
        %v2191 = vpack.c.b16 %v1939, %v1935
        %v2192 = vpack.c.b16 %v1940, %v1936
        %v2193 = vpack.c.b16 %v1941, %v1937
        %v2194 = vpack.c.b16 %v1946, %v1942
        %v2195 = vpack.c.b16 %v1947, %v1943
        %v2196 = vpack.c.b16 %v1948, %v1944
        %v2197 = vpack.c.b16 %v1949, %v1945
        %v2198 = vpack.c.b16 %v1954, %v1950
        %v2199 = vpack.c.b16 %v1955, %v1951
        %v2200 = vpack.c.b16 %v1956, %v1952
        %v2201 = vpack.c.b16 %v1957, %v1953
        %v2202 = vpack.c.b16 %v1962, %v1958
        %v2203 = vpack.c.b16 %v1963, %v1959
        %v2204 = vpack.c.b16 %v1964, %v1960
        %v2205 = vpack.c.b16 %v1965, %v1961
        %v2206 = vpack.c.b16 %v1970, %v1966
        %v2207 = vpack.c.b16 %v1971, %v1967
        %v2208 = vpack.c.b16 %v1972, %v1968
        %v2209 = vpack.c.b16 %v1973, %v1969
        %v2210 = vpack.c.b16 %v1978, %v1974
        %v2211 = vpack.c.b16 %v1979, %v1975
        %v2212 = vpack.c.b16 %v1980, %v1976
        %v2213 = vpack.c.b16 %v1981, %v1977
        %v2214 = vpack.c.b16 %v1986, %v1982
        %v2215 = vpack.c.b16 %v1987, %v1983
        %v2216 = vpack.c.b16 %v1988, %v1984
        %v2217 = vpack.c.b16 %v1989, %v1985
        %v2218 = vpack.c.b16 %v1994, %v1990
        %v2219 = vpack.c.b16 %v1995, %v1991
        %v2220 = vpack.c.b16 %v1996, %v1992
        %v2221 = vpack.c.b16 %v1997, %v1993
        %v2222 = vpack.c.b16 %v2002, %v1998
        %v2223 = vpack.c.b16 %v2003, %v1999
        %v2224 = vpack.c.b16 %v2004, %v2000
        %v2225 = vpack.c.b16 %v2005, %v2001
        %v2226 = vpack.c.b16 %v2010, %v2006
        %v2227 = vpack.c.b16 %v2011, %v2007
        %v2228 = vpack.c.b16 %v2012, %v2008
        %v2229 = vpack.c.b16 %v2013, %v2009
        %v2230 = vpack.c.b16 %v2018, %v2014
        %v2231 = vpack.c.b16 %v2019, %v2015
        %v2232 = vpack.c.b16 %v2020, %v2016
        %v2233 = vpack.c.b16 %v2021, %v2017
        %v2234 = vpack.c.b16 %v2026, %v2022
        %v2235 = vpack.c.b16 %v2027, %v2023
        %v2236 = vpack.c.b16 %v2028, %v2024
        %v2237 = vpack.c.b16 %v2029, %v2025
        %v2238 = vpack.c.b16 %v2034, %v2030
        %v2239 = vpack.c.b16 %v2035, %v2031
        %v2240 = vpack.c.b16 %v2036, %v2032
        %v2241 = vpack.c.b16 %v2037, %v2033
        %v2242 = vpack.c.b16 %v2042, %v2038
        %v2243 = vpack.c.b16 %v2043, %v2039
        %v2244 = vpack.c.b16 %v2044, %v2040
        %v2245 = vpack.c.b16 %v2045, %v2041
        %v2246 = vpack.c.b16 %v2050, %v2046
        %v2247 = vpack.c.b16 %v2051, %v2047
        %v2248 = vpack.c.b16 %v2052, %v2048
        %v2249 = vpack.c.b16 %v2053, %v2049
        %v2250 = vpack.c.b16 %v2058, %v2054
        %v2251 = vpack.c.b16 %v2059, %v2055
        %v2252 = vpack.c.b16 %v2060, %v2056
        %v2253 = vpack.c.b16 %v2061, %v2057
        %v2254 = vpack.c.b16 %v2066, %v2062
        %v2255 = vpack.c.b16 %v2067, %v2063
        %v2256 = vpack.c.b16 %v2068, %v2064
        %v2257 = vpack.c.b16 %v2069, %v2065
        %v2258 = vpack.c.b16 %v2074, %v2070
        %v2259 = vpack.c.b16 %v2075, %v2071
        %v2260 = vpack.c.b16 %v2076, %v2072
        %v2261 = vpack.c.b16 %v2077, %v2073
        %v2262 = vpack.c.b16 %v2082, %v2078
        %v2263 = vpack.c.b16 %v2083, %v2079
        %v2264 = vpack.c.b16 %v2084, %v2080
        %v2265 = vpack.c.b16 %v2085, %v2081
        %v2266 = vpack.c.b16 %v2090, %v2086
        %v2267 = vpack.c.b16 %v2091, %v2087
        %v2268 = vpack.c.b16 %v2092, %v2088
        %v2269 = vpack.c.b16 %v2093, %v2089
        %v2270 = vpack.c.b16 %v2098, %v2094
        %v2271 = vpack.c.b16 %v2099, %v2095
        %v2272 = vpack.c.b16 %v2100, %v2096
        %v2273 = vpack.c.b16 %v2101, %v2097
        %v2274 = vpack.c.b16 %v2106, %v2102
        %v2275 = vpack.c.b16 %v2107, %v2103
        %v2276 = vpack.c.b16 %v2108, %v2104
        %v2277 = vpack.c.b16 %v2109, %v2105
        %v2278 = vpack.c.b16 %v2114, %v2110
        %v2279 = vpack.c.b16 %v2115, %v2111
        %v2280 = vpack.c.b16 %v2116, %v2112
        %v2281 = vpack.c.b16 %v2117, %v2113
        %v2282 = vpack.c.b16 %v2122, %v2118
        %v2283 = vpack.c.b16 %v2123, %v2119
        %v2284 = vpack.c.b16 %v2124, %v2120
        %v2285 = vpack.c.b16 %v2125, %v2121
        %v2286 = vpack.c.b16 %v2130, %v2126
        %v2287 = vpack.c.b16 %v2131, %v2127
        %v2288 = vpack.c.b16 %v2132, %v2128
        %v2289 = vpack.c.b16 %v2133, %v2129
        %v2290 = vpack.c.b16 %v2138, %v2134
        %v2291 = vpack.c.b16 %v2139, %v2135
        %v2292 = vpack.c.b16 %v2140, %v2136
        %v2293 = vpack.c.b16 %v2141, %v2137
        %v2294 = vpack.c.b16 %v2146, %v2142
        %v2295 = vpack.c.b16 %v2147, %v2143
        %v2296 = vpack.c.b16 %v2148, %v2144
        %v2297 = vpack.c.b16 %v2149, %v2145
        %v2298 = vpack.c.b16 %v2154, %v2150
        %v2299 = vpack.c.b16 %v2155, %v2151
        %v2300 = vpack.c.b16 %v2156, %v2152
        %v2301 = vpack.c.b16 %v2157, %v2153
        %v2302 = vpack.c.b16 %v2162, %v2158
        %v2303 = vpack.c.b16 %v2163, %v2159
        %v2304 = vpack.c.b16 %v2164, %v2160
        %v2305 = vpack.c.b16 %v2165, %v2161
        %v2306 = vpack.c.b16 %v2170, %v2166
        %v2307 = vpack.c.b16 %v2171, %v2167
        %v2308 = vpack.c.b16 %v2172, %v2168
        %v2309 = vpack.c.b16 %v2173, %v2169
        %v2310 = vpack.c.b16 %v2178, %v2174
        %v2311 = vpack.c.b16 %v2179, %v2175
        %v2312 = vpack.c.b16 %v2180, %v2176
        %v2313 = vpack.c.b16 %v2181, %v2177
        %v2314 = vpack.c.b16 %v2186, %v2182
        %v2315 = vpack.c.b16 %v2187, %v2183
        %v2316 = vpack.c.b16 %v2188, %v2184
        %v2317 = vpack.c.b16 %v2189, %v2185
        %2446 = vmatprep.subr.bf16.mxu0 %v2191
        %2447 = vmatpush1.bf16.msra.mxu0 %v2190
        %2448 = vmatprep.subr.bf16.mxu0 %v2195
        %2449 = vmatpush1.bf16.msra.mxu0 %v2194
        %2450 = vmatprep.subr.bf16.mxu0 %v2199
        %2451 = vmatpush1.bf16.msra.mxu0 %v2198
        %2452 = vmatprep.subr.bf16.mxu0 %v2203
        %2453 = vmatpush1.bf16.msra.mxu0 %v2202
        %2454 = vmatprep.subr.bf16.mxu0 %v2207
        %2455 = vmatpush1.bf16.msra.mxu0 %v2206
        %2456 = vmatprep.subr.bf16.mxu0 %v2211
        %2457 = vmatpush1.bf16.msra.mxu0 %v2210
        %2458 = vmatprep.subr.bf16.mxu0 %v2215
        %2459 = vmatpush1.bf16.msra.mxu0 %v2214
        %2460 = vmatprep.subr.bf16.mxu0 %v2219
        %2461 = vmatpush1.bf16.msra.mxu0 %v2218
        %2462 = vmatprep.subr.bf16.mxu0 %v2223
        %2463 = vmatpush1.bf16.msra.mxu0 %v2222
        %2464 = vmatprep.subr.bf16.mxu0 %v2227
        %2465 = vmatpush1.bf16.msra.mxu0 %v2226
        %2466 = vmatprep.subr.bf16.mxu0 %v2231
        %2467 = vmatpush1.bf16.msra.mxu0 %v2230
        %2468 = vmatprep.subr.bf16.mxu0 %v2235
        %2469 = vmatpush1.bf16.msra.mxu0 %v2234
        %2470 = vmatprep.subr.bf16.mxu0 %v2239
        %2471 = vmatpush1.bf16.msra.mxu0 %v2238
        %2472 = vmatprep.subr.bf16.mxu0 %v2243
        %2473 = vmatpush1.bf16.msra.mxu0 %v2242
        %2474 = vmatprep.subr.bf16.mxu0 %v2247
        %2475 = vmatpush1.bf16.msra.mxu0 %v2246
        %2476 = vmatprep.subr.bf16.mxu0 %v2251
        %2477 = vmatpush1.bf16.msra.mxu0 %v2250
        %2478 = vmatprep.mubr.bf16.mxu0 %v691
        %2479 = vmatmul.mubr.bf16.gmra.mrb[0].mxu0 %v690
        %v2480 = vpop.f32.mrb[0].mxu0
        %v2481 = vadd.f32 %v1789, %v2480
        %v2482 = vpop.f32.mrb[0].mxu0
        %v2483 = vadd.f32 %v1793, %v2482
        %v2484 = vpop.f32.mrb[0].mxu0
        %v2485 = vpop.f32.mrb[0].mxu0
        %2486 = vdwg.mxu0
        %2487 = vmatprep.subr.bf16.mxu0 %v2255
        %2488 = vmatpush1.bf16.msra.mxu0 %v2254
        %2489 = vmatprep.subr.bf16.mxu0 %v2259
        %2490 = vmatpush1.bf16.msra.mxu0 %v2258
        %2491 = vmatprep.subr.bf16.mxu0 %v2263
        %2492 = vmatpush1.bf16.msra.mxu0 %v2262
        %2493 = vmatprep.subr.bf16.mxu0 %v2267
        %2494 = vmatpush1.bf16.msra.mxu0 %v2266
        %2495 = vmatprep.subr.bf16.mxu0 %v2271
        %2496 = vmatpush1.bf16.msra.mxu0 %v2270
        %2497 = vmatprep.subr.bf16.mxu0 %v2275
        %2498 = vmatpush1.bf16.msra.mxu0 %v2274
        %2499 = vmatprep.subr.bf16.mxu0 %v2279
        %2500 = vmatpush1.bf16.msra.mxu0 %v2278
        %2501 = vmatprep.subr.bf16.mxu0 %v2283
        %2502 = vmatpush1.bf16.msra.mxu0 %v2282
        %2503 = vmatprep.subr.bf16.mxu0 %v2287
        %2504 = vmatpush1.bf16.msra.mxu0 %v2286
        %2505 = vmatprep.subr.bf16.mxu0 %v2291
        %2506 = vmatpush1.bf16.msra.mxu0 %v2290
        %2507 = vmatprep.subr.bf16.mxu0 %v2295
        %2508 = vmatpush1.bf16.msra.mxu0 %v2294
        %2509 = vmatprep.subr.bf16.mxu0 %v2299
        %2510 = vmatpush1.bf16.msra.mxu0 %v2298
        %2511 = vmatprep.subr.bf16.mxu0 %v2303
        %2512 = vmatpush1.bf16.msra.mxu0 %v2302
        %2513 = vmatprep.subr.bf16.mxu0 %v2307
        %2514 = vmatpush1.bf16.msra.mxu0 %v2306
        %2515 = vmatprep.subr.bf16.mxu0 %v2311
        %2516 = vmatpush1.bf16.msra.mxu0 %v2310
        %2517 = vmatprep.subr.bf16.mxu0 %v2315
        %2518 = vmatpush1.bf16.msra.mxu0 %v2314
        %2519 = vmatprep.mubr.bf16.mxu0 %v693
        %2520 = vmatmul.mubr.bf16.gmra.mrb[0].mxu0 %v692
        %v2521 = vpop.f32.mrb[0].mxu0
        %v2522 = vadd.f32 %v2481, %v2521
        %v2523 = vpop.f32.mrb[0].mxu0
        %v2524 = vadd.f32 %v2483, %v2523
        %v2525 = vpop.f32.mrb[0].mxu0
        %v2526 = vpop.f32.mrb[0].mxu0
        %2527 = vdwg.mxu0
        %2528 = vmatprep.subr.bf16.mxu0 %v2193
        %2529 = vmatpush1.bf16.msra.mxu0 %v2192
        %2530 = vmatprep.subr.bf16.mxu0 %v2197
        %2531 = vmatpush1.bf16.msra.mxu0 %v2196
        %2532 = vmatprep.subr.bf16.mxu0 %v2201
        %2533 = vmatpush1.bf16.msra.mxu0 %v2200
        %2534 = vmatprep.subr.bf16.mxu0 %v2205
        %2535 = vmatpush1.bf16.msra.mxu0 %v2204
        %2536 = vmatprep.subr.bf16.mxu0 %v2209
        %2537 = vmatpush1.bf16.msra.mxu0 %v2208
        %2538 = vmatprep.subr.bf16.mxu0 %v2213
        %2539 = vmatpush1.bf16.msra.mxu0 %v2212
        %2540 = vmatprep.subr.bf16.mxu0 %v2217
        %2541 = vmatpush1.bf16.msra.mxu0 %v2216
        %2542 = vmatprep.subr.bf16.mxu0 %v2221
        %2543 = vmatpush1.bf16.msra.mxu0 %v2220
        %2544 = vmatprep.subr.bf16.mxu0 %v2225
        %2545 = vmatpush1.bf16.msra.mxu0 %v2224
        %2546 = vmatprep.subr.bf16.mxu0 %v2229
        %2547 = vmatpush1.bf16.msra.mxu0 %v2228
        %2548 = vmatprep.subr.bf16.mxu0 %v2233
        %2549 = vmatpush1.bf16.msra.mxu0 %v2232
        %2550 = vmatprep.subr.bf16.mxu0 %v2237
        %2551 = vmatpush1.bf16.msra.mxu0 %v2236
        %2552 = vmatprep.subr.bf16.mxu0 %v2241
        %2553 = vmatpush1.bf16.msra.mxu0 %v2240
        %2554 = vmatprep.subr.bf16.mxu0 %v2245
        %2555 = vmatpush1.bf16.msra.mxu0 %v2244
        %2556 = vmatprep.subr.bf16.mxu0 %v2249
        %2557 = vmatpush1.bf16.msra.mxu0 %v2248
        %2558 = vmatprep.subr.bf16.mxu0 %v2253
        %2559 = vmatpush1.bf16.msra.mxu0 %v2252
        %2560 = vmatprep.mubr.bf16.mxu0 %v691
        %2561 = vmatmul.mubr.bf16.gmra.mrb[0].mxu0 %v690
        %v2562 = vpop.f32.mrb[0].mxu0
        %v2563 = vadd.f32 %v1797, %v2562
        %v2564 = vpop.f32.mrb[0].mxu0
        %v2565 = vadd.f32 %v1801, %v2564
        %v2566 = vpop.f32.mrb[0].mxu0
        %v2567 = vpop.f32.mrb[0].mxu0
        %2568 = vdwg.mxu0
        %2569 = vmatprep.subr.bf16.mxu0 %v2257
        %2570 = vmatpush1.bf16.msra.mxu0 %v2256
        %2571 = vmatprep.subr.bf16.mxu0 %v2261
        %2572 = vmatpush1.bf16.msra.mxu0 %v2260
        %2573 = vmatprep.subr.bf16.mxu0 %v2265
        %2574 = vmatpush1.bf16.msra.mxu0 %v2264
        %2575 = vmatprep.subr.bf16.mxu0 %v2269
        %2576 = vmatpush1.bf16.msra.mxu0 %v2268
        %2577 = vmatprep.subr.bf16.mxu0 %v2273
        %2578 = vmatpush1.bf16.msra.mxu0 %v2272
        %2579 = vmatprep.subr.bf16.mxu0 %v2277
        %2580 = vmatpush1.bf16.msra.mxu0 %v2276
        %2581 = vmatprep.subr.bf16.mxu0 %v2281
        %2582 = vmatpush1.bf16.msra.mxu0 %v2280
        %2583 = vmatprep.subr.bf16.mxu0 %v2285
        %2584 = vmatpush1.bf16.msra.mxu0 %v2284
        %2585 = vmatprep.subr.bf16.mxu0 %v2289
        %2586 = vmatpush1.bf16.msra.mxu0 %v2288
        %2587 = vmatprep.subr.bf16.mxu0 %v2293
        %2588 = vmatpush1.bf16.msra.mxu0 %v2292
        %2589 = vmatprep.subr.bf16.mxu0 %v2297
        %2590 = vmatpush1.bf16.msra.mxu0 %v2296
        %2591 = vmatprep.subr.bf16.mxu0 %v2301
        %2592 = vmatpush1.bf16.msra.mxu0 %v2300
        %2593 = vmatprep.subr.bf16.mxu0 %v2305
        %2594 = vmatpush1.bf16.msra.mxu0 %v2304
        %2595 = vmatprep.subr.bf16.mxu0 %v2309
        %2596 = vmatpush1.bf16.msra.mxu0 %v2308
        %2597 = vmatprep.subr.bf16.mxu0 %v2313
        %2598 = vmatpush1.bf16.msra.mxu0 %v2312
        %2599 = vmatprep.subr.bf16.mxu0 %v2317
        %2600 = vmatpush1.bf16.msra.mxu0 %v2316
        %2601 = vmatprep.mubr.bf16.mxu0 %v693
        %2602 = vmatmul.mubr.bf16.gmra.mrb[0].mxu0 %v692
        %v2603 = vpop.f32.mrb[0].mxu0
        %v2604 = vadd.f32 %v2563, %v2603
        %v2605 = vpop.f32.mrb[0].mxu0
        %v2606 = vadd.f32 %v2565, %v2605
        %v2607 = vpop.f32.mrb[0].mxu0
        %v2608 = vpop.f32.mrb[0].mxu0
        %2609 = vdwg.mxu0
        %v2610 = vld [vmem:[#allocation11] sm:$0xff]
        %v2611 = vld [vmem:[#allocation11 + $0x8] sm:$0xff]
        %v2612 = vld [vmem:[#allocation11 + $0x10] sm:$0xff]
        %v2613 = vld [vmem:[#allocation11 + $0x18] sm:$0xff]
        %v2614 = vld [vmem:[#allocation11 + $0x20] sm:$0xff]
        %v2615 = vld [vmem:[#allocation11 + $0x28] sm:$0xff]
        %v2616 = vld [vmem:[#allocation11 + $0x30] sm:$0xff]
        %v2617 = vld [vmem:[#allocation11 + $0x38] sm:$0xff]
        %v2618 = vld [vmem:[#allocation11 + $0x40] sm:$0xff]
        %v2619 = vld [vmem:[#allocation11 + $0x48] sm:$0xff]
        %v2620 = vld [vmem:[#allocation11 + $0x50] sm:$0xff]
        %v2621 = vld [vmem:[#allocation11 + $0x58] sm:$0xff]
        %v2622 = vld [vmem:[#allocation11 + $0x60] sm:$0xff]
        %v2623 = vld [vmem:[#allocation11 + $0x68] sm:$0xff]
        %v2624 = vld [vmem:[#allocation11 + $0x70] sm:$0xff]
        %v2625 = vld [vmem:[#allocation11 + $0x78] sm:$0xff]
        %v2626 = vld [vmem:[#allocation11 + $0x80] sm:$0xff]
        %v2627 = vld [vmem:[#allocation11 + $0x88] sm:$0xff]
        %v2628 = vld [vmem:[#allocation11 + $0x90] sm:$0xff]
        %v2629 = vld [vmem:[#allocation11 + $0x98] sm:$0xff]
        %v2630 = vld [vmem:[#allocation11 + $0xa0] sm:$0xff]
        %v2631 = vld [vmem:[#allocation11 + $0xa8] sm:$0xff]
        %v2632 = vld [vmem:[#allocation11 + $0xb0] sm:$0xff]
        %v2633 = vld [vmem:[#allocation11 + $0xb8] sm:$0xff]
        %v2634 = vld [vmem:[#allocation11 + $0xc0] sm:$0xff]
        %v2635 = vld [vmem:[#allocation11 + $0xc8] sm:$0xff]
        %v2636 = vld [vmem:[#allocation11 + $0xd0] sm:$0xff]
        %v2637 = vld [vmem:[#allocation11 + $0xd8] sm:$0xff]
        %v2638 = vld [vmem:[#allocation11 + $0xe0] sm:$0xff]
        %v2639 = vld [vmem:[#allocation11 + $0xe8] sm:$0xff]
        %v2640 = vld [vmem:[#allocation11 + $0xf0] sm:$0xff]
        %v2641 = vld [vmem:[#allocation11 + $0xf8] sm:$0xff]
        %v2642 = vld [vmem:[#allocation11 + $0x100] sm:$0xff]
        %v2643 = vld [vmem:[#allocation11 + $0x108] sm:$0xff]
        %v2644 = vld [vmem:[#allocation11 + $0x110] sm:$0xff]
        %v2645 = vld [vmem:[#allocation11 + $0x118] sm:$0xff]
        %v2646 = vld [vmem:[#allocation11 + $0x120] sm:$0xff]
        %v2647 = vld [vmem:[#allocation11 + $0x128] sm:$0xff]
        %v2648 = vld [vmem:[#allocation11 + $0x130] sm:$0xff]
        %v2649 = vld [vmem:[#allocation11 + $0x138] sm:$0xff]
        %v2650 = vld [vmem:[#allocation11 + $0x140] sm:$0xff]
        %v2651 = vld [vmem:[#allocation11 + $0x148] sm:$0xff]
        %v2652 = vld [vmem:[#allocation11 + $0x150] sm:$0xff]
        %v2653 = vld [vmem:[#allocation11 + $0x158] sm:$0xff]
        %v2654 = vld [vmem:[#allocation11 + $0x160] sm:$0xff]
        %v2655 = vld [vmem:[#allocation11 + $0x168] sm:$0xff]
        %v2656 = vld [vmem:[#allocation11 + $0x170] sm:$0xff]
        %v2657 = vld [vmem:[#allocation11 + $0x178] sm:$0xff]
        %v2658 = vld [vmem:[#allocation11 + $0x180] sm:$0xff]
        %v2659 = vld [vmem:[#allocation11 + $0x188] sm:$0xff]
        %v2660 = vld [vmem:[#allocation11 + $0x190] sm:$0xff]
        %v2661 = vld [vmem:[#allocation11 + $0x198] sm:$0xff]
        %v2662 = vld [vmem:[#allocation11 + $0x1a0] sm:$0xff]
        %v2663 = vld [vmem:[#allocation11 + $0x1a8] sm:$0xff]
        %v2664 = vld [vmem:[#allocation11 + $0x1b0] sm:$0xff]
        %v2665 = vld [vmem:[#allocation11 + $0x1b8] sm:$0xff]
        %v2666 = vld [vmem:[#allocation11 + $0x1c0] sm:$0xff]
        %v2667 = vld [vmem:[#allocation11 + $0x1c8] sm:$0xff]
        %v2668 = vld [vmem:[#allocation11 + $0x1d0] sm:$0xff]
        %v2669 = vld [vmem:[#allocation11 + $0x1d8] sm:$0xff]
        %v2670 = vld [vmem:[#allocation11 + $0x1e0] sm:$0xff]
        %v2671 = vld [vmem:[#allocation11 + $0x1e8] sm:$0xff]
        %v2672 = vld [vmem:[#allocation11 + $0x1f0] sm:$0xff]
        %v2673 = vld [vmem:[#allocation11 + $0x1f8] sm:$0xff]
        %v2674 = vld [vmem:[#allocation11 + $0x200] sm:$0xff]
        %v2675 = vld [vmem:[#allocation11 + $0x208] sm:$0xff]
        %v2676 = vld [vmem:[#allocation11 + $0x210] sm:$0xff]
        %v2677 = vld [vmem:[#allocation11 + $0x218] sm:$0xff]
        %v2678 = vld [vmem:[#allocation11 + $0x220] sm:$0xff]
        %v2679 = vld [vmem:[#allocation11 + $0x228] sm:$0xff]
        %v2680 = vld [vmem:[#allocation11 + $0x230] sm:$0xff]
        %v2681 = vld [vmem:[#allocation11 + $0x238] sm:$0xff]
        %v2682 = vld [vmem:[#allocation11 + $0x240] sm:$0xff]
        %v2683 = vld [vmem:[#allocation11 + $0x248] sm:$0xff]
        %v2684 = vld [vmem:[#allocation11 + $0x250] sm:$0xff]
        %v2685 = vld [vmem:[#allocation11 + $0x258] sm:$0xff]
        %v2686 = vld [vmem:[#allocation11 + $0x260] sm:$0xff]
        %v2687 = vld [vmem:[#allocation11 + $0x268] sm:$0xff]
        %v2688 = vld [vmem:[#allocation11 + $0x270] sm:$0xff]
        %v2689 = vld [vmem:[#allocation11 + $0x278] sm:$0xff]
        %v2690 = vld [vmem:[#allocation11 + $0x280] sm:$0xff]
        %v2691 = vld [vmem:[#allocation11 + $0x288] sm:$0xff]
        %v2692 = vld [vmem:[#allocation11 + $0x290] sm:$0xff]
        %v2693 = vld [vmem:[#allocation11 + $0x298] sm:$0xff]
        %v2694 = vld [vmem:[#allocation11 + $0x2a0] sm:$0xff]
        %v2695 = vld [vmem:[#allocation11 + $0x2a8] sm:$0xff]
        %v2696 = vld [vmem:[#allocation11 + $0x2b0] sm:$0xff]
        %v2697 = vld [vmem:[#allocation11 + $0x2b8] sm:$0xff]
        %v2698 = vld [vmem:[#allocation11 + $0x2c0] sm:$0xff]
        %v2699 = vld [vmem:[#allocation11 + $0x2c8] sm:$0xff]
        %v2700 = vld [vmem:[#allocation11 + $0x2d0] sm:$0xff]
        %v2701 = vld [vmem:[#allocation11 + $0x2d8] sm:$0xff]
        %v2702 = vld [vmem:[#allocation11 + $0x2e0] sm:$0xff]
        %v2703 = vld [vmem:[#allocation11 + $0x2e8] sm:$0xff]
        %v2704 = vld [vmem:[#allocation11 + $0x2f0] sm:$0xff]
        %v2705 = vld [vmem:[#allocation11 + $0x2f8] sm:$0xff]
        %v2706 = vld [vmem:[#allocation11 + $0x300] sm:$0xff]
        %v2707 = vld [vmem:[#allocation11 + $0x308] sm:$0xff]
        %v2708 = vld [vmem:[#allocation11 + $0x310] sm:$0xff]
        %v2709 = vld [vmem:[#allocation11 + $0x318] sm:$0xff]
        %v2710 = vld [vmem:[#allocation11 + $0x320] sm:$0xff]
        %v2711 = vld [vmem:[#allocation11 + $0x328] sm:$0xff]
        %v2712 = vld [vmem:[#allocation11 + $0x330] sm:$0xff]
        %v2713 = vld [vmem:[#allocation11 + $0x338] sm:$0xff]
        %v2714 = vld [vmem:[#allocation11 + $0x340] sm:$0xff]
        %v2715 = vld [vmem:[#allocation11 + $0x348] sm:$0xff]
        %v2716 = vld [vmem:[#allocation11 + $0x350] sm:$0xff]
        %v2717 = vld [vmem:[#allocation11 + $0x358] sm:$0xff]
        %v2718 = vld [vmem:[#allocation11 + $0x360] sm:$0xff]
        %v2719 = vld [vmem:[#allocation11 + $0x368] sm:$0xff]
        %v2720 = vld [vmem:[#allocation11 + $0x370] sm:$0xff]
        %v2721 = vld [vmem:[#allocation11 + $0x378] sm:$0xff]
        %v2722 = vld [vmem:[#allocation11 + $0x380] sm:$0xff]
        %v2723 = vld [vmem:[#allocation11 + $0x388] sm:$0xff]
        %v2724 = vld [vmem:[#allocation11 + $0x390] sm:$0xff]
        %v2725 = vld [vmem:[#allocation11 + $0x398] sm:$0xff]
        %v2726 = vld [vmem:[#allocation11 + $0x3a0] sm:$0xff]
        %v2727 = vld [vmem:[#allocation11 + $0x3a8] sm:$0xff]
        %v2728 = vld [vmem:[#allocation11 + $0x3b0] sm:$0xff]
        %v2729 = vld [vmem:[#allocation11 + $0x3b8] sm:$0xff]
        %v2730 = vld [vmem:[#allocation11 + $0x3c0] sm:$0xff]
        %v2731 = vld [vmem:[#allocation11 + $0x3c8] sm:$0xff]
        %v2732 = vld [vmem:[#allocation11 + $0x3d0] sm:$0xff]
        %v2733 = vld [vmem:[#allocation11 + $0x3d8] sm:$0xff]
        %v2734 = vld [vmem:[#allocation11 + $0x3e0] sm:$0xff]
        %v2735 = vld [vmem:[#allocation11 + $0x3e8] sm:$0xff]
        %v2736 = vld [vmem:[#allocation11 + $0x3f0] sm:$0xff]
        %v2737 = vld [vmem:[#allocation11 + $0x3f8] sm:$0xff]
        %v2738 = vld [vmem:[%s9] sm:$0xf]
        %v2740 = vlaneseq
        %v2741 = vshrl.u32 %v2740, 7
        %v2742 = vsub.s32 0, %v2741
        %v2743 = vrot.slane %v2738, %v2742
        %v2744 = vlaneseq
        %v2745 = vshrl.u32 %v2744, 7
        %v2746 = vsub.s32 1, %v2745
        %v2747 = vrot.slane %v2738, %v2746
        %v2748 = vlaneseq
        %v2749 = vshrl.u32 %v2748, 7
        %v2750 = vsub.s32 2, %v2749
        %v2751 = vrot.slane %v2738, %v2750
        %v2752 = vlaneseq
        %v2753 = vshrl.u32 %v2752, 7
        %v2754 = vsub.s32 3, %v2753
        %v2755 = vrot.slane %v2738, %v2754
        %v2888 = vunpack.c.l.b16 %v2610
        %v2889 = vunpack.c.h.b16 %v2610
        %v2890 = vunpack.c.l.b16 %v2611
        %v2891 = vunpack.c.h.b16 %v2611
        %v2892 = vunpack.c.l.b16 %v2612
        %v2893 = vunpack.c.h.b16 %v2612
        %v2894 = vunpack.c.l.b16 %v2613
        %v2895 = vunpack.c.h.b16 %v2613
        %v2896 = vunpack.c.l.b16 %v2614
        %v2897 = vunpack.c.h.b16 %v2614
        %v2898 = vunpack.c.l.b16 %v2615
        %v2899 = vunpack.c.h.b16 %v2615
        %v2900 = vunpack.c.l.b16 %v2616
        %v2901 = vunpack.c.h.b16 %v2616
        %v2902 = vunpack.c.l.b16 %v2617
        %v2903 = vunpack.c.h.b16 %v2617
        %v2904 = vunpack.c.l.b16 %v2618
        %v2905 = vunpack.c.h.b16 %v2618
        %v2906 = vunpack.c.l.b16 %v2619
        %v2907 = vunpack.c.h.b16 %v2619
        %v2908 = vunpack.c.l.b16 %v2620
        %v2909 = vunpack.c.h.b16 %v2620
        %v2910 = vunpack.c.l.b16 %v2621
        %v2911 = vunpack.c.h.b16 %v2621
        %v2912 = vunpack.c.l.b16 %v2622
        %v2913 = vunpack.c.h.b16 %v2622
        %v2914 = vunpack.c.l.b16 %v2623
        %v2915 = vunpack.c.h.b16 %v2623
        %v2916 = vunpack.c.l.b16 %v2624
        %v2917 = vunpack.c.h.b16 %v2624
        %v2918 = vunpack.c.l.b16 %v2625
        %v2919 = vunpack.c.h.b16 %v2625
        %v2920 = vunpack.c.l.b16 %v2626
        %v2921 = vunpack.c.h.b16 %v2626
        %v2922 = vunpack.c.l.b16 %v2627
        %v2923 = vunpack.c.h.b16 %v2627
        %v2924 = vunpack.c.l.b16 %v2628
        %v2925 = vunpack.c.h.b16 %v2628
        %v2926 = vunpack.c.l.b16 %v2629
        %v2927 = vunpack.c.h.b16 %v2629
        %v2928 = vunpack.c.l.b16 %v2630
        %v2929 = vunpack.c.h.b16 %v2630
        %v2930 = vunpack.c.l.b16 %v2631
        %v2931 = vunpack.c.h.b16 %v2631
        %v2932 = vunpack.c.l.b16 %v2632
        %v2933 = vunpack.c.h.b16 %v2632
        %v2934 = vunpack.c.l.b16 %v2633
        %v2935 = vunpack.c.h.b16 %v2633
        %v2936 = vunpack.c.l.b16 %v2634
        %v2937 = vunpack.c.h.b16 %v2634
        %v2938 = vunpack.c.l.b16 %v2635
        %v2939 = vunpack.c.h.b16 %v2635
        %v2940 = vunpack.c.l.b16 %v2636
        %v2941 = vunpack.c.h.b16 %v2636
        %v2942 = vunpack.c.l.b16 %v2637
        %v2943 = vunpack.c.h.b16 %v2637
        %v2944 = vunpack.c.l.b16 %v2638
        %v2945 = vunpack.c.h.b16 %v2638
        %v2946 = vunpack.c.l.b16 %v2639
        %v2947 = vunpack.c.h.b16 %v2639
        %v2948 = vunpack.c.l.b16 %v2640
        %v2949 = vunpack.c.h.b16 %v2640
        %v2950 = vunpack.c.l.b16 %v2641
        %v2951 = vunpack.c.h.b16 %v2641
        %v2952 = vunpack.c.l.b16 %v2642
        %v2953 = vunpack.c.h.b16 %v2642
        %v2954 = vunpack.c.l.b16 %v2643
        %v2955 = vunpack.c.h.b16 %v2643
        %v2956 = vunpack.c.l.b16 %v2644
        %v2957 = vunpack.c.h.b16 %v2644
        %v2958 = vunpack.c.l.b16 %v2645
        %v2959 = vunpack.c.h.b16 %v2645
        %v2960 = vunpack.c.l.b16 %v2646
        %v2961 = vunpack.c.h.b16 %v2646
        %v2962 = vunpack.c.l.b16 %v2647
        %v2963 = vunpack.c.h.b16 %v2647
        %v2964 = vunpack.c.l.b16 %v2648
        %v2965 = vunpack.c.h.b16 %v2648
        %v2966 = vunpack.c.l.b16 %v2649
        %v2967 = vunpack.c.h.b16 %v2649
        %v2968 = vunpack.c.l.b16 %v2650
        %v2969 = vunpack.c.h.b16 %v2650
        %v2970 = vunpack.c.l.b16 %v2651
        %v2971 = vunpack.c.h.b16 %v2651
        %v2972 = vunpack.c.l.b16 %v2652
        %v2973 = vunpack.c.h.b16 %v2652
        %v2974 = vunpack.c.l.b16 %v2653
        %v2975 = vunpack.c.h.b16 %v2653
        %v2976 = vunpack.c.l.b16 %v2654
        %v2977 = vunpack.c.h.b16 %v2654
        %v2978 = vunpack.c.l.b16 %v2655
        %v2979 = vunpack.c.h.b16 %v2655
        %v2980 = vunpack.c.l.b16 %v2656
        %v2981 = vunpack.c.h.b16 %v2656
        %v2982 = vunpack.c.l.b16 %v2657
        %v2983 = vunpack.c.h.b16 %v2657
        %v2984 = vunpack.c.l.b16 %v2658
        %v2985 = vunpack.c.h.b16 %v2658
        %v2986 = vunpack.c.l.b16 %v2659
        %v2987 = vunpack.c.h.b16 %v2659
        %v2988 = vunpack.c.l.b16 %v2660
        %v2989 = vunpack.c.h.b16 %v2660
        %v2990 = vunpack.c.l.b16 %v2661
        %v2991 = vunpack.c.h.b16 %v2661
        %v2992 = vunpack.c.l.b16 %v2662
        %v2993 = vunpack.c.h.b16 %v2662
        %v2994 = vunpack.c.l.b16 %v2663
        %v2995 = vunpack.c.h.b16 %v2663
        %v2996 = vunpack.c.l.b16 %v2664
        %v2997 = vunpack.c.h.b16 %v2664
        %v2998 = vunpack.c.l.b16 %v2665
        %v2999 = vunpack.c.h.b16 %v2665
        %v3000 = vunpack.c.l.b16 %v2666
        %v3001 = vunpack.c.h.b16 %v2666
        %v3002 = vunpack.c.l.b16 %v2667
        %v3003 = vunpack.c.h.b16 %v2667
        %v3004 = vunpack.c.l.b16 %v2668
        %v3005 = vunpack.c.h.b16 %v2668
        %v3006 = vunpack.c.l.b16 %v2669
        %v3007 = vunpack.c.h.b16 %v2669
        %v3008 = vunpack.c.l.b16 %v2670
        %v3009 = vunpack.c.h.b16 %v2670
        %v3010 = vunpack.c.l.b16 %v2671
        %v3011 = vunpack.c.h.b16 %v2671
        %v3012 = vunpack.c.l.b16 %v2672
        %v3013 = vunpack.c.h.b16 %v2672
        %v3014 = vunpack.c.l.b16 %v2673
        %v3015 = vunpack.c.h.b16 %v2673
        %v3016 = vunpack.c.l.b16 %v2674
        %v3017 = vunpack.c.h.b16 %v2674
        %v3018 = vunpack.c.l.b16 %v2675
        %v3019 = vunpack.c.h.b16 %v2675
        %v3020 = vunpack.c.l.b16 %v2676
        %v3021 = vunpack.c.h.b16 %v2676
        %v3022 = vunpack.c.l.b16 %v2677
        %v3023 = vunpack.c.h.b16 %v2677
        %v3024 = vunpack.c.l.b16 %v2678
        %v3025 = vunpack.c.h.b16 %v2678
        %v3026 = vunpack.c.l.b16 %v2679
        %v3027 = vunpack.c.h.b16 %v2679
        %v3028 = vunpack.c.l.b16 %v2680
        %v3029 = vunpack.c.h.b16 %v2680
        %v3030 = vunpack.c.l.b16 %v2681
        %v3031 = vunpack.c.h.b16 %v2681
        %v3032 = vunpack.c.l.b16 %v2682
        %v3033 = vunpack.c.h.b16 %v2682
        %v3034 = vunpack.c.l.b16 %v2683
        %v3035 = vunpack.c.h.b16 %v2683
        %v3036 = vunpack.c.l.b16 %v2684
        %v3037 = vunpack.c.h.b16 %v2684
        %v3038 = vunpack.c.l.b16 %v2685
        %v3039 = vunpack.c.h.b16 %v2685
        %v3040 = vunpack.c.l.b16 %v2686
        %v3041 = vunpack.c.h.b16 %v2686
        %v3042 = vunpack.c.l.b16 %v2687
        %v3043 = vunpack.c.h.b16 %v2687
        %v3044 = vunpack.c.l.b16 %v2688
        %v3045 = vunpack.c.h.b16 %v2688
        %v3046 = vunpack.c.l.b16 %v2689
        %v3047 = vunpack.c.h.b16 %v2689
        %v3048 = vunpack.c.l.b16 %v2690
        %v3049 = vunpack.c.h.b16 %v2690
        %v3050 = vunpack.c.l.b16 %v2691
        %v3051 = vunpack.c.h.b16 %v2691
        %v3052 = vunpack.c.l.b16 %v2692
        %v3053 = vunpack.c.h.b16 %v2692
        %v3054 = vunpack.c.l.b16 %v2693
        %v3055 = vunpack.c.h.b16 %v2693
        %v3056 = vunpack.c.l.b16 %v2694
        %v3057 = vunpack.c.h.b16 %v2694
        %v3058 = vunpack.c.l.b16 %v2695
        %v3059 = vunpack.c.h.b16 %v2695
        %v3060 = vunpack.c.l.b16 %v2696
        %v3061 = vunpack.c.h.b16 %v2696
        %v3062 = vunpack.c.l.b16 %v2697
        %v3063 = vunpack.c.h.b16 %v2697
        %v3064 = vunpack.c.l.b16 %v2698
        %v3065 = vunpack.c.h.b16 %v2698
        %v3066 = vunpack.c.l.b16 %v2699
        %v3067 = vunpack.c.h.b16 %v2699
        %v3068 = vunpack.c.l.b16 %v2700
        %v3069 = vunpack.c.h.b16 %v2700
        %v3070 = vunpack.c.l.b16 %v2701
        %v3071 = vunpack.c.h.b16 %v2701
        %v3072 = vunpack.c.l.b16 %v2702
        %v3073 = vunpack.c.h.b16 %v2702
        %v3074 = vunpack.c.l.b16 %v2703
        %v3075 = vunpack.c.h.b16 %v2703
        %v3076 = vunpack.c.l.b16 %v2704
        %v3077 = vunpack.c.h.b16 %v2704
        %v3078 = vunpack.c.l.b16 %v2705
        %v3079 = vunpack.c.h.b16 %v2705
        %v3080 = vunpack.c.l.b16 %v2706
        %v3081 = vunpack.c.h.b16 %v2706
        %v3082 = vunpack.c.l.b16 %v2707
        %v3083 = vunpack.c.h.b16 %v2707
        %v3084 = vunpack.c.l.b16 %v2708
        %v3085 = vunpack.c.h.b16 %v2708
        %v3086 = vunpack.c.l.b16 %v2709
        %v3087 = vunpack.c.h.b16 %v2709
        %v3088 = vunpack.c.l.b16 %v2710
        %v3089 = vunpack.c.h.b16 %v2710
        %v3090 = vunpack.c.l.b16 %v2711
        %v3091 = vunpack.c.h.b16 %v2711
        %v3092 = vunpack.c.l.b16 %v2712
        %v3093 = vunpack.c.h.b16 %v2712
        %v3094 = vunpack.c.l.b16 %v2713
        %v3095 = vunpack.c.h.b16 %v2713
        %v3096 = vunpack.c.l.b16 %v2714
        %v3097 = vunpack.c.h.b16 %v2714
        %v3098 = vunpack.c.l.b16 %v2715
        %v3099 = vunpack.c.h.b16 %v2715
        %v3100 = vunpack.c.l.b16 %v2716
        %v3101 = vunpack.c.h.b16 %v2716
        %v3102 = vunpack.c.l.b16 %v2717
        %v3103 = vunpack.c.h.b16 %v2717
        %v3104 = vunpack.c.l.b16 %v2718
        %v3105 = vunpack.c.h.b16 %v2718
        %v3106 = vunpack.c.l.b16 %v2719
        %v3107 = vunpack.c.h.b16 %v2719
        %v3108 = vunpack.c.l.b16 %v2720
        %v3109 = vunpack.c.h.b16 %v2720
        %v3110 = vunpack.c.l.b16 %v2721
        %v3111 = vunpack.c.h.b16 %v2721
        %v3112 = vunpack.c.l.b16 %v2722
        %v3113 = vunpack.c.h.b16 %v2722
        %v3114 = vunpack.c.l.b16 %v2723
        %v3115 = vunpack.c.h.b16 %v2723
        %v3116 = vunpack.c.l.b16 %v2724
        %v3117 = vunpack.c.h.b16 %v2724
        %v3118 = vunpack.c.l.b16 %v2725
        %v3119 = vunpack.c.h.b16 %v2725
        %v3120 = vunpack.c.l.b16 %v2726
        %v3121 = vunpack.c.h.b16 %v2726
        %v3122 = vunpack.c.l.b16 %v2727
        %v3123 = vunpack.c.h.b16 %v2727
        %v3124 = vunpack.c.l.b16 %v2728
        %v3125 = vunpack.c.h.b16 %v2728
        %v3126 = vunpack.c.l.b16 %v2729
        %v3127 = vunpack.c.h.b16 %v2729
        %v3128 = vunpack.c.l.b16 %v2730
        %v3129 = vunpack.c.h.b16 %v2730
        %v3130 = vunpack.c.l.b16 %v2731
        %v3131 = vunpack.c.h.b16 %v2731
        %v3132 = vunpack.c.l.b16 %v2732
        %v3133 = vunpack.c.h.b16 %v2732
        %v3134 = vunpack.c.l.b16 %v2733
        %v3135 = vunpack.c.h.b16 %v2733
        %v3136 = vunpack.c.l.b16 %v2734
        %v3137 = vunpack.c.h.b16 %v2734
        %v3138 = vunpack.c.l.b16 %v2735
        %v3139 = vunpack.c.h.b16 %v2735
        %v3140 = vunpack.c.l.b16 %v2736
        %v3141 = vunpack.c.h.b16 %v2736
        %v3142 = vunpack.c.l.b16 %v2737
        %v3143 = vunpack.c.h.b16 %v2737
        %v3144 = vpack.c.b16 %v2892, %v2888
        %v3145 = vpack.c.b16 %v2893, %v2889
        %v3146 = vpack.c.b16 %v2894, %v2890
        %v3147 = vpack.c.b16 %v2895, %v2891
        %v3148 = vpack.c.b16 %v2900, %v2896
        %v3149 = vpack.c.b16 %v2901, %v2897
        %v3150 = vpack.c.b16 %v2902, %v2898
        %v3151 = vpack.c.b16 %v2903, %v2899
        %v3152 = vpack.c.b16 %v2908, %v2904
        %v3153 = vpack.c.b16 %v2909, %v2905
        %v3154 = vpack.c.b16 %v2910, %v2906
        %v3155 = vpack.c.b16 %v2911, %v2907
        %v3156 = vpack.c.b16 %v2916, %v2912
        %v3157 = vpack.c.b16 %v2917, %v2913
        %v3158 = vpack.c.b16 %v2918, %v2914
        %v3159 = vpack.c.b16 %v2919, %v2915
        %v3160 = vpack.c.b16 %v2924, %v2920
        %v3161 = vpack.c.b16 %v2925, %v2921
        %v3162 = vpack.c.b16 %v2926, %v2922
        %v3163 = vpack.c.b16 %v2927, %v2923
        %v3164 = vpack.c.b16 %v2932, %v2928
        %v3165 = vpack.c.b16 %v2933, %v2929
        %v3166 = vpack.c.b16 %v2934, %v2930
        %v3167 = vpack.c.b16 %v2935, %v2931
        %v3168 = vpack.c.b16 %v2940, %v2936
        %v3169 = vpack.c.b16 %v2941, %v2937
        %v3170 = vpack.c.b16 %v2942, %v2938
        %v3171 = vpack.c.b16 %v2943, %v2939
        %v3172 = vpack.c.b16 %v2948, %v2944
        %v3173 = vpack.c.b16 %v2949, %v2945
        %v3174 = vpack.c.b16 %v2950, %v2946
        %v3175 = vpack.c.b16 %v2951, %v2947
        %v3176 = vpack.c.b16 %v2956, %v2952
        %v3177 = vpack.c.b16 %v2957, %v2953
        %v3178 = vpack.c.b16 %v2958, %v2954
        %v3179 = vpack.c.b16 %v2959, %v2955
        %v3180 = vpack.c.b16 %v2964, %v2960
        %v3181 = vpack.c.b16 %v2965, %v2961
        %v3182 = vpack.c.b16 %v2966, %v2962
        %v3183 = vpack.c.b16 %v2967, %v2963
        %v3184 = vpack.c.b16 %v2972, %v2968
        %v3185 = vpack.c.b16 %v2973, %v2969
        %v3186 = vpack.c.b16 %v2974, %v2970
        %v3187 = vpack.c.b16 %v2975, %v2971
        %v3188 = vpack.c.b16 %v2980, %v2976
        %v3189 = vpack.c.b16 %v2981, %v2977
        %v3190 = vpack.c.b16 %v2982, %v2978
        %v3191 = vpack.c.b16 %v2983, %v2979
        %v3192 = vpack.c.b16 %v2988, %v2984
        %v3193 = vpack.c.b16 %v2989, %v2985
        %v3194 = vpack.c.b16 %v2990, %v2986
        %v3195 = vpack.c.b16 %v2991, %v2987
        %v3196 = vpack.c.b16 %v2996, %v2992
        %v3197 = vpack.c.b16 %v2997, %v2993
        %v3198 = vpack.c.b16 %v2998, %v2994
        %v3199 = vpack.c.b16 %v2999, %v2995
        %v3200 = vpack.c.b16 %v3004, %v3000
        %v3201 = vpack.c.b16 %v3005, %v3001
        %v3202 = vpack.c.b16 %v3006, %v3002
        %v3203 = vpack.c.b16 %v3007, %v3003
        %v3204 = vpack.c.b16 %v3012, %v3008
        %v3205 = vpack.c.b16 %v3013, %v3009
        %v3206 = vpack.c.b16 %v3014, %v3010
        %v3207 = vpack.c.b16 %v3015, %v3011
        %v3208 = vpack.c.b16 %v3020, %v3016
        %v3209 = vpack.c.b16 %v3021, %v3017
        %v3210 = vpack.c.b16 %v3022, %v3018
        %v3211 = vpack.c.b16 %v3023, %v3019
        %v3212 = vpack.c.b16 %v3028, %v3024
        %v3213 = vpack.c.b16 %v3029, %v3025
        %v3214 = vpack.c.b16 %v3030, %v3026
        %v3215 = vpack.c.b16 %v3031, %v3027
        %v3216 = vpack.c.b16 %v3036, %v3032
        %v3217 = vpack.c.b16 %v3037, %v3033
        %v3218 = vpack.c.b16 %v3038, %v3034
        %v3219 = vpack.c.b16 %v3039, %v3035
        %v3220 = vpack.c.b16 %v3044, %v3040
        %v3221 = vpack.c.b16 %v3045, %v3041
        %v3222 = vpack.c.b16 %v3046, %v3042
        %v3223 = vpack.c.b16 %v3047, %v3043
        %v3224 = vpack.c.b16 %v3052, %v3048
        %v3225 = vpack.c.b16 %v3053, %v3049
        %v3226 = vpack.c.b16 %v3054, %v3050
        %v3227 = vpack.c.b16 %v3055, %v3051
        %v3228 = vpack.c.b16 %v3060, %v3056
        %v3229 = vpack.c.b16 %v3061, %v3057
        %v3230 = vpack.c.b16 %v3062, %v3058
        %v3231 = vpack.c.b16 %v3063, %v3059
        %v3232 = vpack.c.b16 %v3068, %v3064
        %v3233 = vpack.c.b16 %v3069, %v3065
        %v3234 = vpack.c.b16 %v3070, %v3066
        %v3235 = vpack.c.b16 %v3071, %v3067
        %v3236 = vpack.c.b16 %v3076, %v3072
        %v3237 = vpack.c.b16 %v3077, %v3073
        %v3238 = vpack.c.b16 %v3078, %v3074
        %v3239 = vpack.c.b16 %v3079, %v3075
        %v3240 = vpack.c.b16 %v3084, %v3080
        %v3241 = vpack.c.b16 %v3085, %v3081
        %v3242 = vpack.c.b16 %v3086, %v3082
        %v3243 = vpack.c.b16 %v3087, %v3083
        %v3244 = vpack.c.b16 %v3092, %v3088
        %v3245 = vpack.c.b16 %v3093, %v3089
        %v3246 = vpack.c.b16 %v3094, %v3090
        %v3247 = vpack.c.b16 %v3095, %v3091
        %v3248 = vpack.c.b16 %v3100, %v3096
        %v3249 = vpack.c.b16 %v3101, %v3097
        %v3250 = vpack.c.b16 %v3102, %v3098
        %v3251 = vpack.c.b16 %v3103, %v3099
        %v3252 = vpack.c.b16 %v3108, %v3104
        %v3253 = vpack.c.b16 %v3109, %v3105
        %v3254 = vpack.c.b16 %v3110, %v3106
        %v3255 = vpack.c.b16 %v3111, %v3107
        %v3256 = vpack.c.b16 %v3116, %v3112
        %v3257 = vpack.c.b16 %v3117, %v3113
        %v3258 = vpack.c.b16 %v3118, %v3114
        %v3259 = vpack.c.b16 %v3119, %v3115
        %v3260 = vpack.c.b16 %v3124, %v3120
        %v3261 = vpack.c.b16 %v3125, %v3121
        %v3262 = vpack.c.b16 %v3126, %v3122
        %v3263 = vpack.c.b16 %v3127, %v3123
        %v3264 = vpack.c.b16 %v3132, %v3128
        %v3265 = vpack.c.b16 %v3133, %v3129
        %v3266 = vpack.c.b16 %v3134, %v3130
        %v3267 = vpack.c.b16 %v3135, %v3131
        %v3268 = vpack.c.b16 %v3140, %v3136
        %v3269 = vpack.c.b16 %v3141, %v3137
        %v3270 = vpack.c.b16 %v3142, %v3138
        %v3271 = vpack.c.b16 %v3143, %v3139
        %3400 = vmatprep.subr.bf16.mxu0 %v3145
        %3401 = vmatpush1.bf16.msra.mxu0 %v3144
        %3402 = vmatprep.subr.bf16.mxu0 %v3149
        %3403 = vmatpush1.bf16.msra.mxu0 %v3148
        %3404 = vmatprep.subr.bf16.mxu0 %v3153
        %3405 = vmatpush1.bf16.msra.mxu0 %v3152
        %3406 = vmatprep.subr.bf16.mxu0 %v3157
        %3407 = vmatpush1.bf16.msra.mxu0 %v3156
        %3408 = vmatprep.subr.bf16.mxu0 %v3161
        %3409 = vmatpush1.bf16.msra.mxu0 %v3160
        %3410 = vmatprep.subr.bf16.mxu0 %v3165
        %3411 = vmatpush1.bf16.msra.mxu0 %v3164
        %3412 = vmatprep.subr.bf16.mxu0 %v3169
        %3413 = vmatpush1.bf16.msra.mxu0 %v3168
        %3414 = vmatprep.subr.bf16.mxu0 %v3173
        %3415 = vmatpush1.bf16.msra.mxu0 %v3172
        %3416 = vmatprep.subr.bf16.mxu0 %v3177
        %3417 = vmatpush1.bf16.msra.mxu0 %v3176
        %3418 = vmatprep.subr.bf16.mxu0 %v3181
        %3419 = vmatpush1.bf16.msra.mxu0 %v3180
        %3420 = vmatprep.subr.bf16.mxu0 %v3185
        %3421 = vmatpush1.bf16.msra.mxu0 %v3184
        %3422 = vmatprep.subr.bf16.mxu0 %v3189
        %3423 = vmatpush1.bf16.msra.mxu0 %v3188
        %3424 = vmatprep.subr.bf16.mxu0 %v3193
        %3425 = vmatpush1.bf16.msra.mxu0 %v3192
        %3426 = vmatprep.subr.bf16.mxu0 %v3197
        %3427 = vmatpush1.bf16.msra.mxu0 %v3196
        %3428 = vmatprep.subr.bf16.mxu0 %v3201
        %3429 = vmatpush1.bf16.msra.mxu0 %v3200
        %3430 = vmatprep.subr.bf16.mxu0 %v3205
        %3431 = vmatpush1.bf16.msra.mxu0 %v3204
        %3432 = vmatprep.mubr.bf16.mxu0 %v699
        %3433 = vmatmul.mubr.bf16.gmra.mrb[0].mxu0 %v698
        %v3434 = vpop.f32.mrb[0].mxu0
        %v3435 = vadd.f32 %v2743, %v3434
        %v3436 = vpop.f32.mrb[0].mxu0
        %v3437 = vadd.f32 %v2747, %v3436
        %v3438 = vpop.f32.mrb[0].mxu0
        %v3439 = vpop.f32.mrb[0].mxu0
        %3440 = vdwg.mxu0
        %3441 = vmatprep.subr.bf16.mxu0 %v3209
        %3442 = vmatpush1.bf16.msra.mxu0 %v3208
        %3443 = vmatprep.subr.bf16.mxu0 %v3213
        %3444 = vmatpush1.bf16.msra.mxu0 %v3212
        %3445 = vmatprep.subr.bf16.mxu0 %v3217
        %3446 = vmatpush1.bf16.msra.mxu0 %v3216
        %3447 = vmatprep.subr.bf16.mxu0 %v3221
        %3448 = vmatpush1.bf16.msra.mxu0 %v3220
        %3449 = vmatprep.subr.bf16.mxu0 %v3225
        %3450 = vmatpush1.bf16.msra.mxu0 %v3224
        %3451 = vmatprep.subr.bf16.mxu0 %v3229
        %3452 = vmatpush1.bf16.msra.mxu0 %v3228
        %3453 = vmatprep.subr.bf16.mxu0 %v3233
        %3454 = vmatpush1.bf16.msra.mxu0 %v3232
        %3455 = vmatprep.subr.bf16.mxu0 %v3237
        %3456 = vmatpush1.bf16.msra.mxu0 %v3236
        %3457 = vmatprep.subr.bf16.mxu0 %v3241
        %3458 = vmatpush1.bf16.msra.mxu0 %v3240
        %3459 = vmatprep.subr.bf16.mxu0 %v3245
        %3460 = vmatpush1.bf16.msra.mxu0 %v3244
        %3461 = vmatprep.subr.bf16.mxu0 %v3249
        %3462 = vmatpush1.bf16.msra.mxu0 %v3248
        %3463 = vmatprep.subr.bf16.mxu0 %v3253
        %3464 = vmatpush1.bf16.msra.mxu0 %v3252
        %3465 = vmatprep.subr.bf16.mxu0 %v3257
        %3466 = vmatpush1.bf16.msra.mxu0 %v3256
        %3467 = vmatprep.subr.bf16.mxu0 %v3261
        %3468 = vmatpush1.bf16.msra.mxu0 %v3260
        %3469 = vmatprep.subr.bf16.mxu0 %v3265
        %3470 = vmatpush1.bf16.msra.mxu0 %v3264
        %3471 = vmatprep.subr.bf16.mxu0 %v3269
        %3472 = vmatpush1.bf16.msra.mxu0 %v3268
        %3473 = vmatprep.mubr.bf16.mxu0 %v701
        %3474 = vmatmul.mubr.bf16.gmra.mrb[0].mxu0 %v700
        %v3475 = vpop.f32.mrb[0].mxu0
        %v3476 = vadd.f32 %v3435, %v3475
        %v3477 = vpop.f32.mrb[0].mxu0
        %v3478 = vadd.f32 %v3437, %v3477
        %v3479 = vpop.f32.mrb[0].mxu0
        %v3480 = vpop.f32.mrb[0].mxu0
        %3481 = vdwg.mxu0
        %3482 = vmatprep.subr.bf16.mxu0 %v3147
        %3483 = vmatpush1.bf16.msra.mxu0 %v3146
        %3484 = vmatprep.subr.bf16.mxu0 %v3151
        %3485 = vmatpush1.bf16.msra.mxu0 %v3150
        %3486 = vmatprep.subr.bf16.mxu0 %v3155
        %3487 = vmatpush1.bf16.msra.mxu0 %v3154
        %3488 = vmatprep.subr.bf16.mxu0 %v3159
        %3489 = vmatpush1.bf16.msra.mxu0 %v3158
        %3490 = vmatprep.subr.bf16.mxu0 %v3163
        %3491 = vmatpush1.bf16.msra.mxu0 %v3162
        %3492 = vmatprep.subr.bf16.mxu0 %v3167
        %3493 = vmatpush1.bf16.msra.mxu0 %v3166
        %3494 = vmatprep.subr.bf16.mxu0 %v3171
        %3495 = vmatpush1.bf16.msra.mxu0 %v3170
        %3496 = vmatprep.subr.bf16.mxu0 %v3175
        %3497 = vmatpush1.bf16.msra.mxu0 %v3174
        %3498 = vmatprep.subr.bf16.mxu0 %v3179
        %3499 = vmatpush1.bf16.msra.mxu0 %v3178
        %3500 = vmatprep.subr.bf16.mxu0 %v3183
        %3501 = vmatpush1.bf16.msra.mxu0 %v3182
        %3502 = vmatprep.subr.bf16.mxu0 %v3187
        %3503 = vmatpush1.bf16.msra.mxu0 %v3186
        %3504 = vmatprep.subr.bf16.mxu0 %v3191
        %3505 = vmatpush1.bf16.msra.mxu0 %v3190
        %3506 = vmatprep.subr.bf16.mxu0 %v3195
        %3507 = vmatpush1.bf16.msra.mxu0 %v3194
        %3508 = vmatprep.subr.bf16.mxu0 %v3199
        %3509 = vmatpush1.bf16.msra.mxu0 %v3198
        %3510 = vmatprep.subr.bf16.mxu0 %v3203
        %3511 = vmatpush1.bf16.msra.mxu0 %v3202
        %3512 = vmatprep.subr.bf16.mxu0 %v3207
        %3513 = vmatpush1.bf16.msra.mxu0 %v3206
        %3514 = vmatprep.mubr.bf16.mxu0 %v699
        %3515 = vmatmul.mubr.bf16.gmra.mrb[0].mxu0 %v698
        %v3516 = vpop.f32.mrb[0].mxu0
        %v3517 = vadd.f32 %v2751, %v3516
        %v3518 = vpop.f32.mrb[0].mxu0
        %v3519 = vadd.f32 %v2755, %v3518
        %v3520 = vpop.f32.mrb[0].mxu0
        %v3521 = vpop.f32.mrb[0].mxu0
        %3522 = vdwg.mxu0
        %3523 = vmatprep.subr.bf16.mxu0 %v3211
        %3524 = vmatpush1.bf16.msra.mxu0 %v3210
        %3525 = vmatprep.subr.bf16.mxu0 %v3215
        %3526 = vmatpush1.bf16.msra.mxu0 %v3214
        %3527 = vmatprep.subr.bf16.mxu0 %v3219
        %3528 = vmatpush1.bf16.msra.mxu0 %v3218
        %3529 = vmatprep.subr.bf16.mxu0 %v3223
        %3530 = vmatpush1.bf16.msra.mxu0 %v3222
        %3531 = vmatprep.subr.bf16.mxu0 %v3227
        %3532 = vmatpush1.bf16.msra.mxu0 %v3226
        %3533 = vmatprep.subr.bf16.mxu0 %v3231
        %3534 = vmatpush1.bf16.msra.mxu0 %v3230
        %3535 = vmatprep.subr.bf16.mxu0 %v3235
        %3536 = vmatpush1.bf16.msra.mxu0 %v3234
        %3537 = vmatprep.subr.bf16.mxu0 %v3239
        %3538 = vmatpush1.bf16.msra.mxu0 %v3238
        %3539 = vmatprep.subr.bf16.mxu0 %v3243
        %3540 = vmatpush1.bf16.msra.mxu0 %v3242
        %3541 = vmatprep.subr.bf16.mxu0 %v3247
        %3542 = vmatpush1.bf16.msra.mxu0 %v3246
        %3543 = vmatprep.subr.bf16.mxu0 %v3251
        %3544 = vmatpush1.bf16.msra.mxu0 %v3250
        %3545 = vmatprep.subr.bf16.mxu0 %v3255
        %3546 = vmatpush1.bf16.msra.mxu0 %v3254
        %3547 = vmatprep.subr.bf16.mxu0 %v3259
        %3548 = vmatpush1.bf16.msra.mxu0 %v3258
        %3549 = vmatprep.subr.bf16.mxu0 %v3263
        %3550 = vmatpush1.bf16.msra.mxu0 %v3262
        %3551 = vmatprep.subr.bf16.mxu0 %v3267
        %3552 = vmatpush1.bf16.msra.mxu0 %v3266
        %3553 = vmatprep.subr.bf16.mxu0 %v3271
        %3554 = vmatpush1.bf16.msra.mxu0 %v3270
        %3555 = vmatprep.mubr.bf16.mxu0 %v701
        %3556 = vmatmul.mubr.bf16.gmra.mrb[0].mxu0 %v700
        %v3557 = vpop.f32.mrb[0].mxu0
        %v3558 = vadd.f32 %v3517, %v3557
        %v3559 = vpop.f32.mrb[0].mxu0
        %v3560 = vadd.f32 %v3519, %v3559
        %v3561 = vpop.f32.mrb[0].mxu0
        %v3562 = vpop.f32.mrb[0].mxu0
        %3563 = vdwg.mxu0
        %v3564 = vlaneseq
        %v3565 = vshrl.u32 %v3564, 7
        %v3566 = vlaneseq
        %v3567 = vand.u32 %v3566, 127
        %vm3568 = vcmp.gt.s32.totalorder %v3567, %v3565
        %v3569 = vsel %vm3568, -1e+30, 0.0
        %3570 = vst [vmem:[%s648] sm:$0xff] %v1568
        %3571 = vst [vmem:[%s655] sm:$0xff] %v2522
        %3572 = vst [vmem:[%s662] sm:$0xff] %v3476
        %v3573 = vpack.c.bf16 %v1568, %v1568
        %v3574 = vpack.c.bf16 %v2522, %v2522
        %3575 = vmatprep.subr.bf16.mxu0 0
        %3576 = vmatpush1.bf16.xpose.msra.mxu0 %v3574
        %3577 = vmatprep.subr.bf16.mxu0 0
        %3578 = vmatpush1.bf16.xpose.msra.mxu0 0
        %3579 = vmatprep.subr.bf16.mxu0 0
        %3580 = vmatpush1.bf16.xpose.msra.mxu0 0
        %3581 = vmatprep.subr.bf16.mxu0 0
        %3582 = vmatpush1.bf16.xpose.msra.mxu0 0
        %3583 = vmatprep.subr.bf16.mxu0 0
        %3584 = vmatpush1.bf16.xpose.msra.mxu0 0
        %3585 = vmatprep.subr.bf16.mxu0 0
        %3586 = vmatpush1.bf16.xpose.msra.mxu0 0
        %3587 = vmatprep.subr.bf16.mxu0 0
        %3588 = vmatpush1.bf16.xpose.msra.mxu0 0
        %3589 = vmatprep.subr.bf16.mxu0 0
        %3590 = vmatpush1.bf16.xpose.msra.mxu0 0
        %3591 = vmatprep.subr.bf16.mxu0 0
        %3592 = vmatpush1.bf16.xpose.msra.mxu0 0
        %3593 = vmatprep.subr.bf16.mxu0 0
        %3594 = vmatpush1.bf16.xpose.msra.mxu0 0
        %3595 = vmatprep.subr.bf16.mxu0 0
        %3596 = vmatpush1.bf16.xpose.msra.mxu0 0
        %3597 = vmatprep.subr.bf16.mxu0 0
        %3598 = vmatpush1.bf16.xpose.msra.mxu0 0
        %3599 = vmatprep.subr.bf16.mxu0 0
        %3600 = vmatpush1.bf16.xpose.msra.mxu0 0
        %3601 = vmatprep.subr.bf16.mxu0 0
        %3602 = vmatpush1.bf16.xpose.msra.mxu0 0
        %3603 = vmatprep.subr.bf16.mxu0 0
        %3604 = vmatpush1.bf16.xpose.msra.mxu0 0
        %3605 = vmatprep.subr.bf16.mxu0 0
        %3606 = vmatpush1.bf16.xpose.msra.mxu0 0
        %3607 = vmatprep.mubr.bf16.mxu0 0
        %3608 = vmatmul.mubr.bf16.gmra.mrb[0].mxu0 %v3573
        %v3609 = vpop.f32.mrb[0].mxu0
        %v3610 = vadd.f32 0.0, %v3609
        %v3611 = vpop.f32.mrb[0].mxu0
        %v3612 = vpop.f32.mrb[0].mxu0
        %v3613 = vpop.f32.mrb[0].mxu0
        %3614 = vdwg.mxu0
        %v3615 = vmul.f32 %v3610, 0.088388346
        %v3616 = vadd.f32 %v3615, %v3569
        %vm3617 = vcmask 64512
        %v3618 = vsel %vm3617, %v3616, -inf
        %3619 = vmax.xlane.f32.xlu0 %v3618
        %v3620 = vpop.xlane.xlu0 %3619
        %v3621 = vsub.f32 %v3616, %v3620
        %v3622 = vmul.f32 %v3621, 1.442695
        %v3623 = vpow.pop %v3622
        %v3624 = vsel %vm3617, %v3623, 0.0
        %3625 = vadd.xlane.f32.xlu0 %v3624
        %v3626 = vpop.xlane.xlu0 %3625
        %v3627 = vrcp.pop %v3626
        %v3628 = vmul.f32 %v3623, %v3627
        %3629 = vst.msk [vmem:[%s669] sm:$0xff] %vm3617, %v3628
        %v3630 = vpack.c.bf16 %v3628, %v3628
        %v3631 = vpack.c.bf16 %v3476, %v3476
        %v3633 = vsel %vm3617, %v3630, 0
        %vm3635 = vcmask 1043456
        %v3637 = vsel %vm3635, %v3631, 0
        %3639 = vmatprep.subr.bf16.mxu0 0
        %3640 = vmatpush1.bf16.msra.mxu0 %v3637
        %3641 = vmatprep.subr.bf16.mxu0 0
        %3642 = vmatpush1.bf16.msra.mxu0 0
        %3643 = vmatprep.subr.bf16.mxu0 0
        %3644 = vmatpush1.bf16.msra.mxu0 0
        %3645 = vmatprep.subr.bf16.mxu0 0
        %3646 = vmatpush1.bf16.msra.mxu0 0
        %3647 = vmatprep.subr.bf16.mxu0 0
        %3648 = vmatpush1.bf16.msra.mxu0 0
        %3649 = vmatprep.subr.bf16.mxu0 0
        %3650 = vmatpush1.bf16.msra.mxu0 0
        %3651 = vmatprep.subr.bf16.mxu0 0
        %3652 = vmatpush1.bf16.msra.mxu0 0
        %3653 = vmatprep.subr.bf16.mxu0 0
        %3654 = vmatpush1.bf16.msra.mxu0 0
        %3655 = vmatprep.subr.bf16.mxu0 0
        %3656 = vmatpush1.bf16.msra.mxu0 0
        %3657 = vmatprep.subr.bf16.mxu0 0
        %3658 = vmatpush1.bf16.msra.mxu0 0
        %3659 = vmatprep.subr.bf16.mxu0 0
        %3660 = vmatpush1.bf16.msra.mxu0 0
        %3661 = vmatprep.subr.bf16.mxu0 0
        %3662 = vmatpush1.bf16.msra.mxu0 0
        %3663 = vmatprep.subr.bf16.mxu0 0
        %3664 = vmatpush1.bf16.msra.mxu0 0
        %3665 = vmatprep.subr.bf16.mxu0 0
        %3666 = vmatpush1.bf16.msra.mxu0 0
        %3667 = vmatprep.subr.bf16.mxu0 0
        %3668 = vmatpush1.bf16.msra.mxu0 0
        %3669 = vmatprep.subr.bf16.mxu0 0
        %3670 = vmatpush1.bf16.msra.mxu0 0
        %3671 = vmatprep.mubr.bf16.mxu0 0
        %3672 = vmatmul.mubr.bf16.gmra.mrb[0].mxu0 %v3633
        %v3673 = vpop.f32.mrb[0].mxu0
        %v3674 = vadd.f32 0.0, %v3673
        %v3675 = vpop.f32.mrb[0].mxu0
        %v3676 = vpop.f32.mrb[0].mxu0
        %v3677 = vpop.f32.mrb[0].mxu0
        %3678 = vdwg.mxu0
        %s3679 = scalar_lea.vmem %s648, 8 [#allocation14]
        %3680 = vst [vmem:[%s3679] sm:$0xff] %v1570
        %s3681 = scalar_lea.vmem %s655, 8 [#allocation15]
        %3682 = vst [vmem:[%s3681] sm:$0xff] %v2524
        %s3683 = scalar_lea.vmem %s662, 8 [#allocation17]
        %3684 = vst [vmem:[%s3683] sm:$0xff] %v3478
        %v3685 = vpack.c.bf16 %v1570, %v1570
        %v3686 = vpack.c.bf16 %v2524, %v2524
        %3687 = vmatprep.subr.bf16.mxu0 0
        %3688 = vmatpush1.bf16.xpose.msra.mxu0 %v3686
        %3689 = vmatprep.subr.bf16.mxu0 0
        %3690 = vmatpush1.bf16.xpose.msra.mxu0 0
        %3691 = vmatprep.subr.bf16.mxu0 0
        %3692 = vmatpush1.bf16.xpose.msra.mxu0 0
        %3693 = vmatprep.subr.bf16.mxu0 0
        %3694 = vmatpush1.bf16.xpose.msra.mxu0 0
        %3695 = vmatprep.subr.bf16.mxu0 0
        %3696 = vmatpush1.bf16.xpose.msra.mxu0 0
        %3697 = vmatprep.subr.bf16.mxu0 0
        %3698 = vmatpush1.bf16.xpose.msra.mxu0 0
        %3699 = vmatprep.subr.bf16.mxu0 0
        %3700 = vmatpush1.bf16.xpose.msra.mxu0 0
        %3701 = vmatprep.subr.bf16.mxu0 0
        %3702 = vmatpush1.bf16.xpose.msra.mxu0 0
        %3703 = vmatprep.subr.bf16.mxu0 0
        %3704 = vmatpush1.bf16.xpose.msra.mxu0 0
        %3705 = vmatprep.subr.bf16.mxu0 0
        %3706 = vmatpush1.bf16.xpose.msra.mxu0 0
        %3707 = vmatprep.subr.bf16.mxu0 0
        %3708 = vmatpush1.bf16.xpose.msra.mxu0 0
        %3709 = vmatprep.subr.bf16.mxu0 0
        %3710 = vmatpush1.bf16.xpose.msra.mxu0 0
        %3711 = vmatprep.subr.bf16.mxu0 0
        %3712 = vmatpush1.bf16.xpose.msra.mxu0 0
        %3713 = vmatprep.subr.bf16.mxu0 0
        %3714 = vmatpush1.bf16.xpose.msra.mxu0 0
        %3715 = vmatprep.subr.bf16.mxu0 0
        %3716 = vmatpush1.bf16.xpose.msra.mxu0 0
        %3717 = vmatprep.subr.bf16.mxu0 0
        %3718 = vmatpush1.bf16.xpose.msra.mxu0 0
        %3719 = vmatprep.mubr.bf16.mxu0 0
        %3720 = vmatmul.mubr.bf16.gmra.mrb[0].mxu0 %v3685
        %v3721 = vpop.f32.mrb[0].mxu0
        %v3722 = vadd.f32 0.0, %v3721
        %v3723 = vpop.f32.mrb[0].mxu0
        %v3724 = vpop.f32.mrb[0].mxu0
        %v3725 = vpop.f32.mrb[0].mxu0
        %3726 = vdwg.mxu0
        %v3727 = vmul.f32 %v3722, 0.088388346
        %v3728 = vadd.f32 %v3727, %v3569
        %v3729 = vsel %vm3617, %v3728, -inf
        %3730 = vmax.xlane.f32.xlu0 %v3729
        %v3731 = vpop.xlane.xlu0 %3730
        %v3732 = vsub.f32 %v3728, %v3731
        %v3733 = vmul.f32 %v3732, 1.442695
        %v3734 = vpow.pop %v3733
        %v3735 = vsel %vm3617, %v3734, 0.0
        %3736 = vadd.xlane.f32.xlu0 %v3735
        %v3737 = vpop.xlane.xlu0 %3736
        %v3738 = vrcp.pop %v3737
        %v3739 = vmul.f32 %v3734, %v3738
        %s3740 = scalar_lea.vmem %s669, 8 [#allocation18]
        %3741 = vst.msk [vmem:[%s3740] sm:$0xff] %vm3617, %v3739
        %v3742 = vpack.c.bf16 %v3739, %v3739
        %v3743 = vpack.c.bf16 %v3478, %v3478
        %v3745 = vsel %vm3617, %v3742, 0
        %v3748 = vsel %vm3635, %v3743, 0
        %3750 = vmatprep.subr.bf16.mxu0 0
        %3751 = vmatpush1.bf16.msra.mxu0 %v3748
        %3752 = vmatprep.subr.bf16.mxu0 0
        %3753 = vmatpush1.bf16.msra.mxu0 0
        %3754 = vmatprep.subr.bf16.mxu0 0
        %3755 = vmatpush1.bf16.msra.mxu0 0
        %3756 = vmatprep.subr.bf16.mxu0 0
        %3757 = vmatpush1.bf16.msra.mxu0 0
        %3758 = vmatprep.subr.bf16.mxu0 0
        %3759 = vmatpush1.bf16.msra.mxu0 0
        %3760 = vmatprep.subr.bf16.mxu0 0
        %3761 = vmatpush1.bf16.msra.mxu0 0
        %3762 = vmatprep.subr.bf16.mxu0 0
        %3763 = vmatpush1.bf16.msra.mxu0 0
        %3764 = vmatprep.subr.bf16.mxu0 0
        %3765 = vmatpush1.bf16.msra.mxu0 0
        %3766 = vmatprep.subr.bf16.mxu0 0
        %3767 = vmatpush1.bf16.msra.mxu0 0
        %3768 = vmatprep.subr.bf16.mxu0 0
        %3769 = vmatpush1.bf16.msra.mxu0 0
        %3770 = vmatprep.subr.bf16.mxu0 0
        %3771 = vmatpush1.bf16.msra.mxu0 0
        %3772 = vmatprep.subr.bf16.mxu0 0
        %3773 = vmatpush1.bf16.msra.mxu0 0
        %3774 = vmatprep.subr.bf16.mxu0 0
        %3775 = vmatpush1.bf16.msra.mxu0 0
        %3776 = vmatprep.subr.bf16.mxu0 0
        %3777 = vmatpush1.bf16.msra.mxu0 0
        %3778 = vmatprep.subr.bf16.mxu0 0
        %3779 = vmatpush1.bf16.msra.mxu0 0
        %3780 = vmatprep.subr.bf16.mxu0 0
        %3781 = vmatpush1.bf16.msra.mxu0 0
        %3782 = vmatprep.mubr.bf16.mxu0 0
        %3783 = vmatmul.mubr.bf16.gmra.mrb[0].mxu0 %v3745
        %v3784 = vpop.f32.mrb[0].mxu0
        %v3785 = vadd.f32 0.0, %v3784
        %v3786 = vpop.f32.mrb[0].mxu0
        %v3787 = vpop.f32.mrb[0].mxu0
        %v3788 = vpop.f32.mrb[0].mxu0
        %3789 = vdwg.mxu0
        %s3790 = scalar_lea.vmem %s648, 16 [#allocation14]
        %3791 = vst [vmem:[%s3790] sm:$0xff] %v1650
        %s3792 = scalar_lea.vmem %s655, 16 [#allocation15]
        %3793 = vst [vmem:[%s3792] sm:$0xff] %v2604
        %s3794 = scalar_lea.vmem %s662, 16 [#allocation17]
        %3795 = vst [vmem:[%s3794] sm:$0xff] %v3558
        %v3796 = vpack.c.bf16 %v1650, %v1650
        %v3797 = vpack.c.bf16 %v2604, %v2604
        %3798 = vmatprep.subr.bf16.mxu0 0
        %3799 = vmatpush1.bf16.xpose.msra.mxu0 %v3797
        %3800 = vmatprep.subr.bf16.mxu0 0
        %3801 = vmatpush1.bf16.xpose.msra.mxu0 0
        %3802 = vmatprep.subr.bf16.mxu0 0
        %3803 = vmatpush1.bf16.xpose.msra.mxu0 0
        %3804 = vmatprep.subr.bf16.mxu0 0
        %3805 = vmatpush1.bf16.xpose.msra.mxu0 0
        %3806 = vmatprep.subr.bf16.mxu0 0
        %3807 = vmatpush1.bf16.xpose.msra.mxu0 0
        %3808 = vmatprep.subr.bf16.mxu0 0
        %3809 = vmatpush1.bf16.xpose.msra.mxu0 0
        %3810 = vmatprep.subr.bf16.mxu0 0
        %3811 = vmatpush1.bf16.xpose.msra.mxu0 0
        %3812 = vmatprep.subr.bf16.mxu0 0
        %3813 = vmatpush1.bf16.xpose.msra.mxu0 0
        %3814 = vmatprep.subr.bf16.mxu0 0
        %3815 = vmatpush1.bf16.xpose.msra.mxu0 0
        %3816 = vmatprep.subr.bf16.mxu0 0
        %3817 = vmatpush1.bf16.xpose.msra.mxu0 0
        %3818 = vmatprep.subr.bf16.mxu0 0
        %3819 = vmatpush1.bf16.xpose.msra.mxu0 0
        %3820 = vmatprep.subr.bf16.mxu0 0
        %3821 = vmatpush1.bf16.xpose.msra.mxu0 0
        %3822 = vmatprep.subr.bf16.mxu0 0
        %3823 = vmatpush1.bf16.xpose.msra.mxu0 0
        %3824 = vmatprep.subr.bf16.mxu0 0
        %3825 = vmatpush1.bf16.xpose.msra.mxu0 0
        %3826 = vmatprep.subr.bf16.mxu0 0
        %3827 = vmatpush1.bf16.xpose.msra.mxu0 0
        %3828 = vmatprep.subr.bf16.mxu0 0
        %3829 = vmatpush1.bf16.xpose.msra.mxu0 0
        %3830 = vmatprep.mubr.bf16.mxu0 0
        %3831 = vmatmul.mubr.bf16.gmra.mrb[0].mxu0 %v3796
        %v3832 = vpop.f32.mrb[0].mxu0
        %v3833 = vadd.f32 0.0, %v3832
        %v3834 = vpop.f32.mrb[0].mxu0
        %v3835 = vpop.f32.mrb[0].mxu0
        %v3836 = vpop.f32.mrb[0].mxu0
        %3837 = vdwg.mxu0
        %v3838 = vmul.f32 %v3833, 0.088388346
        %v3839 = vadd.f32 %v3838, %v3569
        %v3840 = vsel %vm3617, %v3839, -inf
        %3841 = vmax.xlane.f32.xlu0 %v3840
        %v3842 = vpop.xlane.xlu0 %3841
        %v3843 = vsub.f32 %v3839, %v3842
        %v3844 = vmul.f32 %v3843, 1.442695
        %v3845 = vpow.pop %v3844
        %v3846 = vsel %vm3617, %v3845, 0.0
        %3847 = vadd.xlane.f32.xlu0 %v3846
        %v3848 = vpop.xlane.xlu0 %3847
        %v3849 = vrcp.pop %v3848
        %v3850 = vmul.f32 %v3845, %v3849
        %s3851 = scalar_lea.vmem %s669, 16 [#allocation18]
        %3852 = vst.msk [vmem:[%s3851] sm:$0xff] %vm3617, %v3850
        %v3853 = vpack.c.bf16 %v3850, %v3850
        %v3854 = vpack.c.bf16 %v3558, %v3558
        %v3856 = vsel %vm3617, %v3853, 0
        %v3859 = vsel %vm3635, %v3854, 0
        %3861 = vmatprep.subr.bf16.mxu0 0
        %3862 = vmatpush1.bf16.msra.mxu0 %v3859
        %3863 = vmatprep.subr.bf16.mxu0 0
        %3864 = vmatpush1.bf16.msra.mxu0 0
        %3865 = vmatprep.subr.bf16.mxu0 0
        %3866 = vmatpush1.bf16.msra.mxu0 0
        %3867 = vmatprep.subr.bf16.mxu0 0
        %3868 = vmatpush1.bf16.msra.mxu0 0
        %3869 = vmatprep.subr.bf16.mxu0 0
        %3870 = vmatpush1.bf16.msra.mxu0 0
        %3871 = vmatprep.subr.bf16.mxu0 0
        %3872 = vmatpush1.bf16.msra.mxu0 0
        %3873 = vmatprep.subr.bf16.mxu0 0
        %3874 = vmatpush1.bf16.msra.mxu0 0
        %3875 = vmatprep.subr.bf16.mxu0 0
        %3876 = vmatpush1.bf16.msra.mxu0 0
        %3877 = vmatprep.subr.bf16.mxu0 0
        %3878 = vmatpush1.bf16.msra.mxu0 0
        %3879 = vmatprep.subr.bf16.mxu0 0
        %3880 = vmatpush1.bf16.msra.mxu0 0
        %3881 = vmatprep.subr.bf16.mxu0 0
        %3882 = vmatpush1.bf16.msra.mxu0 0
        %3883 = vmatprep.subr.bf16.mxu0 0
        %3884 = vmatpush1.bf16.msra.mxu0 0
        %3885 = vmatprep.subr.bf16.mxu0 0
        %3886 = vmatpush1.bf16.msra.mxu0 0
        %3887 = vmatprep.subr.bf16.mxu0 0
        %3888 = vmatpush1.bf16.msra.mxu0 0
        %3889 = vmatprep.subr.bf16.mxu0 0
        %3890 = vmatpush1.bf16.msra.mxu0 0
        %3891 = vmatprep.subr.bf16.mxu0 0
        %3892 = vmatpush1.bf16.msra.mxu0 0
        %3893 = vmatprep.mubr.bf16.mxu0 0
        %3894 = vmatmul.mubr.bf16.gmra.mrb[0].mxu0 %v3856
        %v3895 = vpop.f32.mrb[0].mxu0
        %v3896 = vadd.f32 0.0, %v3895
        %v3897 = vpop.f32.mrb[0].mxu0
        %v3898 = vpop.f32.mrb[0].mxu0
        %v3899 = vpop.f32.mrb[0].mxu0
        %3900 = vdwg.mxu0
        %s3901 = scalar_lea.vmem %s648, 24 [#allocation14]
        %3902 = vst [vmem:[%s3901] sm:$0xff] %v1652
        %s3903 = scalar_lea.vmem %s655, 24 [#allocation15]
        %3904 = vst [vmem:[%s3903] sm:$0xff] %v2606
        %s3905 = scalar_lea.vmem %s662, 24 [#allocation17]
        %3906 = vst [vmem:[%s3905] sm:$0xff] %v3560
        %v3907 = vpack.c.bf16 %v1652, %v1652
        %v3908 = vpack.c.bf16 %v2606, %v2606
        %3909 = vmatprep.subr.bf16.mxu0 0
        %3910 = vmatpush1.bf16.xpose.msra.mxu0 %v3908
        %3911 = vmatprep.subr.bf16.mxu0 0
        %3912 = vmatpush1.bf16.xpose.msra.mxu0 0
        %3913 = vmatprep.subr.bf16.mxu0 0
        %3914 = vmatpush1.bf16.xpose.msra.mxu0 0
        %3915 = vmatprep.subr.bf16.mxu0 0
        %3916 = vmatpush1.bf16.xpose.msra.mxu0 0
        %3917 = vmatprep.subr.bf16.mxu0 0
        %3918 = vmatpush1.bf16.xpose.msra.mxu0 0
        %3919 = vmatprep.subr.bf16.mxu0 0
        %3920 = vmatpush1.bf16.xpose.msra.mxu0 0
        %3921 = vmatprep.subr.bf16.mxu0 0
        %3922 = vmatpush1.bf16.xpose.msra.mxu0 0
        %3923 = vmatprep.subr.bf16.mxu0 0
        %3924 = vmatpush1.bf16.xpose.msra.mxu0 0
        %3925 = vmatprep.subr.bf16.mxu0 0
        %3926 = vmatpush1.bf16.xpose.msra.mxu0 0
        %3927 = vmatprep.subr.bf16.mxu0 0
        %3928 = vmatpush1.bf16.xpose.msra.mxu0 0
        %3929 = vmatprep.subr.bf16.mxu0 0
        %3930 = vmatpush1.bf16.xpose.msra.mxu0 0
        %3931 = vmatprep.subr.bf16.mxu0 0
        %3932 = vmatpush1.bf16.xpose.msra.mxu0 0
        %3933 = vmatprep.subr.bf16.mxu0 0
        %3934 = vmatpush1.bf16.xpose.msra.mxu0 0
        %3935 = vmatprep.subr.bf16.mxu0 0
        %3936 = vmatpush1.bf16.xpose.msra.mxu0 0
        %3937 = vmatprep.subr.bf16.mxu0 0
        %3938 = vmatpush1.bf16.xpose.msra.mxu0 0
        %3939 = vmatprep.subr.bf16.mxu0 0
        %3940 = vmatpush1.bf16.xpose.msra.mxu0 0
        %3941 = vmatprep.mubr.bf16.mxu0 0
        %3942 = vmatmul.mubr.bf16.gmra.mrb[0].mxu0 %v3907
        %v3943 = vpop.f32.mrb[0].mxu0
        %v3944 = vadd.f32 0.0, %v3943
        %v3945 = vpop.f32.mrb[0].mxu0
        %v3946 = vpop.f32.mrb[0].mxu0
        %v3947 = vpop.f32.mrb[0].mxu0
        %3948 = vdwg.mxu0
        %v3949 = vmul.f32 %v3944, 0.088388346
        %v3950 = vadd.f32 %v3949, %v3569
        %v3951 = vsel %vm3617, %v3950, -inf
        %3952 = vmax.xlane.f32.xlu0 %v3951
        %v3953 = vpop.xlane.xlu0 %3952
        %v3954 = vsub.f32 %v3950, %v3953
        %v3955 = vmul.f32 %v3954, 1.442695
        %v3956 = vpow.pop %v3955
        %v3957 = vsel %vm3617, %v3956, 0.0
        %3958 = vadd.xlane.f32.xlu0 %v3957
        %v3959 = vpop.xlane.xlu0 %3958
        %v3960 = vrcp.pop %v3959
        %v3961 = vmul.f32 %v3956, %v3960
        %s3962 = scalar_lea.vmem %s669, 24 [#allocation18]
        %3963 = vst.msk [vmem:[%s3962] sm:$0xff] %vm3617, %v3961
        %v3964 = vpack.c.bf16 %v3961, %v3961
        %v3965 = vpack.c.bf16 %v3560, %v3560
        %v3967 = vsel %vm3617, %v3964, 0
        %v3970 = vsel %vm3635, %v3965, 0
        %3972 = vmatprep.subr.bf16.mxu0 0
        %3973 = vmatpush1.bf16.msra.mxu0 %v3970
        %3974 = vmatprep.subr.bf16.mxu0 0
        %3975 = vmatpush1.bf16.msra.mxu0 0
        %3976 = vmatprep.subr.bf16.mxu0 0
        %3977 = vmatpush1.bf16.msra.mxu0 0
        %3978 = vmatprep.subr.bf16.mxu0 0
        %3979 = vmatpush1.bf16.msra.mxu0 0
        %3980 = vmatprep.subr.bf16.mxu0 0
        %3981 = vmatpush1.bf16.msra.mxu0 0
        %3982 = vmatprep.subr.bf16.mxu0 0
        %3983 = vmatpush1.bf16.msra.mxu0 0
        %3984 = vmatprep.subr.bf16.mxu0 0
        %3985 = vmatpush1.bf16.msra.mxu0 0
        %3986 = vmatprep.subr.bf16.mxu0 0
        %3987 = vmatpush1.bf16.msra.mxu0 0
        %3988 = vmatprep.subr.bf16.mxu0 0
        %3989 = vmatpush1.bf16.msra.mxu0 0
        %3990 = vmatprep.subr.bf16.mxu0 0
        %3991 = vmatpush1.bf16.msra.mxu0 0
        %3992 = vmatprep.subr.bf16.mxu0 0
        %3993 = vmatpush1.bf16.msra.mxu0 0
        %3994 = vmatprep.subr.bf16.mxu0 0
        %3995 = vmatpush1.bf16.msra.mxu0 0
        %3996 = vmatprep.subr.bf16.mxu0 0
        %3997 = vmatpush1.bf16.msra.mxu0 0
        %3998 = vmatprep.subr.bf16.mxu0 0
        %3999 = vmatpush1.bf16.msra.mxu0 0
        %4000 = vmatprep.subr.bf16.mxu0 0
        %4001 = vmatpush1.bf16.msra.mxu0 0
        %4002 = vmatprep.subr.bf16.mxu0 0
        %4003 = vmatpush1.bf16.msra.mxu0 0
        %4004 = vmatprep.mubr.bf16.mxu0 0
        %4005 = vmatmul.mubr.bf16.gmra.mrb[0].mxu0 %v3967
        %v4006 = vpop.f32.mrb[0].mxu0
        %v4007 = vadd.f32 0.0, %v4006
        %v4008 = vpop.f32.mrb[0].mxu0
        %v4009 = vpop.f32.mrb[0].mxu0
        %v4010 = vpop.f32.mrb[0].mxu0
        %4011 = vdwg.mxu0
        %v4012 = vpack.c.bf16 %v3674, %v3674
        %v4013 = vpack.c.bf16 %v3785, %v3785
        %v4014 = vpack.c.bf16 %v3896, %v3896
        %v4015 = vpack.c.bf16 %v4007, %v4007
        %v4016 = vld [vmem:[#allocation13] sm:$0xff]
        %v4017 = vld [vmem:[#allocation13 + $0x8] sm:$0xff]
        %v4018 = vld [vmem:[#allocation13 + $0x10] sm:$0xff]
        %v4019 = vld [vmem:[#allocation13 + $0x18] sm:$0xff]
        %v4020 = vld [vmem:[#allocation13 + $0x20] sm:$0xff]
        %v4021 = vld [vmem:[#allocation13 + $0x28] sm:$0xff]
        %v4022 = vld [vmem:[#allocation13 + $0x30] sm:$0xff]
        %v4023 = vld [vmem:[#allocation13 + $0x38] sm:$0xff]
        %v4024 = vld [vmem:[#allocation13 + $0x40] sm:$0xff]
        %v4025 = vld [vmem:[#allocation13 + $0x48] sm:$0xff]
        %v4026 = vld [vmem:[#allocation13 + $0x50] sm:$0xff]
        %v4027 = vld [vmem:[#allocation13 + $0x58] sm:$0xff]
        %v4028 = vld [vmem:[#allocation13 + $0x60] sm:$0xff]
        %v4029 = vld [vmem:[#allocation13 + $0x68] sm:$0xff]
        %v4030 = vld [vmem:[#allocation13 + $0x70] sm:$0xff]
        %v4031 = vld [vmem:[#allocation13 + $0x78] sm:$0xff]
        %v4032 = vld [vmem:[#allocation13 + $0x80] sm:$0xff]
        %v4033 = vld [vmem:[#allocation13 + $0x88] sm:$0xff]
        %v4034 = vld [vmem:[#allocation13 + $0x90] sm:$0xff]
        %v4035 = vld [vmem:[#allocation13 + $0x98] sm:$0xff]
        %v4036 = vld [vmem:[#allocation13 + $0xa0] sm:$0xff]
        %v4037 = vld [vmem:[#allocation13 + $0xa8] sm:$0xff]
        %v4038 = vld [vmem:[#allocation13 + $0xb0] sm:$0xff]
        %v4039 = vld [vmem:[#allocation13 + $0xb8] sm:$0xff]
        %v4040 = vld [vmem:[#allocation13 + $0xc0] sm:$0xff]
        %v4041 = vld [vmem:[#allocation13 + $0xc8] sm:$0xff]
        %v4042 = vld [vmem:[#allocation13 + $0xd0] sm:$0xff]
        %v4043 = vld [vmem:[#allocation13 + $0xd8] sm:$0xff]
        %v4044 = vld [vmem:[#allocation13 + $0xe0] sm:$0xff]
        %v4045 = vld [vmem:[#allocation13 + $0xe8] sm:$0xff]
        %v4046 = vld [vmem:[#allocation13 + $0xf0] sm:$0xff]
        %v4047 = vld [vmem:[#allocation13 + $0xf8] sm:$0xff]
        %v4048 = vld [vmem:[#allocation13 + $0x100] sm:$0xff]
        %v4049 = vld [vmem:[#allocation13 + $0x108] sm:$0xff]
        %v4050 = vld [vmem:[#allocation13 + $0x110] sm:$0xff]
        %v4051 = vld [vmem:[#allocation13 + $0x118] sm:$0xff]
        %v4052 = vld [vmem:[#allocation13 + $0x120] sm:$0xff]
        %v4053 = vld [vmem:[#allocation13 + $0x128] sm:$0xff]
        %v4054 = vld [vmem:[#allocation13 + $0x130] sm:$0xff]
        %v4055 = vld [vmem:[#allocation13 + $0x138] sm:$0xff]
        %v4056 = vld [vmem:[#allocation13 + $0x140] sm:$0xff]
        %v4057 = vld [vmem:[#allocation13 + $0x148] sm:$0xff]
        %v4058 = vld [vmem:[#allocation13 + $0x150] sm:$0xff]
        %v4059 = vld [vmem:[#allocation13 + $0x158] sm:$0xff]
        %v4060 = vld [vmem:[#allocation13 + $0x160] sm:$0xff]
        %v4061 = vld [vmem:[#allocation13 + $0x168] sm:$0xff]
        %v4062 = vld [vmem:[#allocation13 + $0x170] sm:$0xff]
        %v4063 = vld [vmem:[#allocation13 + $0x178] sm:$0xff]
        %v4064 = vld [vmem:[#allocation13 + $0x180] sm:$0xff]
        %v4065 = vld [vmem:[#allocation13 + $0x188] sm:$0xff]
        %v4066 = vld [vmem:[#allocation13 + $0x190] sm:$0xff]
        %v4067 = vld [vmem:[#allocation13 + $0x198] sm:$0xff]
        %v4068 = vld [vmem:[#allocation13 + $0x1a0] sm:$0xff]
        %v4069 = vld [vmem:[#allocation13 + $0x1a8] sm:$0xff]
        %v4070 = vld [vmem:[#allocation13 + $0x1b0] sm:$0xff]
        %v4071 = vld [vmem:[#allocation13 + $0x1b8] sm:$0xff]
        %v4072 = vld [vmem:[#allocation13 + $0x1c0] sm:$0xff]
        %v4073 = vld [vmem:[#allocation13 + $0x1c8] sm:$0xff]
        %v4074 = vld [vmem:[#allocation13 + $0x1d0] sm:$0xff]
        %v4075 = vld [vmem:[#allocation13 + $0x1d8] sm:$0xff]
        %v4076 = vld [vmem:[#allocation13 + $0x1e0] sm:$0xff]
        %v4077 = vld [vmem:[#allocation13 + $0x1e8] sm:$0xff]
        %v4078 = vld [vmem:[#allocation13 + $0x1f0] sm:$0xff]
        %v4079 = vld [vmem:[#allocation13 + $0x1f8] sm:$0xff]
        %v4080 = vld [vmem:[#allocation13 + $0x200] sm:$0xff]
        %v4081 = vld [vmem:[#allocation13 + $0x208] sm:$0xff]
        %v4082 = vld [vmem:[#allocation13 + $0x210] sm:$0xff]
        %v4083 = vld [vmem:[#allocation13 + $0x218] sm:$0xff]
        %v4084 = vld [vmem:[#allocation13 + $0x220] sm:$0xff]
        %v4085 = vld [vmem:[#allocation13 + $0x228] sm:$0xff]
        %v4086 = vld [vmem:[#allocation13 + $0x230] sm:$0xff]
        %v4087 = vld [vmem:[#allocation13 + $0x238] sm:$0xff]
        %v4088 = vld [vmem:[#allocation13 + $0x240] sm:$0xff]
        %v4089 = vld [vmem:[#allocation13 + $0x248] sm:$0xff]
        %v4090 = vld [vmem:[#allocation13 + $0x250] sm:$0xff]
        %v4091 = vld [vmem:[#allocation13 + $0x258] sm:$0xff]
        %v4092 = vld [vmem:[#allocation13 + $0x260] sm:$0xff]
        %v4093 = vld [vmem:[#allocation13 + $0x268] sm:$0xff]
        %v4094 = vld [vmem:[#allocation13 + $0x270] sm:$0xff]
        %v4095 = vld [vmem:[#allocation13 + $0x278] sm:$0xff]
        %v4096 = vld [vmem:[#allocation13 + $0x280] sm:$0xff]
        %v4097 = vld [vmem:[#allocation13 + $0x288] sm:$0xff]
        %v4098 = vld [vmem:[#allocation13 + $0x290] sm:$0xff]
        %v4099 = vld [vmem:[#allocation13 + $0x298] sm:$0xff]
        %v4100 = vld [vmem:[#allocation13 + $0x2a0] sm:$0xff]
        %v4101 = vld [vmem:[#allocation13 + $0x2a8] sm:$0xff]
        %v4102 = vld [vmem:[#allocation13 + $0x2b0] sm:$0xff]
        %v4103 = vld [vmem:[#allocation13 + $0x2b8] sm:$0xff]
        %v4104 = vld [vmem:[#allocation13 + $0x2c0] sm:$0xff]
        %v4105 = vld [vmem:[#allocation13 + $0x2c8] sm:$0xff]
        %v4106 = vld [vmem:[#allocation13 + $0x2d0] sm:$0xff]
        %v4107 = vld [vmem:[#allocation13 + $0x2d8] sm:$0xff]
        %v4108 = vld [vmem:[#allocation13 + $0x2e0] sm:$0xff]
        %v4109 = vld [vmem:[#allocation13 + $0x2e8] sm:$0xff]
        %v4110 = vld [vmem:[#allocation13 + $0x2f0] sm:$0xff]
        %v4111 = vld [vmem:[#allocation13 + $0x2f8] sm:$0xff]
        %v4112 = vld [vmem:[#allocation13 + $0x300] sm:$0xff]
        %v4113 = vld [vmem:[#allocation13 + $0x308] sm:$0xff]
        %v4114 = vld [vmem:[#allocation13 + $0x310] sm:$0xff]
        %v4115 = vld [vmem:[#allocation13 + $0x318] sm:$0xff]
        %v4116 = vld [vmem:[#allocation13 + $0x320] sm:$0xff]
        %v4117 = vld [vmem:[#allocation13 + $0x328] sm:$0xff]
        %v4118 = vld [vmem:[#allocation13 + $0x330] sm:$0xff]
        %v4119 = vld [vmem:[#allocation13 + $0x338] sm:$0xff]
        %v4120 = vld [vmem:[#allocation13 + $0x340] sm:$0xff]
        %v4121 = vld [vmem:[#allocation13 + $0x348] sm:$0xff]
        %v4122 = vld [vmem:[#allocation13 + $0x350] sm:$0xff]
        %v4123 = vld [vmem:[#allocation13 + $0x358] sm:$0xff]
        %v4124 = vld [vmem:[#allocation13 + $0x360] sm:$0xff]
        %v4125 = vld [vmem:[#allocation13 + $0x368] sm:$0xff]
        %v4126 = vld [vmem:[#allocation13 + $0x370] sm:$0xff]
        %v4127 = vld [vmem:[#allocation13 + $0x378] sm:$0xff]
        %v4128 = vld [vmem:[#allocation13 + $0x380] sm:$0xff]
        %v4129 = vld [vmem:[#allocation13 + $0x388] sm:$0xff]
        %v4130 = vld [vmem:[#allocation13 + $0x390] sm:$0xff]
        %v4131 = vld [vmem:[#allocation13 + $0x398] sm:$0xff]
        %v4132 = vld [vmem:[#allocation13 + $0x3a0] sm:$0xff]
        %v4133 = vld [vmem:[#allocation13 + $0x3a8] sm:$0xff]
        %v4134 = vld [vmem:[#allocation13 + $0x3b0] sm:$0xff]
        %v4135 = vld [vmem:[#allocation13 + $0x3b8] sm:$0xff]
        %v4136 = vld [vmem:[#allocation13 + $0x3c0] sm:$0xff]
        %v4137 = vld [vmem:[#allocation13 + $0x3c8] sm:$0xff]
        %v4138 = vld [vmem:[#allocation13 + $0x3d0] sm:$0xff]
        %v4139 = vld [vmem:[#allocation13 + $0x3d8] sm:$0xff]
        %v4140 = vld [vmem:[#allocation13 + $0x3e0] sm:$0xff]
        %v4141 = vld [vmem:[#allocation13 + $0x3e8] sm:$0xff]
        %v4142 = vld [vmem:[#allocation13 + $0x3f0] sm:$0xff]
        %v4143 = vld [vmem:[#allocation13 + $0x3f8] sm:$0xff]
        %v4144 = vld [vmem:[%s10] sm:$0xf]
        %v4146 = vlaneseq
        %v4147 = vshrl.u32 %v4146, 7
        %v4148 = vsub.s32 0, %v4147
        %v4149 = vrot.slane %v4144, %v4148
        %v4150 = vlaneseq
        %v4151 = vshrl.u32 %v4150, 7
        %v4152 = vsub.s32 1, %v4151
        %v4153 = vrot.slane %v4144, %v4152
        %v4154 = vlaneseq
        %v4155 = vshrl.u32 %v4154, 7
        %v4156 = vsub.s32 2, %v4155
        %v4157 = vrot.slane %v4144, %v4156
        %v4158 = vlaneseq
        %v4159 = vshrl.u32 %v4158, 7
        %v4160 = vsub.s32 3, %v4159
        %v4161 = vrot.slane %v4144, %v4160
        %v4294 = vunpack.c.l.b16 %v4016
        %v4295 = vunpack.c.h.b16 %v4016
        %v4296 = vunpack.c.l.b16 %v4017
        %v4297 = vunpack.c.h.b16 %v4017
        %v4298 = vunpack.c.l.b16 %v4018
        %v4299 = vunpack.c.h.b16 %v4018
        %v4300 = vunpack.c.l.b16 %v4019
        %v4301 = vunpack.c.h.b16 %v4019
        %v4302 = vunpack.c.l.b16 %v4020
        %v4303 = vunpack.c.h.b16 %v4020
        %v4304 = vunpack.c.l.b16 %v4021
        %v4305 = vunpack.c.h.b16 %v4021
        %v4306 = vunpack.c.l.b16 %v4022
        %v4307 = vunpack.c.h.b16 %v4022
        %v4308 = vunpack.c.l.b16 %v4023
        %v4309 = vunpack.c.h.b16 %v4023
        %v4310 = vunpack.c.l.b16 %v4024
        %v4311 = vunpack.c.h.b16 %v4024
        %v4312 = vunpack.c.l.b16 %v4025
        %v4313 = vunpack.c.h.b16 %v4025
        %v4314 = vunpack.c.l.b16 %v4026
        %v4315 = vunpack.c.h.b16 %v4026
        %v4316 = vunpack.c.l.b16 %v4027
        %v4317 = vunpack.c.h.b16 %v4027
        %v4318 = vunpack.c.l.b16 %v4028
        %v4319 = vunpack.c.h.b16 %v4028
        %v4320 = vunpack.c.l.b16 %v4029
        %v4321 = vunpack.c.h.b16 %v4029
        %v4322 = vunpack.c.l.b16 %v4030
        %v4323 = vunpack.c.h.b16 %v4030
        %v4324 = vunpack.c.l.b16 %v4031
        %v4325 = vunpack.c.h.b16 %v4031
        %v4326 = vunpack.c.l.b16 %v4032
        %v4327 = vunpack.c.h.b16 %v4032
        %v4328 = vunpack.c.l.b16 %v4033
        %v4329 = vunpack.c.h.b16 %v4033
        %v4330 = vunpack.c.l.b16 %v4034
        %v4331 = vunpack.c.h.b16 %v4034
        %v4332 = vunpack.c.l.b16 %v4035
        %v4333 = vunpack.c.h.b16 %v4035
        %v4334 = vunpack.c.l.b16 %v4036
        %v4335 = vunpack.c.h.b16 %v4036
        %v4336 = vunpack.c.l.b16 %v4037
        %v4337 = vunpack.c.h.b16 %v4037
        %v4338 = vunpack.c.l.b16 %v4038
        %v4339 = vunpack.c.h.b16 %v4038
        %v4340 = vunpack.c.l.b16 %v4039
        %v4341 = vunpack.c.h.b16 %v4039
        %v4342 = vunpack.c.l.b16 %v4040
        %v4343 = vunpack.c.h.b16 %v4040
        %v4344 = vunpack.c.l.b16 %v4041
        %v4345 = vunpack.c.h.b16 %v4041
        %v4346 = vunpack.c.l.b16 %v4042
        %v4347 = vunpack.c.h.b16 %v4042
        %v4348 = vunpack.c.l.b16 %v4043
        %v4349 = vunpack.c.h.b16 %v4043
        %v4350 = vunpack.c.l.b16 %v4044
        %v4351 = vunpack.c.h.b16 %v4044
        %v4352 = vunpack.c.l.b16 %v4045
        %v4353 = vunpack.c.h.b16 %v4045
        %v4354 = vunpack.c.l.b16 %v4046
        %v4355 = vunpack.c.h.b16 %v4046
        %v4356 = vunpack.c.l.b16 %v4047
        %v4357 = vunpack.c.h.b16 %v4047
        %v4358 = vunpack.c.l.b16 %v4048
        %v4359 = vunpack.c.h.b16 %v4048
        %v4360 = vunpack.c.l.b16 %v4049
        %v4361 = vunpack.c.h.b16 %v4049
        %v4362 = vunpack.c.l.b16 %v4050
        %v4363 = vunpack.c.h.b16 %v4050
        %v4364 = vunpack.c.l.b16 %v4051
        %v4365 = vunpack.c.h.b16 %v4051
        %v4366 = vunpack.c.l.b16 %v4052
        %v4367 = vunpack.c.h.b16 %v4052
        %v4368 = vunpack.c.l.b16 %v4053
        %v4369 = vunpack.c.h.b16 %v4053
        %v4370 = vunpack.c.l.b16 %v4054
        %v4371 = vunpack.c.h.b16 %v4054
        %v4372 = vunpack.c.l.b16 %v4055
        %v4373 = vunpack.c.h.b16 %v4055
        %v4374 = vunpack.c.l.b16 %v4056
        %v4375 = vunpack.c.h.b16 %v4056
        %v4376 = vunpack.c.l.b16 %v4057
        %v4377 = vunpack.c.h.b16 %v4057
        %v4378 = vunpack.c.l.b16 %v4058
        %v4379 = vunpack.c.h.b16 %v4058
        %v4380 = vunpack.c.l.b16 %v4059
        %v4381 = vunpack.c.h.b16 %v4059
        %v4382 = vunpack.c.l.b16 %v4060
        %v4383 = vunpack.c.h.b16 %v4060
        %v4384 = vunpack.c.l.b16 %v4061
        %v4385 = vunpack.c.h.b16 %v4061
        %v4386 = vunpack.c.l.b16 %v4062
        %v4387 = vunpack.c.h.b16 %v4062
        %v4388 = vunpack.c.l.b16 %v4063
        %v4389 = vunpack.c.h.b16 %v4063
        %v4390 = vunpack.c.l.b16 %v4064
        %v4391 = vunpack.c.h.b16 %v4064
        %v4392 = vunpack.c.l.b16 %v4065
        %v4393 = vunpack.c.h.b16 %v4065
        %v4394 = vunpack.c.l.b16 %v4066
        %v4395 = vunpack.c.h.b16 %v4066
        %v4396 = vunpack.c.l.b16 %v4067
        %v4397 = vunpack.c.h.b16 %v4067
        %v4398 = vunpack.c.l.b16 %v4068
        %v4399 = vunpack.c.h.b16 %v4068
        %v4400 = vunpack.c.l.b16 %v4069
        %v4401 = vunpack.c.h.b16 %v4069
        %v4402 = vunpack.c.l.b16 %v4070
        %v4403 = vunpack.c.h.b16 %v4070
        %v4404 = vunpack.c.l.b16 %v4071
        %v4405 = vunpack.c.h.b16 %v4071
        %v4406 = vunpack.c.l.b16 %v4072
        %v4407 = vunpack.c.h.b16 %v4072
        %v4408 = vunpack.c.l.b16 %v4073
        %v4409 = vunpack.c.h.b16 %v4073
        %v4410 = vunpack.c.l.b16 %v4074
        %v4411 = vunpack.c.h.b16 %v4074
        %v4412 = vunpack.c.l.b16 %v4075
        %v4413 = vunpack.c.h.b16 %v4075
        %v4414 = vunpack.c.l.b16 %v4076
        %v4415 = vunpack.c.h.b16 %v4076
        %v4416 = vunpack.c.l.b16 %v4077
        %v4417 = vunpack.c.h.b16 %v4077
        %v4418 = vunpack.c.l.b16 %v4078
        %v4419 = vunpack.c.h.b16 %v4078
        %v4420 = vunpack.c.l.b16 %v4079
        %v4421 = vunpack.c.h.b16 %v4079
        %v4422 = vunpack.c.l.b16 %v4080
        %v4423 = vunpack.c.h.b16 %v4080
        %v4424 = vunpack.c.l.b16 %v4081
        %v4425 = vunpack.c.h.b16 %v4081
        %v4426 = vunpack.c.l.b16 %v4082
        %v4427 = vunpack.c.h.b16 %v4082
        %v4428 = vunpack.c.l.b16 %v4083
        %v4429 = vunpack.c.h.b16 %v4083
        %v4430 = vunpack.c.l.b16 %v4084
        %v4431 = vunpack.c.h.b16 %v4084
        %v4432 = vunpack.c.l.b16 %v4085
        %v4433 = vunpack.c.h.b16 %v4085
        %v4434 = vunpack.c.l.b16 %v4086
        %v4435 = vunpack.c.h.b16 %v4086
        %v4436 = vunpack.c.l.b16 %v4087
        %v4437 = vunpack.c.h.b16 %v4087
        %v4438 = vunpack.c.l.b16 %v4088
        %v4439 = vunpack.c.h.b16 %v4088
        %v4440 = vunpack.c.l.b16 %v4089
        %v4441 = vunpack.c.h.b16 %v4089
        %v4442 = vunpack.c.l.b16 %v4090
        %v4443 = vunpack.c.h.b16 %v4090
        %v4444 = vunpack.c.l.b16 %v4091
        %v4445 = vunpack.c.h.b16 %v4091
        %v4446 = vunpack.c.l.b16 %v4092
        %v4447 = vunpack.c.h.b16 %v4092
        %v4448 = vunpack.c.l.b16 %v4093
        %v4449 = vunpack.c.h.b16 %v4093
        %v4450 = vunpack.c.l.b16 %v4094
        %v4451 = vunpack.c.h.b16 %v4094
        %v4452 = vunpack.c.l.b16 %v4095
        %v4453 = vunpack.c.h.b16 %v4095
        %v4454 = vunpack.c.l.b16 %v4096
        %v4455 = vunpack.c.h.b16 %v4096
        %v4456 = vunpack.c.l.b16 %v4097
        %v4457 = vunpack.c.h.b16 %v4097
        %v4458 = vunpack.c.l.b16 %v4098
        %v4459 = vunpack.c.h.b16 %v4098
        %v4460 = vunpack.c.l.b16 %v4099
        %v4461 = vunpack.c.h.b16 %v4099
        %v4462 = vunpack.c.l.b16 %v4100
        %v4463 = vunpack.c.h.b16 %v4100
        %v4464 = vunpack.c.l.b16 %v4101
        %v4465 = vunpack.c.h.b16 %v4101
        %v4466 = vunpack.c.l.b16 %v4102
        %v4467 = vunpack.c.h.b16 %v4102
        %v4468 = vunpack.c.l.b16 %v4103
        %v4469 = vunpack.c.h.b16 %v4103
        %v4470 = vunpack.c.l.b16 %v4104
        %v4471 = vunpack.c.h.b16 %v4104
        %v4472 = vunpack.c.l.b16 %v4105
        %v4473 = vunpack.c.h.b16 %v4105
        %v4474 = vunpack.c.l.b16 %v4106
        %v4475 = vunpack.c.h.b16 %v4106
        %v4476 = vunpack.c.l.b16 %v4107
        %v4477 = vunpack.c.h.b16 %v4107
        %v4478 = vunpack.c.l.b16 %v4108
        %v4479 = vunpack.c.h.b16 %v4108
        %v4480 = vunpack.c.l.b16 %v4109
        %v4481 = vunpack.c.h.b16 %v4109
        %v4482 = vunpack.c.l.b16 %v4110
        %v4483 = vunpack.c.h.b16 %v4110
        %v4484 = vunpack.c.l.b16 %v4111
        %v4485 = vunpack.c.h.b16 %v4111
        %v4486 = vunpack.c.l.b16 %v4112
        %v4487 = vunpack.c.h.b16 %v4112
        %v4488 = vunpack.c.l.b16 %v4113
        %v4489 = vunpack.c.h.b16 %v4113
        %v4490 = vunpack.c.l.b16 %v4114
        %v4491 = vunpack.c.h.b16 %v4114
        %v4492 = vunpack.c.l.b16 %v4115
        %v4493 = vunpack.c.h.b16 %v4115
        %v4494 = vunpack.c.l.b16 %v4116
        %v4495 = vunpack.c.h.b16 %v4116
        %v4496 = vunpack.c.l.b16 %v4117
        %v4497 = vunpack.c.h.b16 %v4117
        %v4498 = vunpack.c.l.b16 %v4118
        %v4499 = vunpack.c.h.b16 %v4118
        %v4500 = vunpack.c.l.b16 %v4119
        %v4501 = vunpack.c.h.b16 %v4119
        %v4502 = vunpack.c.l.b16 %v4120
        %v4503 = vunpack.c.h.b16 %v4120
        %v4504 = vunpack.c.l.b16 %v4121
        %v4505 = vunpack.c.h.b16 %v4121
        %v4506 = vunpack.c.l.b16 %v4122
        %v4507 = vunpack.c.h.b16 %v4122
        %v4508 = vunpack.c.l.b16 %v4123
        %v4509 = vunpack.c.h.b16 %v4123
        %v4510 = vunpack.c.l.b16 %v4124
        %v4511 = vunpack.c.h.b16 %v4124
        %v4512 = vunpack.c.l.b16 %v4125
        %v4513 = vunpack.c.h.b16 %v4125
        %v4514 = vunpack.c.l.b16 %v4126
        %v4515 = vunpack.c.h.b16 %v4126
        %v4516 = vunpack.c.l.b16 %v4127
        %v4517 = vunpack.c.h.b16 %v4127
        %v4518 = vunpack.c.l.b16 %v4128
        %v4519 = vunpack.c.h.b16 %v4128
        %v4520 = vunpack.c.l.b16 %v4129
        %v4521 = vunpack.c.h.b16 %v4129
        %v4522 = vunpack.c.l.b16 %v4130
        %v4523 = vunpack.c.h.b16 %v4130
        %v4524 = vunpack.c.l.b16 %v4131
        %v4525 = vunpack.c.h.b16 %v4131
        %v4526 = vunpack.c.l.b16 %v4132
        %v4527 = vunpack.c.h.b16 %v4132
        %v4528 = vunpack.c.l.b16 %v4133
        %v4529 = vunpack.c.h.b16 %v4133
        %v4530 = vunpack.c.l.b16 %v4134
        %v4531 = vunpack.c.h.b16 %v4134
        %v4532 = vunpack.c.l.b16 %v4135
        %v4533 = vunpack.c.h.b16 %v4135
        %v4534 = vunpack.c.l.b16 %v4136
        %v4535 = vunpack.c.h.b16 %v4136
        %v4536 = vunpack.c.l.b16 %v4137
        %v4537 = vunpack.c.h.b16 %v4137
        %v4538 = vunpack.c.l.b16 %v4138
        %v4539 = vunpack.c.h.b16 %v4138
        %v4540 = vunpack.c.l.b16 %v4139
        %v4541 = vunpack.c.h.b16 %v4139
        %v4542 = vunpack.c.l.b16 %v4140
        %v4543 = vunpack.c.h.b16 %v4140
        %v4544 = vunpack.c.l.b16 %v4141
        %v4545 = vunpack.c.h.b16 %v4141
        %v4546 = vunpack.c.l.b16 %v4142
        %v4547 = vunpack.c.h.b16 %v4142
        %v4548 = vunpack.c.l.b16 %v4143
        %v4549 = vunpack.c.h.b16 %v4143
        %v4550 = vpack.c.b16 %v4298, %v4294
        %v4551 = vpack.c.b16 %v4299, %v4295
        %v4552 = vpack.c.b16 %v4300, %v4296
        %v4553 = vpack.c.b16 %v4301, %v4297
        %v4554 = vpack.c.b16 %v4306, %v4302
        %v4555 = vpack.c.b16 %v4307, %v4303
        %v4556 = vpack.c.b16 %v4308, %v4304
        %v4557 = vpack.c.b16 %v4309, %v4305
        %v4558 = vpack.c.b16 %v4314, %v4310
        %v4559 = vpack.c.b16 %v4315, %v4311
        %v4560 = vpack.c.b16 %v4316, %v4312
        %v4561 = vpack.c.b16 %v4317, %v4313
        %v4562 = vpack.c.b16 %v4322, %v4318
        %v4563 = vpack.c.b16 %v4323, %v4319
        %v4564 = vpack.c.b16 %v4324, %v4320
        %v4565 = vpack.c.b16 %v4325, %v4321
        %v4566 = vpack.c.b16 %v4330, %v4326
        %v4567 = vpack.c.b16 %v4331, %v4327
        %v4568 = vpack.c.b16 %v4332, %v4328
        %v4569 = vpack.c.b16 %v4333, %v4329
        %v4570 = vpack.c.b16 %v4338, %v4334
        %v4571 = vpack.c.b16 %v4339, %v4335
        %v4572 = vpack.c.b16 %v4340, %v4336
        %v4573 = vpack.c.b16 %v4341, %v4337
        %v4574 = vpack.c.b16 %v4346, %v4342
        %v4575 = vpack.c.b16 %v4347, %v4343
        %v4576 = vpack.c.b16 %v4348, %v4344
        %v4577 = vpack.c.b16 %v4349, %v4345
        %v4578 = vpack.c.b16 %v4354, %v4350
        %v4579 = vpack.c.b16 %v4355, %v4351
        %v4580 = vpack.c.b16 %v4356, %v4352
        %v4581 = vpack.c.b16 %v4357, %v4353
        %v4582 = vpack.c.b16 %v4362, %v4358
        %v4583 = vpack.c.b16 %v4363, %v4359
        %v4584 = vpack.c.b16 %v4364, %v4360
        %v4585 = vpack.c.b16 %v4365, %v4361
        %v4586 = vpack.c.b16 %v4370, %v4366
        %v4587 = vpack.c.b16 %v4371, %v4367
        %v4588 = vpack.c.b16 %v4372, %v4368
        %v4589 = vpack.c.b16 %v4373, %v4369
        %v4590 = vpack.c.b16 %v4378, %v4374
        %v4591 = vpack.c.b16 %v4379, %v4375
        %v4592 = vpack.c.b16 %v4380, %v4376
        %v4593 = vpack.c.b16 %v4381, %v4377
        %v4594 = vpack.c.b16 %v4386, %v4382
        %v4595 = vpack.c.b16 %v4387, %v4383
        %v4596 = vpack.c.b16 %v4388, %v4384
        %v4597 = vpack.c.b16 %v4389, %v4385
        %v4598 = vpack.c.b16 %v4394, %v4390
        %v4599 = vpack.c.b16 %v4395, %v4391
        %v4600 = vpack.c.b16 %v4396, %v4392
        %v4601 = vpack.c.b16 %v4397, %v4393
        %v4602 = vpack.c.b16 %v4402, %v4398
        %v4603 = vpack.c.b16 %v4403, %v4399
        %v4604 = vpack.c.b16 %v4404, %v4400
        %v4605 = vpack.c.b16 %v4405, %v4401
        %v4606 = vpack.c.b16 %v4410, %v4406
        %v4607 = vpack.c.b16 %v4411, %v4407
        %v4608 = vpack.c.b16 %v4412, %v4408
        %v4609 = vpack.c.b16 %v4413, %v4409
        %v4610 = vpack.c.b16 %v4418, %v4414
        %v4611 = vpack.c.b16 %v4419, %v4415
        %v4612 = vpack.c.b16 %v4420, %v4416
        %v4613 = vpack.c.b16 %v4421, %v4417
        %v4614 = vpack.c.b16 %v4426, %v4422
        %v4615 = vpack.c.b16 %v4427, %v4423
        %v4616 = vpack.c.b16 %v4428, %v4424
        %v4617 = vpack.c.b16 %v4429, %v4425
        %v4618 = vpack.c.b16 %v4434, %v4430
        %v4619 = vpack.c.b16 %v4435, %v4431
        %v4620 = vpack.c.b16 %v4436, %v4432
        %v4621 = vpack.c.b16 %v4437, %v4433
        %v4622 = vpack.c.b16 %v4442, %v4438
        %v4623 = vpack.c.b16 %v4443, %v4439
        %v4624 = vpack.c.b16 %v4444, %v4440
        %v4625 = vpack.c.b16 %v4445, %v4441
        %v4626 = vpack.c.b16 %v4450, %v4446
        %v4627 = vpack.c.b16 %v4451, %v4447
        %v4628 = vpack.c.b16 %v4452, %v4448
        %v4629 = vpack.c.b16 %v4453, %v4449
        %v4630 = vpack.c.b16 %v4458, %v4454
        %v4631 = vpack.c.b16 %v4459, %v4455
        %v4632 = vpack.c.b16 %v4460, %v4456
        %v4633 = vpack.c.b16 %v4461, %v4457
        %v4634 = vpack.c.b16 %v4466, %v4462
        %v4635 = vpack.c.b16 %v4467, %v4463
        %v4636 = vpack.c.b16 %v4468, %v4464
        %v4637 = vpack.c.b16 %v4469, %v4465
        %v4638 = vpack.c.b16 %v4474, %v4470
        %v4639 = vpack.c.b16 %v4475, %v4471
        %v4640 = vpack.c.b16 %v4476, %v4472
        %v4641 = vpack.c.b16 %v4477, %v4473
        %v4642 = vpack.c.b16 %v4482, %v4478
        %v4643 = vpack.c.b16 %v4483, %v4479
        %v4644 = vpack.c.b16 %v4484, %v4480
        %v4645 = vpack.c.b16 %v4485, %v4481
        %v4646 = vpack.c.b16 %v4490, %v4486
        %v4647 = vpack.c.b16 %v4491, %v4487
        %v4648 = vpack.c.b16 %v4492, %v4488
        %v4649 = vpack.c.b16 %v4493, %v4489
        %v4650 = vpack.c.b16 %v4498, %v4494
        %v4651 = vpack.c.b16 %v4499, %v4495
        %v4652 = vpack.c.b16 %v4500, %v4496
        %v4653 = vpack.c.b16 %v4501, %v4497
        %v4654 = vpack.c.b16 %v4506, %v4502
        %v4655 = vpack.c.b16 %v4507, %v4503
        %v4656 = vpack.c.b16 %v4508, %v4504
        %v4657 = vpack.c.b16 %v4509, %v4505
        %v4658 = vpack.c.b16 %v4514, %v4510
        %v4659 = vpack.c.b16 %v4515, %v4511
        %v4660 = vpack.c.b16 %v4516, %v4512
        %v4661 = vpack.c.b16 %v4517, %v4513
        %v4662 = vpack.c.b16 %v4522, %v4518
        %v4663 = vpack.c.b16 %v4523, %v4519
        %v4664 = vpack.c.b16 %v4524, %v4520
        %v4665 = vpack.c.b16 %v4525, %v4521
        %v4666 = vpack.c.b16 %v4530, %v4526
        %v4667 = vpack.c.b16 %v4531, %v4527
        %v4668 = vpack.c.b16 %v4532, %v4528
        %v4669 = vpack.c.b16 %v4533, %v4529
        %v4670 = vpack.c.b16 %v4538, %v4534
        %v4671 = vpack.c.b16 %v4539, %v4535
        %v4672 = vpack.c.b16 %v4540, %v4536
        %v4673 = vpack.c.b16 %v4541, %v4537
        %v4674 = vpack.c.b16 %v4546, %v4542
        %v4675 = vpack.c.b16 %v4547, %v4543
        %v4676 = vpack.c.b16 %v4548, %v4544
        %v4677 = vpack.c.b16 %v4549, %v4545
        %4806 = vmatprep.subr.bf16.mxu0 %v4551
        %4807 = vmatpush1.bf16.msra.mxu0 %v4550
        %4808 = vmatprep.subr.bf16.mxu0 %v4555
        %4809 = vmatpush1.bf16.msra.mxu0 %v4554
        %4810 = vmatprep.subr.bf16.mxu0 %v4559
        %4811 = vmatpush1.bf16.msra.mxu0 %v4558
        %4812 = vmatprep.subr.bf16.mxu0 %v4563
        %4813 = vmatpush1.bf16.msra.mxu0 %v4562
        %4814 = vmatprep.subr.bf16.mxu0 %v4567
        %4815 = vmatpush1.bf16.msra.mxu0 %v4566
        %4816 = vmatprep.subr.bf16.mxu0 %v4571
        %4817 = vmatpush1.bf16.msra.mxu0 %v4570
        %4818 = vmatprep.subr.bf16.mxu0 %v4575
        %4819 = vmatpush1.bf16.msra.mxu0 %v4574
        %4820 = vmatprep.subr.bf16.mxu0 %v4579
        %4821 = vmatpush1.bf16.msra.mxu0 %v4578
        %4822 = vmatprep.subr.bf16.mxu0 %v4583
        %4823 = vmatpush1.bf16.msra.mxu0 %v4582
        %4824 = vmatprep.subr.bf16.mxu0 %v4587
        %4825 = vmatpush1.bf16.msra.mxu0 %v4586
        %4826 = vmatprep.subr.bf16.mxu0 %v4591
        %4827 = vmatpush1.bf16.msra.mxu0 %v4590
        %4828 = vmatprep.subr.bf16.mxu0 %v4595
        %4829 = vmatpush1.bf16.msra.mxu0 %v4594
        %4830 = vmatprep.subr.bf16.mxu0 %v4599
        %4831 = vmatpush1.bf16.msra.mxu0 %v4598
        %4832 = vmatprep.subr.bf16.mxu0 %v4603
        %4833 = vmatpush1.bf16.msra.mxu0 %v4602
        %4834 = vmatprep.subr.bf16.mxu0 %v4607
        %4835 = vmatpush1.bf16.msra.mxu0 %v4606
        %4836 = vmatprep.subr.bf16.mxu0 %v4611
        %4837 = vmatpush1.bf16.msra.mxu0 %v4610
        %4838 = vmatprep.mubr.bf16.mxu0 %v4013
        %4839 = vmatmul.mubr.bf16.gmra.mrb[0].mxu0 %v4012
        %v4840 = vpop.f32.mrb[0].mxu0
        %v4841 = vadd.f32 %v4149, %v4840
        %v4842 = vpop.f32.mrb[0].mxu0
        %v4843 = vadd.f32 %v4153, %v4842
        %v4844 = vpop.f32.mrb[0].mxu0
        %v4845 = vpop.f32.mrb[0].mxu0
        %4846 = vdwg.mxu0
        %4847 = vmatprep.subr.bf16.mxu0 %v4615
        %4848 = vmatpush1.bf16.msra.mxu0 %v4614
        %4849 = vmatprep.subr.bf16.mxu0 %v4619
        %4850 = vmatpush1.bf16.msra.mxu0 %v4618
        %4851 = vmatprep.subr.bf16.mxu0 %v4623
        %4852 = vmatpush1.bf16.msra.mxu0 %v4622
        %4853 = vmatprep.subr.bf16.mxu0 %v4627
        %4854 = vmatpush1.bf16.msra.mxu0 %v4626
        %4855 = vmatprep.subr.bf16.mxu0 %v4631
        %4856 = vmatpush1.bf16.msra.mxu0 %v4630
        %4857 = vmatprep.subr.bf16.mxu0 %v4635
        %4858 = vmatpush1.bf16.msra.mxu0 %v4634
        %4859 = vmatprep.subr.bf16.mxu0 %v4639
        %4860 = vmatpush1.bf16.msra.mxu0 %v4638
        %4861 = vmatprep.subr.bf16.mxu0 %v4643
        %4862 = vmatpush1.bf16.msra.mxu0 %v4642
        %4863 = vmatprep.subr.bf16.mxu0 %v4647
        %4864 = vmatpush1.bf16.msra.mxu0 %v4646
        %4865 = vmatprep.subr.bf16.mxu0 %v4651
        %4866 = vmatpush1.bf16.msra.mxu0 %v4650
        %4867 = vmatprep.subr.bf16.mxu0 %v4655
        %4868 = vmatpush1.bf16.msra.mxu0 %v4654
        %4869 = vmatprep.subr.bf16.mxu0 %v4659
        %4870 = vmatpush1.bf16.msra.mxu0 %v4658
        %4871 = vmatprep.subr.bf16.mxu0 %v4663
        %4872 = vmatpush1.bf16.msra.mxu0 %v4662
        %4873 = vmatprep.subr.bf16.mxu0 %v4667
        %4874 = vmatpush1.bf16.msra.mxu0 %v4666
        %4875 = vmatprep.subr.bf16.mxu0 %v4671
        %4876 = vmatpush1.bf16.msra.mxu0 %v4670
        %4877 = vmatprep.subr.bf16.mxu0 %v4675
        %4878 = vmatpush1.bf16.msra.mxu0 %v4674
        %4879 = vmatprep.mubr.bf16.mxu0 %v4015
        %4880 = vmatmul.mubr.bf16.gmra.mrb[0].mxu0 %v4014
        %v4881 = vpop.f32.mrb[0].mxu0
        %v4882 = vadd.f32 %v4841, %v4881
        %v4883 = vpop.f32.mrb[0].mxu0
        %v4884 = vadd.f32 %v4843, %v4883
        %v4885 = vpop.f32.mrb[0].mxu0
        %v4886 = vpop.f32.mrb[0].mxu0
        %4887 = vdwg.mxu0
        %4888 = vmatprep.subr.bf16.mxu0 %v4553
        %4889 = vmatpush1.bf16.msra.mxu0 %v4552
        %4890 = vmatprep.subr.bf16.mxu0 %v4557
        %4891 = vmatpush1.bf16.msra.mxu0 %v4556
        %4892 = vmatprep.subr.bf16.mxu0 %v4561
        %4893 = vmatpush1.bf16.msra.mxu0 %v4560
        %4894 = vmatprep.subr.bf16.mxu0 %v4565
        %4895 = vmatpush1.bf16.msra.mxu0 %v4564
        %4896 = vmatprep.subr.bf16.mxu0 %v4569
        %4897 = vmatpush1.bf16.msra.mxu0 %v4568
        %4898 = vmatprep.subr.bf16.mxu0 %v4573
        %4899 = vmatpush1.bf16.msra.mxu0 %v4572
        %4900 = vmatprep.subr.bf16.mxu0 %v4577
        %4901 = vmatpush1.bf16.msra.mxu0 %v4576
        %4902 = vmatprep.subr.bf16.mxu0 %v4581
        %4903 = vmatpush1.bf16.msra.mxu0 %v4580
        %4904 = vmatprep.subr.bf16.mxu0 %v4585
        %4905 = vmatpush1.bf16.msra.mxu0 %v4584
        %4906 = vmatprep.subr.bf16.mxu0 %v4589
        %4907 = vmatpush1.bf16.msra.mxu0 %v4588
        %4908 = vmatprep.subr.bf16.mxu0 %v4593
        %4909 = vmatpush1.bf16.msra.mxu0 %v4592
        %4910 = vmatprep.subr.bf16.mxu0 %v4597
        %4911 = vmatpush1.bf16.msra.mxu0 %v4596
        %4912 = vmatprep.subr.bf16.mxu0 %v4601
        %4913 = vmatpush1.bf16.msra.mxu0 %v4600
        %4914 = vmatprep.subr.bf16.mxu0 %v4605
        %4915 = vmatpush1.bf16.msra.mxu0 %v4604
        %4916 = vmatprep.subr.bf16.mxu0 %v4609
        %4917 = vmatpush1.bf16.msra.mxu0 %v4608
        %4918 = vmatprep.subr.bf16.mxu0 %v4613
        %4919 = vmatpush1.bf16.msra.mxu0 %v4612
        %4920 = vmatprep.mubr.bf16.mxu0 %v4013
        %4921 = vmatmul.mubr.bf16.gmra.mrb[0].mxu0 %v4012
        %v4922 = vpop.f32.mrb[0].mxu0
        %v4923 = vadd.f32 %v4157, %v4922
        %v4924 = vpop.f32.mrb[0].mxu0
        %v4925 = vadd.f32 %v4161, %v4924
        %v4926 = vpop.f32.mrb[0].mxu0
        %v4927 = vpop.f32.mrb[0].mxu0
        %4928 = vdwg.mxu0
        %4929 = vmatprep.subr.bf16.mxu0 %v4617
        %4930 = vmatpush1.bf16.msra.mxu0 %v4616
        %4931 = vmatprep.subr.bf16.mxu0 %v4621
        %4932 = vmatpush1.bf16.msra.mxu0 %v4620
        %4933 = vmatprep.subr.bf16.mxu0 %v4625
        %4934 = vmatpush1.bf16.msra.mxu0 %v4624
        %4935 = vmatprep.subr.bf16.mxu0 %v4629
        %4936 = vmatpush1.bf16.msra.mxu0 %v4628
        %4937 = vmatprep.subr.bf16.mxu0 %v4633
        %4938 = vmatpush1.bf16.msra.mxu0 %v4632
        %4939 = vmatprep.subr.bf16.mxu0 %v4637
        %4940 = vmatpush1.bf16.msra.mxu0 %v4636
        %4941 = vmatprep.subr.bf16.mxu0 %v4641
        %4942 = vmatpush1.bf16.msra.mxu0 %v4640
        %4943 = vmatprep.subr.bf16.mxu0 %v4645
        %4944 = vmatpush1.bf16.msra.mxu0 %v4644
        %4945 = vmatprep.subr.bf16.mxu0 %v4649
        %4946 = vmatpush1.bf16.msra.mxu0 %v4648
        %4947 = vmatprep.subr.bf16.mxu0 %v4653
        %4948 = vmatpush1.bf16.msra.mxu0 %v4652
        %4949 = vmatprep.subr.bf16.mxu0 %v4657
        %4950 = vmatpush1.bf16.msra.mxu0 %v4656
        %4951 = vmatprep.subr.bf16.mxu0 %v4661
        %4952 = vmatpush1.bf16.msra.mxu0 %v4660
        %4953 = vmatprep.subr.bf16.mxu0 %v4665
        %4954 = vmatpush1.bf16.msra.mxu0 %v4664
        %4955 = vmatprep.subr.bf16.mxu0 %v4669
        %4956 = vmatpush1.bf16.msra.mxu0 %v4668
        %4957 = vmatprep.subr.bf16.mxu0 %v4673
        %4958 = vmatpush1.bf16.msra.mxu0 %v4672
        %4959 = vmatprep.subr.bf16.mxu0 %v4677
        %4960 = vmatpush1.bf16.msra.mxu0 %v4676
        %4961 = vmatprep.mubr.bf16.mxu0 %v4015
        %4962 = vmatmul.mubr.bf16.gmra.mrb[0].mxu0 %v4014
        %v4963 = vpop.f32.mrb[0].mxu0
        %v4964 = vadd.f32 %v4923, %v4963
        %v4965 = vpop.f32.mrb[0].mxu0
        %v4966 = vadd.f32 %v4925, %v4965
        %v4967 = vpop.f32.mrb[0].mxu0
        %v4968 = vpop.f32.mrb[0].mxu0
        %4969 = vdwg.mxu0
        %4970 = vst [vmem:[%s676] sm:$0xff] %v4882
        %4971 = vst [vmem:[%s676 + $0x8] sm:$0xff] %v4884
        %4972 = vst [vmem:[%s676 + $0x10] sm:$0xff] %v4964
        %4973 = vst [vmem:[%s676 + $0x18] sm:$0xff] %v4966
        %s4974 = sand.u32 %s298, 1
        %s4975 = scalar_lea.sflag [#allocation4], %s4974
        %s4976 = sand.u32 %s298, 1
        %s4977 = smul.addr %s4976, 32
        %s4978 = scalar_lea.vmem [#allocation14], %s4977
        %s4979 = sand.u32 %s44, 1
        %s4980 = scalar_lea.sflag [#allocation16], %s4979
        %s4981 = sand.u32 %s324, 1
        %s4982 = smul.addr %s4981, 32
        %s4983 = scalar_lea.vmem [#allocation15], %s4982
        %s4984 = sand.u32 %s44, 1
        %s4985 = scalar_lea.sflag [#allocation16], %s4984
        %s4986 = sand.u32 %s350, 1
        %s4987 = smul.addr %s4986, 32
        %s4988 = scalar_lea.vmem [#allocation17], %s4987
        %s4989 = sand.u32 %s44, 1
        %s4990 = scalar_lea.sflag [#allocation19], %s4989
        %s4991 = sand.u32 %s376, 1
        %s4992 = smul.addr %s4991, 32
        %s4993 = scalar_lea.vmem [#allocation18], %s4992
        %s4994 = sand.u32 %s44, 1
        %s4995 = scalar_lea.sflag [#allocation19], %s4994
        %s4996 = sand.u32 %s402, 1
        %s4997 = smul.addr %s4996, 32
        %s4998 = scalar_lea.vmem [#allocation20], %s4997
        // Predicated region
        $region93: #{tpu_custom_call.1} parent=63 // pred_check
          %p4999 = pneg %p308
        $region94: #{tpu_custom_call.1} parent=63 // pred_check_branch
          %5001 = sbr.rel (%p4999) target = $region96
        $region95: #{tpu_custom_call.1} parent=63 // pred_region
          %s5003 = ssub.s32 512, 512
          %5004 = vsyncadd %s4975, %s5003
          %s5005 = smul.addr %s44, 4
          %s5006 = smul.addr %s5005, 128
          %s5007 = scalar_lea.hbm %s11, %s5006
          %s5008 = sshll.u32 %s4978, 4
          %s5009 = int_to_ptr.vmem [resolvable:$true] %s5008
          %5014 = dma.vmem_to_hbm [thread:$0]  %s5009, 512, %s5007, %s4975, 128, 128, 8
        $region96: #{tpu_custom_call.1} parent=63 // pred_fallthru
          _
        // Predicated region
        $region97: #{tpu_custom_call.1} parent=63 // pred_check
          %p5015 = pneg %p334
        $region98: #{tpu_custom_call.1} parent=63 // pred_check_branch
          %5017 = sbr.rel (%p5015) target = $region100
        $region99: #{tpu_custom_call.1} parent=63 // pred_region
          %s5019 = ssub.s32 512, 512
          %5020 = vsyncadd %s4980, %s5019
          %s5021 = smul.addr %s44, 4
          %s5022 = smul.addr %s5021, 128
          %s5023 = scalar_lea.hbm %s12, %s5022
          %s5024 = sshll.u32 %s4983, 4
          %s5025 = int_to_ptr.vmem [resolvable:$true] %s5024
          %5030 = dma.vmem_to_hbm [thread:$0]  %s5025, 512, %s5023, %s4980, 128, 128, 8
        $region100: #{tpu_custom_call.1} parent=63 // pred_fallthru
          _
        // Predicated region
        $region101: #{tpu_custom_call.1} parent=63 // pred_check
          %p5031 = pneg %p360
        $region102: #{tpu_custom_call.1} parent=63 // pred_check_branch
          %5033 = sbr.rel (%p5031) target = $region104
        $region103: #{tpu_custom_call.1} parent=63 // pred_region
          %s5035 = ssub.s32 512, 512
          %5036 = vsyncadd %s4985, %s5035
          %s5037 = smul.addr %s44, 4
          %s5038 = smul.addr %s5037, 128
          %s5039 = scalar_lea.hbm %s13, %s5038
          %s5040 = sshll.u32 %s4988, 4
          %s5041 = int_to_ptr.vmem [resolvable:$true] %s5040
          %5046 = dma.vmem_to_hbm [thread:$0]  %s5041, 512, %s5039, %s4985, 128, 128, 8
        $region104: #{tpu_custom_call.1} parent=63 // pred_fallthru
          _
        // Predicated region
        $region105: #{tpu_custom_call.1} parent=63 // pred_check
          %p5047 = pneg %p386
        $region106: #{tpu_custom_call.1} parent=63 // pred_check_branch
          %5049 = sbr.rel (%p5047) target = $region108
        $region107: #{tpu_custom_call.1} parent=63 // pred_region
          %s5051 = ssub.s32 512, 512
          %5052 = vsyncadd %s4990, %s5051
          %s5053 = smul.addr %s44, 4
          %s5054 = smul.addr %s5053, 128
          %s5055 = scalar_lea.hbm %s14, %s5054
          %s5056 = sshll.u32 %s4993, 4
          %s5057 = int_to_ptr.vmem [resolvable:$true] %s5056
          %5062 = dma.vmem_to_hbm [thread:$0]  %s5057, 512, %s5055, %s4990, 128, 128, 8
        $region108: #{tpu_custom_call.1} parent=63 // pred_fallthru
          _
        // Predicated region
        $region109: #{tpu_custom_call.1} parent=63 // pred_check
          %p5063 = pneg %p412
        $region110: #{tpu_custom_call.1} parent=63 // pred_check_branch
          %5065 = sbr.rel (%p5063) target = $region112
        $region111: #{tpu_custom_call.1} parent=63 // pred_region
          %s5067 = ssub.s32 512, 512
          %5068 = vsyncadd %s4995, %s5067
          %s5069 = smul.addr %s44, 4
          %s5070 = smul.addr %s5069, 128
          %s5071 = scalar_lea.hbm %s15, %s5070
          %s5073 = sshll.u32 %s4998, 4
          %s5074 = int_to_ptr.vmem [resolvable:$true] %s5073
          %5076 = dma.vmem_to_hbm [thread:$0]  %s5074, 512, %s5071, %s4995
        $region112: #{tpu_custom_call.1} parent=63 // pred_fallthru
          _
      $region64: #{tpu_custom_call.1} parent=5 // pred_fallthru
        _
      %p5077 = scmp.le.s32.totalorder 2, %s39
      // Predicated region
      $region113: #{tpu_custom_call.1} parent=5 // pred_check
        %p5078 = pneg %p5077
      $region114: #{tpu_custom_call.1} parent=5 // pred_check_branch
        %5080 = sbr.rel (%p5078) target = $region116
      $region115: #{tpu_custom_call.1} parent=5 // pred_region
        %s5081 = ssub.s32 %s39, 2
        // Predicated region
        $region117: #{tpu_custom_call.1} parent=115 // pred_check
          %p5082 = pneg %p314
        $region118: #{tpu_custom_call.1} parent=115 // pred_check_branch
          %5084 = sbr.rel (%p5082) target = $region120
        $region119: #{tpu_custom_call.1} parent=115 // pred_region
          %s5085 = sand.u32 %s299, 1
          %s5086 = scalar_lea.sflag [#allocation4], %s5085
          %s5087 = sand.u32 %s299, 1
          %s5088 = smul.addr %s5087, 32
          %s5089 = scalar_lea.vmem [#allocation14], %s5088
          %5090 = dma.done %s5086, 512
        $region120: #{tpu_custom_call.1} parent=115 // pred_fallthru
          _
        // Predicated region
        $region121: #{tpu_custom_call.1} parent=115 // pred_check
          %p5091 = pneg %p340
        $region122: #{tpu_custom_call.1} parent=115 // pred_check_branch
          %5093 = sbr.rel (%p5091) target = $region124
        $region123: #{tpu_custom_call.1} parent=115 // pred_region
          %s5094 = sand.u32 %s45, 1
          %s5095 = scalar_lea.sflag [#allocation16], %s5094
          %s5096 = sand.u32 %s325, 1
          %s5097 = smul.addr %s5096, 32
          %s5098 = scalar_lea.vmem [#allocation15], %s5097
          %5099 = dma.done %s5095, 512
        $region124: #{tpu_custom_call.1} parent=115 // pred_fallthru
          _
        // Predicated region
        $region125: #{tpu_custom_call.1} parent=115 // pred_check
          %p5100 = pneg %p366
        $region126: #{tpu_custom_call.1} parent=115 // pred_check_branch
          %5102 = sbr.rel (%p5100) target = $region128
        $region127: #{tpu_custom_call.1} parent=115 // pred_region
          %s5103 = sand.u32 %s45, 1
          %s5104 = scalar_lea.sflag [#allocation16], %s5103
          %s5105 = sand.u32 %s351, 1
          %s5106 = smul.addr %s5105, 32
          %s5107 = scalar_lea.vmem [#allocation17], %s5106
          %5108 = dma.done %s5104, 512
        $region128: #{tpu_custom_call.1} parent=115 // pred_fallthru
          _
        // Predicated region
        $region129: #{tpu_custom_call.1} parent=115 // pred_check
          %p5109 = pneg %p392
        $region130: #{tpu_custom_call.1} parent=115 // pred_check_branch
          %5111 = sbr.rel (%p5109) target = $region132
        $region131: #{tpu_custom_call.1} parent=115 // pred_region
          %s5112 = sand.u32 %s45, 1
          %s5113 = scalar_lea.sflag [#allocation19], %s5112
          %s5114 = sand.u32 %s377, 1
          %s5115 = smul.addr %s5114, 32
          %s5116 = scalar_lea.vmem [#allocation18], %s5115
          %5117 = dma.done %s5113, 512
        $region132: #{tpu_custom_call.1} parent=115 // pred_fallthru
          _
        // Predicated region
        $region133: #{tpu_custom_call.1} parent=115 // pred_check
          %p5118 = pneg %p418
        $region134: #{tpu_custom_call.1} parent=115 // pred_check_branch
          %5120 = sbr.rel (%p5118) target = $region136
        $region135: #{tpu_custom_call.1} parent=115 // pred_region
          %s5121 = sand.u32 %s45, 1
          %s5122 = scalar_lea.sflag [#allocation19], %s5121
          %s5123 = sand.u32 %s403, 1
          %s5124 = smul.addr %s5123, 32
          %s5125 = scalar_lea.vmem [#allocation20], %s5124
          %5126 = dma.done %s5122, 512
        $region136: #{tpu_custom_call.1} parent=115 // pred_fallthru
          _
      $region116: #{tpu_custom_call.1} parent=5 // pred_fallthru
        _
    $region6: #{tpu_custom_call.1} parent=1 // loop_footer
      %s43 = sadd.s32 1, %s39
    $region7: #{tpu_custom_call.1} parent=1 // loop_footer_branch
      %38 = sbr.rel target = $region3
    $region8: #{tpu_custom_call.1} parent=1 // loop_exit
      _
    %5127 = vsyncpa [#allocation3], 1
    %s5128 = scalar_lea.sflag [#allocation3], 1
    %5129 = vsyncpa %s5128, 1
    %5130 = vsyncpa [#allocation6], 1
    %s5131 = scalar_lea.sflag [#allocation6], 1
    %5132 = vsyncpa %s5131, 1
    %5133 = vsyncpa [#allocation9], 1
    %5134 = vsyncpa [#allocation12], 1
    %5135 = vsyncpa [#allocation4], 1
    %s5136 = scalar_lea.sflag [#allocation4], 1
    %5137 = vsyncpa %s5136, 1
    %5138 = vsyncpa [#allocation16], 1
    %s5139 = scalar_lea.sflag [#allocation16], 1
    %5140 = vsyncpa %s5139, 1
    %5141 = vsyncpa [#allocation19], 1
    %s5142 = scalar_lea.sflag [#allocation19], 1
    %5143 = vsyncpa %s5142, 1

</llo_original>
